<compile_context>
chip_gen: v7x
topology: tpu7x:2x2x1
jax: 0.10.0
libtpu: 0.0.40
codegen_flags: <defaults>
</compile_context>

<pallas_src>
import jax
import jax.numpy as jnp
from jax.experimental import pallas as pl
from jax.experimental.pallas import tpu as pltpu


def _embedding_l2_kernel(feat_ref, w1_ref, b1_ref, a1_ref,
                         w2_ref, b2_ref, a2_ref,
                         w3_ref, b3_ref, out_ref):
    # ---- Global average pool (the resnet18 `avgpool` the hook captures) ----
    # feat_ref is (TB, 512, H*W) in the backbone's native layout: spatial on
    # the lane axis, channels on sublanes.  One vectorized lane-reduce.
    emb = jnp.mean(feat_ref[...], axis=-1)                       # (TB, 512) f32

    # PReLU slopes are scalars in SMEM (nn.PReLU() default: one slope).
    a1 = a1_ref[0, 0]
    a2 = a2_ref[0, 0]

    # ---- fc head: Linear(512,256) -> PReLU -> Linear(256,256) -> PReLU -> Linear(256,30)
    h = jnp.dot(emb, w1_ref[...], preferred_element_type=jnp.float32) + b1_ref[...]
    h = jnp.maximum(h, 0.0) + a1 * jnp.minimum(h, 0.0)

    h = jnp.dot(h, w2_ref[...], preferred_element_type=jnp.float32) + b2_ref[...]
    h = jnp.maximum(h, 0.0) + a2 * jnp.minimum(h, 0.0)

    out = jnp.dot(h, w3_ref[...], preferred_element_type=jnp.float32) + b3_ref[...]

    # ---- L2 normalize along dim 1 ----
    # Columns 30..127 of w3/b3 are exactly zero, so they contribute 0 to ssq.
    ssq = jnp.sum(out * out, axis=-1, keepdims=True)
    out_ref[...] = out * jax.lax.rsqrt(ssq)


def embedding_net_l2_forward(feat_nchw, w1, b1, a1, w2, b2, a2, w3p, b3p,
                             *, block_b=128, n_out=30):
    """avgpool -> fc -> L2-normalize as one batch-tiled fused Pallas kernel."""
    B, C, H, W = feat_nchw.shape
    HW = H * W
    assert C == w1.shape[0], "feature channels must match fc input (512)"

    # Contiguous view of the backbone output — NO transpose / HBM round-trip.
    feat = feat_nchw.reshape(B, C, HW)

    TB = min(block_b, B)
    Bp = ((B + TB - 1) // TB) * TB
    if Bp != B:
        # Zero-pad the batch to a whole number of tiles; padded rows are
        # computed (harmlessly) and sliced away below.
        feat = jnp.pad(feat, ((0, Bp - B), (0, 0), (0, 0)))

    n_pad = w3p.shape[1]                      # lane-dense output width (128)
    smem = pltpu.MemorySpace.SMEM

    out = pl.pallas_call(
        _embedding_l2_kernel,
        out_shape=jax.ShapeDtypeStruct((Bp, n_pad), jnp.float32),
        grid_spec=pltpu.PrefetchScalarGridSpec(
            num_scalar_prefetch=0,
            grid=(Bp // TB,),
            in_specs=[
                # Feature map: batch-tiled, double-buffered by the pipeline.
                pl.BlockSpec((TB, C, HW), lambda i: (i, 0, 0)),
                # Weights / biases: constant index_map -> VMEM-resident.
                pl.BlockSpec(w1.shape, lambda i: (0, 0)),
                pl.BlockSpec(b1.shape, lambda i: (0, 0)),
                pl.BlockSpec((1, 1), lambda i: (0, 0), memory_space=smem),
                pl.BlockSpec(w2.shape, lambda i: (0, 0)),
                pl.BlockSpec(b2.shape, lambda i: (0, 0)),
                pl.BlockSpec((1, 1), lambda i: (0, 0), memory_space=smem),
                pl.BlockSpec(w3p.shape, lambda i: (0, 0)),
                pl.BlockSpec(b3p.shape, lambda i: (0, 0)),
            ],
            out_specs=pl.BlockSpec((TB, n_pad), lambda i: (i, 0)),
        ),
        compiler_params=pltpu.CompilerParams(
            dimension_semantics=("parallel",)),   # shard batch tiles across TCs (v7x)
    )(feat, w1, b1, a1, w2, b2, a2, w3p, b3p)

    return out[:B, :n_out]


_fwd_jit = jax.jit(embedding_net_l2_forward, static_argnames=("block_b", "n_out"))


class EmbeddingNetL2:
    """JAX/Pallas analogue of the PyTorch EmbeddingNetL2 head.

    Consumes the ResNet18 backbone's final (B, 512, H, W) conv feature map
    (what the avgpool forward hook sees) and produces the L2-normalized
    (B, 30) embedding.
    """

    def __init__(self, key, block_b=128):
        k1, kb1, k2, kb2, k3, kb3 = jax.random.split(key, 6)

        def linear(kw, kb, fan_in, fan_out):
            bound = 1.0 / (fan_in ** 0.5)
            w = jax.random.uniform(kw, (fan_in, fan_out), jnp.float32, -bound, bound)
            b = jax.random.uniform(kb, (1, fan_out), jnp.float32, -bound, bound)
            return w, b

        self.w1, self.b1 = linear(k1, kb1, 512, 256)
        self.w2, self.b2 = linear(k2, kb2, 256, 256)
        self.w3, self.b3 = linear(k3, kb3, 256, 30)

        # Lane-pad the final layer to 128 output columns with EXACT zeros so
        # the final matmul / store are lane-dense and the L2 norm is unchanged.
        self.n_out = 30
        pad = 128 - self.n_out
        self.w3p = jnp.pad(self.w3, ((0, 0), (0, pad)))
        self.b3p = jnp.pad(self.b3, ((0, 0), (0, pad)))

        # nn.PReLU() default: a single learnable slope, initialized to 0.25.
        self.a1 = jnp.full((1, 1), 0.25, jnp.float32)
        self.a2 = jnp.full((1, 1), 0.25, jnp.float32)

        self.block_b = block_b

    def __call__(self, feat_nchw):
        return _fwd_jit(feat_nchw, self.w1, self.b1, self.a1,
                        self.w2, self.b2, self.a2, self.w3p, self.b3p,
                        block_b=self.block_b, n_out=self.n_out)

    def get_embedding(self, feat_nchw):
        return self(feat_nchw)


def _reference(feat_nchw, w1, b1, a1, w2, b2, a2, w3, b3):
    """Pure-JAX reference of the same head, for correctness checking."""
    B, C, H, W = feat_nchw.shape
    emb = jnp.mean(feat_nchw.reshape(B, C, H * W), axis=-1)

    def prelu(x, a):
        return jnp.maximum(x, 0.0) + a * jnp.minimum(x, 0.0)

    h = prelu(emb @ w1 + b1, a1)
    h = prelu(h @ w2 + b2, a2)
    out = h @ w3 + b3
    return out / jnp.sqrt(jnp.sum(out * out, axis=1, keepdims=True))


if __name__ == "__main__":
    key = jax.random.PRNGKey(0)
    k_feat, k_params = jax.random.split(key)

    # Final ResNet18 conv feature map: batch=16, channels=512, spatial 7x7.
    B, C, H, W = 16, 512, 7, 7
    feat = jax.random.normal(k_feat, (B, C, H, W), dtype=jnp.float32)

    # block_b=8 so the demo exercises a multi-step batch grid (grid=(2,)).
    net = EmbeddingNetL2(k_params, block_b=8)
    out = jax.block_until_ready(net(feat))

    assert out.shape == (B, 30) and out.dtype == jnp.float32

    # Every row must be unit-norm (the module's L2 normalization).
    norms = jnp.sqrt(jnp.sum(out * out, axis=1))
    assert bool(jnp.allclose(norms, 1.0, atol=1e-4)), "rows must be L2-normalized"

    # Match the pure-JAX reference. Tolerance is loose because the MXU f32
    # matmul path uses reduced-precision multiplies by default.
    ref = _reference(feat, net.w1, net.b1, net.a1, net.w2, net.b2, net.a2,
                     net.w3, net.b3)
    assert bool(jnp.allclose(out, ref, atol=2e-2, rtol=2e-2)), "mismatch vs reference"

    print("KERNEL_OK")
</pallas_src>

<mosaic_0001>
module attributes {stable_mosaic.version = 11 : i64} {
  func.func @_embedding_l2_kernel(%arg0: i32, %arg1: memref<8x512x49xf32, #tpu.memory_space<vmem>>, %arg2: memref<512x256xf32, #tpu.memory_space<vmem>>, %arg3: memref<1x256xf32, #tpu.memory_space<vmem>>, %arg4: memref<1x1xf32, #tpu.memory_space<smem>>, %arg5: memref<256x256xf32, #tpu.memory_space<vmem>>, %arg6: memref<1x256xf32, #tpu.memory_space<vmem>>, %arg7: memref<1x1xf32, #tpu.memory_space<smem>>, %arg8: memref<256x128xf32, #tpu.memory_space<vmem>>, %arg9: memref<1x128xf32, #tpu.memory_space<vmem>>, %arg10: memref<8x128xf32, #tpu.memory_space<vmem>>) attributes {dimension_semantics = [#tpu.dimension_semantics<parallel>], iteration_bounds = array<i64: 2>, scalar_prefetch = 0 : i64, scratch_operands = 0 : i64, tpu.core_type = #tpu.core_type<tc>, window_params = [{transform_indices = @transform_0, window_bounds = array<i64: 8, 512, 49>}, {pipeline_mode = #tpu.pipeline_mode<synchronous>, transform_indices = @transform_1, window_bounds = array<i64: 512, 256>}, {pipeline_mode = #tpu.pipeline_mode<synchronous>, transform_indices = @transform_2, window_bounds = array<i64: 1, 256>}, {transform_indices = @transform_3, window_bounds = array<i64: 1, 1>}, {pipeline_mode = #tpu.pipeline_mode<synchronous>, transform_indices = @transform_4, window_bounds = array<i64: 256, 256>}, {pipeline_mode = #tpu.pipeline_mode<synchronous>, transform_indices = @transform_5, window_bounds = array<i64: 1, 256>}, {transform_indices = @transform_6, window_bounds = array<i64: 1, 1>}, {pipeline_mode = #tpu.pipeline_mode<synchronous>, transform_indices = @transform_7, window_bounds = array<i64: 256, 128>}, {pipeline_mode = #tpu.pipeline_mode<synchronous>, transform_indices = @transform_8, window_bounds = array<i64: 1, 128>}, {transform_indices = @transform_9, window_bounds = array<i64: 8, 128>}]} {
    %c0 = arith.constant 0 : index
    %c0_0 = arith.constant 0 : index
    %c0_1 = arith.constant 0 : index
    %0 = vector.load %arg1[%c0, %c0_0, %c0_1] : memref<8x512x49xf32, #tpu.memory_space<vmem>>, vector<8x512x49xf32>
    %cst = arith.constant dense<0.000000e+00> : vector<8x512xf32>
    %1 = vector.multi_reduction <add>, %0, %cst [2] : vector<8x512x49xf32> to vector<8x512xf32>
    %cst_2 = arith.constant 4.900000e+01 : f32
    %2 = vector.broadcast %cst_2 : f32 to vector<8x512xf32>
    %3 = arith.divf %1, %2 : vector<8x512xf32>
    %c0_3 = arith.constant 0 : index
    %c0_4 = arith.constant 0 : index
    %4 = memref.load %arg4[%c0_3, %c0_4] : memref<1x1xf32, #tpu.memory_space<smem>>
    %c0_5 = arith.constant 0 : index
    %c0_6 = arith.constant 0 : index
    %5 = memref.load %arg7[%c0_5, %c0_6] : memref<1x1xf32, #tpu.memory_space<smem>>
    %c0_7 = arith.constant 0 : index
    %c0_8 = arith.constant 0 : index
    %6 = vector.load %arg2[%c0_7, %c0_8] : memref<512x256xf32, #tpu.memory_space<vmem>>, vector<512x256xf32>
    %cst_9 = arith.constant dense<0.000000e+00> : vector<8x256xf32>
    %7 = tpu.matmul %3, %6, %cst_9 {dimension_numbers = #tpu.dot_dimension_numbers<[1], [0], [0], [1], [0, 0, 1, 1], [], []>} : vector<8x512xf32>, vector<512x256xf32>, vector<8x256xf32> -> vector<8x256xf32>
    %c0_10 = arith.constant 0 : index
    %c0_11 = arith.constant 0 : index
    %8 = vector.load %arg3[%c0_10, %c0_11] : memref<1x256xf32, #tpu.memory_space<vmem>>, vector<1x256xf32>
    %9 = vector.broadcast %8 : vector<1x256xf32> to vector<8x256xf32>
    %10 = arith.addf %7, %9 : vector<8x256xf32>
    %cst_12 = arith.constant 0.000000e+00 : f32
    %11 = vector.broadcast %cst_12 : f32 to vector<8x256xf32>
    %12 = arith.maximumf %10, %11 : vector<8x256xf32>
    %cst_13 = arith.constant 0.000000e+00 : f32
    %13 = vector.broadcast %cst_13 : f32 to vector<8x256xf32>
    %14 = arith.minimumf %10, %13 : vector<8x256xf32>
    %15 = vector.broadcast %4 : f32 to vector<8x256xf32>
    %16 = arith.mulf %15, %14 : vector<8x256xf32>
    %17 = arith.addf %12, %16 : vector<8x256xf32>
    %c0_14 = arith.constant 0 : index
    %c0_15 = arith.constant 0 : index
    %18 = vector.load %arg5[%c0_14, %c0_15] : memref<256x256xf32, #tpu.memory_space<vmem>>, vector<256x256xf32>
    %cst_16 = arith.constant dense<0.000000e+00> : vector<8x256xf32>
    %19 = tpu.matmul %17, %18, %cst_16 {dimension_numbers = #tpu.dot_dimension_numbers<[1], [0], [0], [1], [0, 0, 1, 1], [], []>} : vector<8x256xf32>, vector<256x256xf32>, vector<8x256xf32> -> vector<8x256xf32>
    %c0_17 = arith.constant 0 : index
    %c0_18 = arith.constant 0 : index
    %20 = vector.load %arg6[%c0_17, %c0_18] : memref<1x256xf32, #tpu.memory_space<vmem>>, vector<1x256xf32>
    %21 = vector.broadcast %20 : vector<1x256xf32> to vector<8x256xf32>
    %22 = arith.addf %19, %21 : vector<8x256xf32>
    %cst_19 = arith.constant 0.000000e+00 : f32
    %23 = vector.broadcast %cst_19 : f32 to vector<8x256xf32>
    %24 = arith.maximumf %22, %23 : vector<8x256xf32>
    %cst_20 = arith.constant 0.000000e+00 : f32
    %25 = vector.broadcast %cst_20 : f32 to vector<8x256xf32>
    %26 = arith.minimumf %22, %25 : vector<8x256xf32>
    %27 = vector.broadcast %5 : f32 to vector<8x256xf32>
    %28 = arith.mulf %27, %26 : vector<8x256xf32>
    %29 = arith.addf %24, %28 : vector<8x256xf32>
    %c0_21 = arith.constant 0 : index
    %c0_22 = arith.constant 0 : index
    %30 = vector.load %arg8[%c0_21, %c0_22] : memref<256x128xf32, #tpu.memory_space<vmem>>, vector<256x128xf32>
    %cst_23 = arith.constant dense<0.000000e+00> : vector<8x128xf32>
    %31 = tpu.matmul %29, %30, %cst_23 {dimension_numbers = #tpu.dot_dimension_numbers<[1], [0], [0], [1], [0, 0, 1, 1], [], []>} : vector<8x256xf32>, vector<256x128xf32>, vector<8x128xf32> -> vector<8x128xf32>
    %c0_24 = arith.constant 0 : index
    %c0_25 = arith.constant 0 : index
    %32 = vector.load %arg9[%c0_24, %c0_25] : memref<1x128xf32, #tpu.memory_space<vmem>>, vector<1x128xf32>
    %33 = vector.broadcast %32 : vector<1x128xf32> to vector<8x128xf32>
    %34 = arith.addf %31, %33 : vector<8x128xf32>
    %35 = arith.mulf %34, %34 : vector<8x128xf32>
    %cst_26 = arith.constant dense<0.000000e+00> : vector<8xf32>
    %36 = vector.multi_reduction <add>, %35, %cst_26 [1] : vector<8x128xf32> to vector<8xf32>
    %37 = vector.shape_cast %36 : vector<8xf32> to vector<8x1xf32>
    %38 = math.rsqrt %37 : vector<8x1xf32>
    %39 = vector.broadcast %38 : vector<8x1xf32> to vector<8x128xf32>
    %40 = arith.mulf %34, %39 : vector<8x128xf32>
    %c0_27 = arith.constant 0 : index
    %c0_28 = arith.constant 0 : index
    %41 = vector.load %arg10[%c0_27, %c0_28] : memref<8x128xf32, #tpu.memory_space<vmem>>, vector<8x128xf32>
    tpu.vector_store %arg10[%c0_27, %c0_28], %40 {strides = array<i32>} : memref<8x128xf32, #tpu.memory_space<vmem>>, vector<8x128xf32>,
    return
  }
  func.func @transform_0(%arg0: i32) -> (i32, i32, i32) {
    %c0_i32 = arith.constant 0 : i32
    %c0_i32_0 = arith.constant 0 : i32
    %c0_i32_1 = arith.constant 0 : i32
    return %arg0, %c0_i32, %c0_i32_0 : i32, i32, i32
  }
  func.func @transform_1(%arg0: i32) -> (i32, i32) {
    %c0_i32 = arith.constant 0 : i32
    %c0_i32_0 = arith.constant 0 : i32
    %c0_i32_1 = arith.constant 0 : i32
    return %c0_i32, %c0_i32_0 : i32, i32
  }
  func.func @transform_2(%arg0: i32) -> (i32, i32) {
    %c0_i32 = arith.constant 0 : i32
    %c0_i32_0 = arith.constant 0 : i32
    %c0_i32_1 = arith.constant 0 : i32
    return %c0_i32, %c0_i32_0 : i32, i32
  }
  func.func @transform_3(%arg0: i32) -> (i32, i32) {
    %c0_i32 = arith.constant 0 : i32
    %c0_i32_0 = arith.constant 0 : i32
    %c0_i32_1 = arith.constant 0 : i32
    return %c0_i32, %c0_i32_0 : i32, i32
  }
  func.func @transform_4(%arg0: i32) -> (i32, i32) {
    %c0_i32 = arith.constant 0 : i32
    %c0_i32_0 = arith.constant 0 : i32
    %c0_i32_1 = arith.constant 0 : i32
    return %c0_i32, %c0_i32_0 : i32, i32
  }
  func.func @transform_5(%arg0: i32) -> (i32, i32) {
    %c0_i32 = arith.constant 0 : i32
    %c0_i32_0 = arith.constant 0 : i32
    %c0_i32_1 = arith.constant 0 : i32
    return %c0_i32, %c0_i32_0 : i32, i32
  }
  func.func @transform_6(%arg0: i32) -> (i32, i32) {
    %c0_i32 = arith.constant 0 : i32
    %c0_i32_0 = arith.constant 0 : i32
    %c0_i32_1 = arith.constant 0 : i32
    return %c0_i32, %c0_i32_0 : i32, i32
  }
  func.func @transform_7(%arg0: i32) -> (i32, i32) {
    %c0_i32 = arith.constant 0 : i32
    %c0_i32_0 = arith.constant 0 : i32
    %c0_i32_1 = arith.constant 0 : i32
    return %c0_i32, %c0_i32_0 : i32, i32
  }
  func.func @transform_8(%arg0: i32) -> (i32, i32) {
    %c0_i32 = arith.constant 0 : i32
    %c0_i32_0 = arith.constant 0 : i32
    %c0_i32_1 = arith.constant 0 : i32
    return %c0_i32, %c0_i32_0 : i32, i32
  }
  func.func @transform_9(%arg0: i32) -> (i32, i32) {
    %c0_i32 = arith.constant 0 : i32
    %c0_i32_0 = arith.constant 0 : i32
    return %arg0, %c0_i32 : i32, i32
  }
}

</mosaic_0001>

<llo_original>
// kernel: embedding_net_l2_forward.1
$region0: #{embedding_net_l2_forward.1}
  #allocation0 [shape = 'u32[]', space=smem, size = 0x4, offset = 0x4, fixed_abs, tag = 'smem constant byte address 0x4 - core index']
  #allocation1 [shape = 'u32[144,128]{1,0:T(1,128)}', space=vmem, size = 0x12000, scoped, tag = 'internal scratch']
  #allocation2 [shape = 'f32[1,1]{1,0:T(1,128)S(6)}', space=smem, size = 0x200, scoped, tag = 'scoped memory for embedding_net_l2_forward.1']
  #allocation3 [shape = 'f32[1,1]{1,0:T(1,128)S(6)}', space=smem, size = 0x200, scoped, tag = 'scoped memory for embedding_net_l2_forward.1']
  %s0 = inlined_call_operand.vmem [shape: f32[16,512,49], index: 0, kind: input, shape index: {}]
  %s1 = inlined_call_operand.vmem [shape: f32[512,256], index: 1, kind: input, shape index: {}]
  %s2 = inlined_call_operand.vmem [shape: f32[1,256], index: 2, kind: input, shape index: {}]
  %s3 = inlined_call_operand.<no memory space> [shape: f32[1,1], index: 3, kind: input, shape index: {}]
  %s4 = inlined_call_operand.vmem [shape: f32[256,256], index: 4, kind: input, shape index: {}]
  %s5 = inlined_call_operand.vmem [shape: f32[1,256], index: 5, kind: input, shape index: {}]
  %s6 = inlined_call_operand.<no memory space> [shape: f32[1,1], index: 6, kind: input, shape index: {}]
  %s7 = inlined_call_operand.vmem [shape: f32[256,128], index: 7, kind: input, shape index: {}]
  %s8 = inlined_call_operand.vmem [shape: f32[1,128], index: 8, kind: input, shape index: {}]
  %s9 = inlined_call_operand.hbm [shape: f32[16,128], index: 9, kind: output, shape index: {}]
  %s10 = sld [smem:[#allocation0]]
  $region69: #{embedding_net_l2_forward.1} parent=0
    _
  %s12 = ssub.s32 1, %s10
  %s13 = scalar_select 0, %s12, %s10
  %14 = sst [smem:[#allocation2]] %s3
  %15 = sst [smem:[#allocation3]] %s6
  $region1: #{embedding_net_l2_forward.1} parent=0
    #allocation4 [shape = 'u8[8192]{0}', space=vmem, size = 0x2000, scoped, tag = 'output window, operand 0']
    #allocation5 [shape = 's32[2]{0}', space=sflag, size = 0x8, scoped, tag = 'scoped memory for embedding_net_l2_forward.1']
    %16 = vsyncpa [#allocation5], 0
    %s17 = scalar_lea.sflag [#allocation5], 1
    %18 = vsyncpa %s17, 0
    loop: start=0, step=1, limit=4
    $region2: #{embedding_net_l2_forward.1} parent=1 // loop_pre_header
      _
    $region3: #{embedding_net_l2_forward.1} parent=1 // loop_header
      %s20 = sphi 0, %s24
      %p21 = scmp.ge.s32.totalorder %s20, 4
      %s30 = sphi 0, %s32
      %s33 = sphi 0, %s30
      %s34 = sphi 0, %s33
      %s50 = sphi 0, %s34
      %s54 = sphi 0, %s54
      %s56 = sphi 0, %s54
      %s57 = sphi 0, %s56
      %s71 = sphi 0, %s57
      %s75 = sphi 0, %s75
      %s77 = sphi 0, %s75
      %s78 = sphi 0, %s77
      %s92 = sphi 0, %s78
      %s96 = sphi 0, %s96
      %s98 = sphi 0, %s96
      %s99 = sphi 0, %s98
      %s113 = sphi 0, %s99
      %s117 = sphi 0, %s117
      %s119 = sphi 0, %s117
      %s120 = sphi 0, %s119
      %s134 = sphi 0, %s120
      %s138 = sphi 0, %s138
      %s140 = sphi 0, %s138
      %s141 = sphi 0, %s140
      %s155 = sphi 0, %s141
      %s159 = sphi 0, %s159
      %s161 = sphi 0, %s159
      %s162 = sphi 0, %s161
      %s176 = sphi 0, %s162
      %s180 = sphi 0, %s180
      %s182 = sphi 0, %s180
      %s183 = sphi 0, %s182
      %s197 = sphi 0, %s183
      %s201 = sphi 0, %s201
      %s203 = sphi 0, %s201
      %s204 = sphi 0, %s203
      %s218 = sphi 0, %s204
      %s224 = sphi 0, %s226
      %s227 = sphi 0, %s224
      %s228 = sphi 0, %s227
      %s244 = sphi 0, %s228
    $region4: #{embedding_net_l2_forward.1} parent=1 // loop_header_branch
      %23 = sbr.rel (%p21) target = $region8
    $region5: #{embedding_net_l2_forward.1} parent=1 // loop_body
      %s25 = ssub.s32 %s20, 1
      %s26 = ssub.s32 %s20, 2
      %s27 = sadd.s32 %s20, 1
      %s28 = ssub.s32 %s20, %s27
      %p29 = scmp.eq.s32.totalorder %s28, 0
      %s31 = sadd.s32 %s30, 1
      %s32 = scalar_select %p29, %s30, %s31
      %p35 = pneg %p29
      %p36 = scmp.eq.s32.totalorder %s20, 1
      %p37 = por %p35, %p36
      %p38 = scmp.ne.s32.totalorder %s30, %s33
      %p39 = scmp.eq.s32.totalorder %s20, 0
      %p40 = por %p38, %p39
      %p41 = scmp.ne.s32.totalorder %s30, %s33
      %p42 = scmp.eq.s32.totalorder %s25, 1
      %p43 = por %p41, %p42
      %p44 = scmp.ne.s32.totalorder %s33, %s34
      %p45 = scmp.eq.s32.totalorder %s25, 0
      %p46 = por %p44, %p45
      %p47 = scmp.ne.s32.totalorder %s33, %s34
      %p48 = scmp.eq.s32.totalorder %s26, 1
      %p49 = por %p47, %p48
      %p51 = scmp.ne.s32.totalorder %s34, %s50
      %p52 = scmp.eq.s32.totalorder %s26, 0
      %p53 = por %p51, %p52
      %s55 = sadd.s32 %s54, 1
      %p58 = scmp.eq.s32.totalorder %s20, 1
      %p59 = scmp.ne.s32.totalorder %s54, %s56
      %p60 = scmp.eq.s32.totalorder %s20, 0
      %p61 = por %p59, %p60
      %p62 = scmp.ne.s32.totalorder %s54, %s56
      %p63 = scmp.eq.s32.totalorder %s25, 1
      %p64 = por %p62, %p63
      %p65 = scmp.ne.s32.totalorder %s56, %s57
      %p66 = scmp.eq.s32.totalorder %s25, 0
      %p67 = por %p65, %p66
      %p68 = scmp.ne.s32.totalorder %s56, %s57
      %p69 = scmp.eq.s32.totalorder %s26, 1
      %p70 = por %p68, %p69
      %p72 = scmp.ne.s32.totalorder %s57, %s71
      %p73 = scmp.eq.s32.totalorder %s26, 0
      %p74 = por %p72, %p73
      %s76 = sadd.s32 %s75, 1
      %p79 = scmp.eq.s32.totalorder %s20, 1
      %p80 = scmp.ne.s32.totalorder %s75, %s77
      %p81 = scmp.eq.s32.totalorder %s20, 0
      %p82 = por %p80, %p81
      %p83 = scmp.ne.s32.totalorder %s75, %s77
      %p84 = scmp.eq.s32.totalorder %s25, 1
      %p85 = por %p83, %p84
      %p86 = scmp.ne.s32.totalorder %s77, %s78
      %p87 = scmp.eq.s32.totalorder %s25, 0
      %p88 = por %p86, %p87
      %p89 = scmp.ne.s32.totalorder %s77, %s78
      %p90 = scmp.eq.s32.totalorder %s26, 1
      %p91 = por %p89, %p90
      %p93 = scmp.ne.s32.totalorder %s78, %s92
      %p94 = scmp.eq.s32.totalorder %s26, 0
      %p95 = por %p93, %p94
      %s97 = sadd.s32 %s96, 1
      %p100 = scmp.eq.s32.totalorder %s20, 1
      %p101 = scmp.ne.s32.totalorder %s96, %s98
      %p102 = scmp.eq.s32.totalorder %s20, 0
      %p103 = por %p101, %p102
      %p104 = scmp.ne.s32.totalorder %s96, %s98
      %p105 = scmp.eq.s32.totalorder %s25, 1
      %p106 = por %p104, %p105
      %p107 = scmp.ne.s32.totalorder %s98, %s99
      %p108 = scmp.eq.s32.totalorder %s25, 0
      %p109 = por %p107, %p108
      %p110 = scmp.ne.s32.totalorder %s98, %s99
      %p111 = scmp.eq.s32.totalorder %s26, 1
      %p112 = por %p110, %p111
      %p114 = scmp.ne.s32.totalorder %s99, %s113
      %p115 = scmp.eq.s32.totalorder %s26, 0
      %p116 = por %p114, %p115
      %s118 = sadd.s32 %s117, 1
      %p121 = scmp.eq.s32.totalorder %s20, 1
      %p122 = scmp.ne.s32.totalorder %s117, %s119
      %p123 = scmp.eq.s32.totalorder %s20, 0
      %p124 = por %p122, %p123
      %p125 = scmp.ne.s32.totalorder %s117, %s119
      %p126 = scmp.eq.s32.totalorder %s25, 1
      %p127 = por %p125, %p126
      %p128 = scmp.ne.s32.totalorder %s119, %s120
      %p129 = scmp.eq.s32.totalorder %s25, 0
      %p130 = por %p128, %p129
      %p131 = scmp.ne.s32.totalorder %s119, %s120
      %p132 = scmp.eq.s32.totalorder %s26, 1
      %p133 = por %p131, %p132
      %p135 = scmp.ne.s32.totalorder %s120, %s134
      %p136 = scmp.eq.s32.totalorder %s26, 0
      %p137 = por %p135, %p136
      %s139 = sadd.s32 %s138, 1
      %p142 = scmp.eq.s32.totalorder %s20, 1
      %p143 = scmp.ne.s32.totalorder %s138, %s140
      %p144 = scmp.eq.s32.totalorder %s20, 0
      %p145 = por %p143, %p144
      %p146 = scmp.ne.s32.totalorder %s138, %s140
      %p147 = scmp.eq.s32.totalorder %s25, 1
      %p148 = por %p146, %p147
      %p149 = scmp.ne.s32.totalorder %s140, %s141
      %p150 = scmp.eq.s32.totalorder %s25, 0
      %p151 = por %p149, %p150
      %p152 = scmp.ne.s32.totalorder %s140, %s141
      %p153 = scmp.eq.s32.totalorder %s26, 1
      %p154 = por %p152, %p153
      %p156 = scmp.ne.s32.totalorder %s141, %s155
      %p157 = scmp.eq.s32.totalorder %s26, 0
      %p158 = por %p156, %p157
      %s160 = sadd.s32 %s159, 1
      %p163 = scmp.eq.s32.totalorder %s20, 1
      %p164 = scmp.ne.s32.totalorder %s159, %s161
      %p165 = scmp.eq.s32.totalorder %s20, 0
      %p166 = por %p164, %p165
      %p167 = scmp.ne.s32.totalorder %s159, %s161
      %p168 = scmp.eq.s32.totalorder %s25, 1
      %p169 = por %p167, %p168
      %p170 = scmp.ne.s32.totalorder %s161, %s162
      %p171 = scmp.eq.s32.totalorder %s25, 0
      %p172 = por %p170, %p171
      %p173 = scmp.ne.s32.totalorder %s161, %s162
      %p174 = scmp.eq.s32.totalorder %s26, 1
      %p175 = por %p173, %p174
      %p177 = scmp.ne.s32.totalorder %s162, %s176
      %p178 = scmp.eq.s32.totalorder %s26, 0
      %p179 = por %p177, %p178
      %s181 = sadd.s32 %s180, 1
      %p184 = scmp.eq.s32.totalorder %s20, 1
      %p185 = scmp.ne.s32.totalorder %s180, %s182
      %p186 = scmp.eq.s32.totalorder %s20, 0
      %p187 = por %p185, %p186
      %p188 = scmp.ne.s32.totalorder %s180, %s182
      %p189 = scmp.eq.s32.totalorder %s25, 1
      %p190 = por %p188, %p189
      %p191 = scmp.ne.s32.totalorder %s182, %s183
      %p192 = scmp.eq.s32.totalorder %s25, 0
      %p193 = por %p191, %p192
      %p194 = scmp.ne.s32.totalorder %s182, %s183
      %p195 = scmp.eq.s32.totalorder %s26, 1
      %p196 = por %p194, %p195
      %p198 = scmp.ne.s32.totalorder %s183, %s197
      %p199 = scmp.eq.s32.totalorder %s26, 0
      %p200 = por %p198, %p199
      %s202 = sadd.s32 %s201, 1
      %p205 = scmp.eq.s32.totalorder %s20, 1
      %p206 = scmp.ne.s32.totalorder %s201, %s203
      %p207 = scmp.eq.s32.totalorder %s20, 0
      %p208 = por %p206, %p207
      %p209 = scmp.ne.s32.totalorder %s201, %s203
      %p210 = scmp.eq.s32.totalorder %s25, 1
      %p211 = por %p209, %p210
      %p212 = scmp.ne.s32.totalorder %s203, %s204
      %p213 = scmp.eq.s32.totalorder %s25, 0
      %p214 = por %p212, %p213
      %p215 = scmp.ne.s32.totalorder %s203, %s204
      %p216 = scmp.eq.s32.totalorder %s26, 1
      %p217 = por %p215, %p216
      %p219 = scmp.ne.s32.totalorder %s204, %s218
      %p220 = scmp.eq.s32.totalorder %s26, 0
      %p221 = por %p219, %p220
      %s222 = ssub.s32 %s20, %s27
      %p223 = scmp.eq.s32.totalorder %s222, 0
      %s225 = sadd.s32 %s224, 1
      %s226 = scalar_select %p223, %s224, %s225
      %p229 = pneg %p223
      %p230 = scmp.eq.s32.totalorder %s20, 1
      %p231 = por %p229, %p230
      %p232 = scmp.ne.s32.totalorder %s224, %s227
      %p233 = scmp.eq.s32.totalorder %s20, 0
      %p234 = por %p232, %p233
      %p235 = scmp.ne.s32.totalorder %s224, %s227
      %p236 = scmp.eq.s32.totalorder %s25, 1
      %p237 = por %p235, %p236
      %p238 = scmp.ne.s32.totalorder %s227, %s228
      %p239 = scmp.eq.s32.totalorder %s25, 0
      %p240 = por %p238, %p239
      %p241 = scmp.ne.s32.totalorder %s227, %s228
      %p242 = scmp.eq.s32.totalorder %s26, 1
      %p243 = por %p241, %p242
      %p245 = scmp.ne.s32.totalorder %s228, %s244
      %p246 = scmp.eq.s32.totalorder %s26, 0
      %p247 = por %p245, %p246
      %p248 = scmp.le.s32.totalorder 1, %s20
      %p249 = scmp.lt.s32.totalorder %s20, 3
      %p250 = pnand %p248, %p249
      %p251 = pneg %p250
      // Predicated region
      $region9: #{embedding_net_l2_forward.1} parent=5 // pred_check
        _
      $region10: #{embedding_net_l2_forward.1} parent=5 // pred_check_branch
        %253 = sbr.rel (%p250) target = $region12
      $region11: #{embedding_net_l2_forward.1} parent=5 // pred_region
        %s254 = ssub.s32 %s20, 1
        // Predicated region
        $region13: #{embedding_net_l2_forward.1} parent=11 // pred_check
          %p255 = pneg %p67
        $region14: #{embedding_net_l2_forward.1} parent=11 // pred_check_branch
          %257 = sbr.rel (%p255) target = $region16
        $region15: #{embedding_net_l2_forward.1} parent=11 // pred_region
          _
        $region16: #{embedding_net_l2_forward.1} parent=11 // pred_fallthru
          _
        // Predicated region
        $region17: #{embedding_net_l2_forward.1} parent=11 // pred_check
          %p258 = pneg %p88
        $region18: #{embedding_net_l2_forward.1} parent=11 // pred_check_branch
          %260 = sbr.rel (%p258) target = $region20
        $region19: #{embedding_net_l2_forward.1} parent=11 // pred_region
          _
        $region20: #{embedding_net_l2_forward.1} parent=11 // pred_fallthru
          _
        // Predicated region
        $region21: #{embedding_net_l2_forward.1} parent=11 // pred_check
          %p261 = pneg %p109
        $region22: #{embedding_net_l2_forward.1} parent=11 // pred_check_branch
          %263 = sbr.rel (%p261) target = $region24
        $region23: #{embedding_net_l2_forward.1} parent=11 // pred_region
          _
        $region24: #{embedding_net_l2_forward.1} parent=11 // pred_fallthru
          _
        // Predicated region
        $region25: #{embedding_net_l2_forward.1} parent=11 // pred_check
          %p264 = pneg %p130
        $region26: #{embedding_net_l2_forward.1} parent=11 // pred_check_branch
          %266 = sbr.rel (%p264) target = $region28
        $region27: #{embedding_net_l2_forward.1} parent=11 // pred_region
          _
        $region28: #{embedding_net_l2_forward.1} parent=11 // pred_fallthru
          _
        // Predicated region
        $region29: #{embedding_net_l2_forward.1} parent=11 // pred_check
          %p267 = pneg %p151
        $region30: #{embedding_net_l2_forward.1} parent=11 // pred_check_branch
          %269 = sbr.rel (%p267) target = $region32
        $region31: #{embedding_net_l2_forward.1} parent=11 // pred_region
          _
        $region32: #{embedding_net_l2_forward.1} parent=11 // pred_fallthru
          _
        // Predicated region
        $region33: #{embedding_net_l2_forward.1} parent=11 // pred_check
          %p270 = pneg %p172
        $region34: #{embedding_net_l2_forward.1} parent=11 // pred_check_branch
          %272 = sbr.rel (%p270) target = $region36
        $region35: #{embedding_net_l2_forward.1} parent=11 // pred_region
          _
        $region36: #{embedding_net_l2_forward.1} parent=11 // pred_fallthru
          _
        // Predicated region
        $region37: #{embedding_net_l2_forward.1} parent=11 // pred_check
          %p273 = pneg %p193
        $region38: #{embedding_net_l2_forward.1} parent=11 // pred_check_branch
          %275 = sbr.rel (%p273) target = $region40
        $region39: #{embedding_net_l2_forward.1} parent=11 // pred_region
          _
        $region40: #{embedding_net_l2_forward.1} parent=11 // pred_fallthru
          _
        // Predicated region
        $region41: #{embedding_net_l2_forward.1} parent=11 // pred_check
          %p276 = pneg %p214
        $region42: #{embedding_net_l2_forward.1} parent=11 // pred_check_branch
          %278 = sbr.rel (%p276) target = $region44
        $region43: #{embedding_net_l2_forward.1} parent=11 // pred_region
          _
        $region44: #{embedding_net_l2_forward.1} parent=11 // pred_fallthru
          _
      $region12: #{embedding_net_l2_forward.1} parent=5 // pred_fallthru
        _
      %p279 = scmp.lt.s32.totalorder %s20, 2
      // Predicated region
      $region45: #{embedding_net_l2_forward.1} parent=5 // pred_check
        %p280 = pneg %p279
      $region46: #{embedding_net_l2_forward.1} parent=5 // pred_check_branch
        %282 = sbr.rel (%p280) target = $region48
      $region47: #{embedding_net_l2_forward.1} parent=5 // pred_region
        // Predicated region
        $region49: #{embedding_net_l2_forward.1} parent=47 // pred_check
          %p283 = pneg %p40
        $region50: #{embedding_net_l2_forward.1} parent=47 // pred_check_branch
          %285 = sbr.rel (%p283) target = $region52
        $region51: #{embedding_net_l2_forward.1} parent=47 // pred_region
          %s286 = smul.u32 8, %s20
          %p287 = scmp.lt.s32.totalorder %s286, 15
          %s288 = scalar_select %p287, %s286, 15
          %s289 = smul.addr %s288, 64
          %s290 = smul.addr %s289, 8
          %s291 = scalar_lea.vmem %s0, %s290
          %s292 = smul.u32 8, %s20
        $region52: #{embedding_net_l2_forward.1} parent=47 // pred_fallthru
          _
      $region48: #{embedding_net_l2_forward.1} parent=5 // pred_fallthru
        _
      %p293 = scmp.le.s32.totalorder 1, %s20
      %p294 = scmp.lt.s32.totalorder %s20, 3
      %p295 = pnand %p293, %p294
      %p296 = pneg %p295
      // Predicated region
      $region53: #{embedding_net_l2_forward.1} parent=5 // pred_check
        _
      $region54: #{embedding_net_l2_forward.1} parent=5 // pred_check_branch
        %298 = sbr.rel (%p295) target = $region56
      $region55: #{embedding_net_l2_forward.1} parent=5 // pred_region
        %s299 = ssub.s32 %s20, 1
        %s300 = smul.u32 8, %s25
        %p301 = scmp.lt.s32.totalorder %s300, 15
        %s302 = scalar_select %p301, %s300, 15
        %s303 = smul.addr %s302, 64
        %s304 = smul.addr %s303, 8
        %s305 = scalar_lea.vmem %s0, %s304
        %p306 = pneg %p46
        %p307 = pneg %p43
        %p308 = pneg %p67
        %p309 = pneg %p64
        %p310 = pneg %p88
        %p311 = pneg %p85
        %p312 = pneg %p109
        %p313 = pneg %p106
        %p314 = pneg %p130
        %p315 = pneg %p127
        %p316 = pneg %p151
        %p317 = pneg %p148
        %p318 = pneg %p172
        %p319 = pneg %p169
        %p320 = pneg %p193
        %p321 = pneg %p190
        %p322 = pneg %p214
        %p323 = pneg %p211
        %p324 = pneg %p240
        %p325 = pneg %p237
        %s326 = sand.u32 %s227, 1
        %s327 = scalar_lea.sflag [#allocation5], %s326
        %s328 = sand.u32 %s227, 1
        %s329 = smul.addr %s328, 8
        %s330 = scalar_lea.vmem [#allocation4], %s329
        %s331 = smul.u32 8, %s25
        %p332 = scmp.lt.s32.totalorder %s331, 15
        %s333 = scalar_select %p332, %s331, 15
        %s334 = smul.addr %s333, 64
        %s335 = smul.addr %s334, 8
        %s336 = scalar_lea.vmem %s0, %s335
        %s337 = smul.u32 8, %s25
        %v338 = vld [vmem:[%s336] sm:$0xff]
        %v339 = vld [vmem:[%s336 + $0x8] sm:$0xff]
        %v340 = vld [vmem:[%s336 + $0x10] sm:$0xff]
        %v341 = vld [vmem:[%s336 + $0x18] sm:$0xff]
        %v342 = vld [vmem:[%s336 + $0x20] sm:$0xff]
        %v343 = vld [vmem:[%s336 + $0x28] sm:$0xff]
        %v344 = vld [vmem:[%s336 + $0x30] sm:$0xff]
        %v345 = vld [vmem:[%s336 + $0x38] sm:$0xff]
        %v346 = vld [vmem:[%s336 + $0x40] sm:$0xff]
        %v347 = vld [vmem:[%s336 + $0x48] sm:$0xff]
        %v348 = vld [vmem:[%s336 + $0x50] sm:$0xff]
        %v349 = vld [vmem:[%s336 + $0x58] sm:$0xff]
        %v350 = vld [vmem:[%s336 + $0x60] sm:$0xff]
        %v351 = vld [vmem:[%s336 + $0x68] sm:$0xff]
        %v352 = vld [vmem:[%s336 + $0x70] sm:$0xff]
        %v353 = vld [vmem:[%s336 + $0x78] sm:$0xff]
        %v354 = vld [vmem:[%s336 + $0x80] sm:$0xff]
        %v355 = vld [vmem:[%s336 + $0x88] sm:$0xff]
        %v356 = vld [vmem:[%s336 + $0x90] sm:$0xff]
        %v357 = vld [vmem:[%s336 + $0x98] sm:$0xff]
        %v358 = vld [vmem:[%s336 + $0xa0] sm:$0xff]
        %v359 = vld [vmem:[%s336 + $0xa8] sm:$0xff]
        %v360 = vld [vmem:[%s336 + $0xb0] sm:$0xff]
        %v361 = vld [vmem:[%s336 + $0xb8] sm:$0xff]
        %v362 = vld [vmem:[%s336 + $0xc0] sm:$0xff]
        %v363 = vld [vmem:[%s336 + $0xc8] sm:$0xff]
        %v364 = vld [vmem:[%s336 + $0xd0] sm:$0xff]
        %v365 = vld [vmem:[%s336 + $0xd8] sm:$0xff]
        %v366 = vld [vmem:[%s336 + $0xe0] sm:$0xff]
        %v367 = vld [vmem:[%s336 + $0xe8] sm:$0xff]
        %v368 = vld [vmem:[%s336 + $0xf0] sm:$0xff]
        %v369 = vld [vmem:[%s336 + $0xf8] sm:$0xff]
        %v370 = vld [vmem:[%s336 + $0x100] sm:$0xff]
        %v371 = vld [vmem:[%s336 + $0x108] sm:$0xff]
        %v372 = vld [vmem:[%s336 + $0x110] sm:$0xff]
        %v373 = vld [vmem:[%s336 + $0x118] sm:$0xff]
        %v374 = vld [vmem:[%s336 + $0x120] sm:$0xff]
        %v375 = vld [vmem:[%s336 + $0x128] sm:$0xff]
        %v376 = vld [vmem:[%s336 + $0x130] sm:$0xff]
        %v377 = vld [vmem:[%s336 + $0x138] sm:$0xff]
        %v378 = vld [vmem:[%s336 + $0x140] sm:$0xff]
        %v379 = vld [vmem:[%s336 + $0x148] sm:$0xff]
        %v380 = vld [vmem:[%s336 + $0x150] sm:$0xff]
        %v381 = vld [vmem:[%s336 + $0x158] sm:$0xff]
        %v382 = vld [vmem:[%s336 + $0x160] sm:$0xff]
        %v383 = vld [vmem:[%s336 + $0x168] sm:$0xff]
        %v384 = vld [vmem:[%s336 + $0x170] sm:$0xff]
        %v385 = vld [vmem:[%s336 + $0x178] sm:$0xff]
        %v386 = vld [vmem:[%s336 + $0x180] sm:$0xff]
        %v387 = vld [vmem:[%s336 + $0x188] sm:$0xff]
        %v388 = vld [vmem:[%s336 + $0x190] sm:$0xff]
        %v389 = vld [vmem:[%s336 + $0x198] sm:$0xff]
        %v390 = vld [vmem:[%s336 + $0x1a0] sm:$0xff]
        %v391 = vld [vmem:[%s336 + $0x1a8] sm:$0xff]
        %v392 = vld [vmem:[%s336 + $0x1b0] sm:$0xff]
        %v393 = vld [vmem:[%s336 + $0x1b8] sm:$0xff]
        %v394 = vld [vmem:[%s336 + $0x1c0] sm:$0xff]
        %v395 = vld [vmem:[%s336 + $0x1c8] sm:$0xff]
        %v396 = vld [vmem:[%s336 + $0x1d0] sm:$0xff]
        %v397 = vld [vmem:[%s336 + $0x1d8] sm:$0xff]
        %v398 = vld [vmem:[%s336 + $0x1e0] sm:$0xff]
        %v399 = vld [vmem:[%s336 + $0x1e8] sm:$0xff]
        %v400 = vld [vmem:[%s336 + $0x1f0] sm:$0xff]
        %v401 = vld [vmem:[%s336 + $0x1f8] sm:$0xff]
        %v402 = vld [vmem:[%s336 + $0x200] sm:$0xff]
        %v403 = vld [vmem:[%s336 + $0x208] sm:$0xff]
        %v404 = vld [vmem:[%s336 + $0x210] sm:$0xff]
        %v405 = vld [vmem:[%s336 + $0x218] sm:$0xff]
        %v406 = vld [vmem:[%s336 + $0x220] sm:$0xff]
        %v407 = vld [vmem:[%s336 + $0x228] sm:$0xff]
        %v408 = vld [vmem:[%s336 + $0x230] sm:$0xff]
        %v409 = vld [vmem:[%s336 + $0x238] sm:$0xff]
        %v410 = vld [vmem:[%s336 + $0x240] sm:$0xff]
        %v411 = vld [vmem:[%s336 + $0x248] sm:$0xff]
        %v412 = vld [vmem:[%s336 + $0x250] sm:$0xff]
        %v413 = vld [vmem:[%s336 + $0x258] sm:$0xff]
        %v414 = vld [vmem:[%s336 + $0x260] sm:$0xff]
        %v415 = vld [vmem:[%s336 + $0x268] sm:$0xff]
        %v416 = vld [vmem:[%s336 + $0x270] sm:$0xff]
        %v417 = vld [vmem:[%s336 + $0x278] sm:$0xff]
        %v418 = vld [vmem:[%s336 + $0x280] sm:$0xff]
        %v419 = vld [vmem:[%s336 + $0x288] sm:$0xff]
        %v420 = vld [vmem:[%s336 + $0x290] sm:$0xff]
        %v421 = vld [vmem:[%s336 + $0x298] sm:$0xff]
        %v422 = vld [vmem:[%s336 + $0x2a0] sm:$0xff]
        %v423 = vld [vmem:[%s336 + $0x2a8] sm:$0xff]
        %v424 = vld [vmem:[%s336 + $0x2b0] sm:$0xff]
        %v425 = vld [vmem:[%s336 + $0x2b8] sm:$0xff]
        %v426 = vld [vmem:[%s336 + $0x2c0] sm:$0xff]
        %v427 = vld [vmem:[%s336 + $0x2c8] sm:$0xff]
        %v428 = vld [vmem:[%s336 + $0x2d0] sm:$0xff]
        %v429 = vld [vmem:[%s336 + $0x2d8] sm:$0xff]
        %v430 = vld [vmem:[%s336 + $0x2e0] sm:$0xff]
        %v431 = vld [vmem:[%s336 + $0x2e8] sm:$0xff]
        %v432 = vld [vmem:[%s336 + $0x2f0] sm:$0xff]
        %v433 = vld [vmem:[%s336 + $0x2f8] sm:$0xff]
        %v434 = vld [vmem:[%s336 + $0x300] sm:$0xff]
        %v435 = vld [vmem:[%s336 + $0x308] sm:$0xff]
        %v436 = vld [vmem:[%s336 + $0x310] sm:$0xff]
        %v437 = vld [vmem:[%s336 + $0x318] sm:$0xff]
        %v438 = vld [vmem:[%s336 + $0x320] sm:$0xff]
        %v439 = vld [vmem:[%s336 + $0x328] sm:$0xff]
        %v440 = vld [vmem:[%s336 + $0x330] sm:$0xff]
        %v441 = vld [vmem:[%s336 + $0x338] sm:$0xff]
        %v442 = vld [vmem:[%s336 + $0x340] sm:$0xff]
        %v443 = vld [vmem:[%s336 + $0x348] sm:$0xff]
        %v444 = vld [vmem:[%s336 + $0x350] sm:$0xff]
        %v445 = vld [vmem:[%s336 + $0x358] sm:$0xff]
        %v446 = vld [vmem:[%s336 + $0x360] sm:$0xff]
        %v447 = vld [vmem:[%s336 + $0x368] sm:$0xff]
        %v448 = vld [vmem:[%s336 + $0x370] sm:$0xff]
        %v449 = vld [vmem:[%s336 + $0x378] sm:$0xff]
        %v450 = vld [vmem:[%s336 + $0x380] sm:$0xff]
        %v451 = vld [vmem:[%s336 + $0x388] sm:$0xff]
        %v452 = vld [vmem:[%s336 + $0x390] sm:$0xff]
        %v453 = vld [vmem:[%s336 + $0x398] sm:$0xff]
        %v454 = vld [vmem:[%s336 + $0x3a0] sm:$0xff]
        %v455 = vld [vmem:[%s336 + $0x3a8] sm:$0xff]
        %v456 = vld [vmem:[%s336 + $0x3b0] sm:$0xff]
        %v457 = vld [vmem:[%s336 + $0x3b8] sm:$0xff]
        %v458 = vld [vmem:[%s336 + $0x3c0] sm:$0xff]
        %v459 = vld [vmem:[%s336 + $0x3c8] sm:$0xff]
        %v460 = vld [vmem:[%s336 + $0x3d0] sm:$0xff]
        %v461 = vld [vmem:[%s336 + $0x3d8] sm:$0xff]
        %v462 = vld [vmem:[%s336 + $0x3e0] sm:$0xff]
        %v463 = vld [vmem:[%s336 + $0x3e8] sm:$0xff]
        %v464 = vld [vmem:[%s336 + $0x3f0] sm:$0xff]
        %v465 = vld [vmem:[%s336 + $0x3f8] sm:$0xff]
        %v466 = vld [vmem:[%s336 + $0x400] sm:$0xff]
        %v467 = vld [vmem:[%s336 + $0x408] sm:$0xff]
        %v468 = vld [vmem:[%s336 + $0x410] sm:$0xff]
        %v469 = vld [vmem:[%s336 + $0x418] sm:$0xff]
        %v470 = vld [vmem:[%s336 + $0x420] sm:$0xff]
        %v471 = vld [vmem:[%s336 + $0x428] sm:$0xff]
        %v472 = vld [vmem:[%s336 + $0x430] sm:$0xff]
        %v473 = vld [vmem:[%s336 + $0x438] sm:$0xff]
        %v474 = vld [vmem:[%s336 + $0x440] sm:$0xff]
        %v475 = vld [vmem:[%s336 + $0x448] sm:$0xff]
        %v476 = vld [vmem:[%s336 + $0x450] sm:$0xff]
        %v477 = vld [vmem:[%s336 + $0x458] sm:$0xff]
        %v478 = vld [vmem:[%s336 + $0x460] sm:$0xff]
        %v479 = vld [vmem:[%s336 + $0x468] sm:$0xff]
        %v480 = vld [vmem:[%s336 + $0x470] sm:$0xff]
        %v481 = vld [vmem:[%s336 + $0x478] sm:$0xff]
        %v482 = vld [vmem:[%s336 + $0x480] sm:$0xff]
        %v483 = vld [vmem:[%s336 + $0x488] sm:$0xff]
        %v484 = vld [vmem:[%s336 + $0x490] sm:$0xff]
        %v485 = vld [vmem:[%s336 + $0x498] sm:$0xff]
        %v486 = vld [vmem:[%s336 + $0x4a0] sm:$0xff]
        %v487 = vld [vmem:[%s336 + $0x4a8] sm:$0xff]
        %v488 = vld [vmem:[%s336 + $0x4b0] sm:$0xff]
        %v489 = vld [vmem:[%s336 + $0x4b8] sm:$0xff]
        %v490 = vld [vmem:[%s336 + $0x4c0] sm:$0xff]
        %v491 = vld [vmem:[%s336 + $0x4c8] sm:$0xff]
        %v492 = vld [vmem:[%s336 + $0x4d0] sm:$0xff]
        %v493 = vld [vmem:[%s336 + $0x4d8] sm:$0xff]
        %v494 = vld [vmem:[%s336 + $0x4e0] sm:$0xff]
        %v495 = vld [vmem:[%s336 + $0x4e8] sm:$0xff]
        %v496 = vld [vmem:[%s336 + $0x4f0] sm:$0xff]
        %v497 = vld [vmem:[%s336 + $0x4f8] sm:$0xff]
        %v498 = vld [vmem:[%s336 + $0x500] sm:$0xff]
        %v499 = vld [vmem:[%s336 + $0x508] sm:$0xff]
        %v500 = vld [vmem:[%s336 + $0x510] sm:$0xff]
        %v501 = vld [vmem:[%s336 + $0x518] sm:$0xff]
        %v502 = vld [vmem:[%s336 + $0x520] sm:$0xff]
        %v503 = vld [vmem:[%s336 + $0x528] sm:$0xff]
        %v504 = vld [vmem:[%s336 + $0x530] sm:$0xff]
        %v505 = vld [vmem:[%s336 + $0x538] sm:$0xff]
        %v506 = vld [vmem:[%s336 + $0x540] sm:$0xff]
        %v507 = vld [vmem:[%s336 + $0x548] sm:$0xff]
        %v508 = vld [vmem:[%s336 + $0x550] sm:$0xff]
        %v509 = vld [vmem:[%s336 + $0x558] sm:$0xff]
        %v510 = vld [vmem:[%s336 + $0x560] sm:$0xff]
        %v511 = vld [vmem:[%s336 + $0x568] sm:$0xff]
        %v512 = vld [vmem:[%s336 + $0x570] sm:$0xff]
        %v513 = vld [vmem:[%s336 + $0x578] sm:$0xff]
        %v514 = vld [vmem:[%s336 + $0x580] sm:$0xff]
        %v515 = vld [vmem:[%s336 + $0x588] sm:$0xff]
        %v516 = vld [vmem:[%s336 + $0x590] sm:$0xff]
        %v517 = vld [vmem:[%s336 + $0x598] sm:$0xff]
        %v518 = vld [vmem:[%s336 + $0x5a0] sm:$0xff]
        %v519 = vld [vmem:[%s336 + $0x5a8] sm:$0xff]
        %v520 = vld [vmem:[%s336 + $0x5b0] sm:$0xff]
        %v521 = vld [vmem:[%s336 + $0x5b8] sm:$0xff]
        %v522 = vld [vmem:[%s336 + $0x5c0] sm:$0xff]
        %v523 = vld [vmem:[%s336 + $0x5c8] sm:$0xff]
        %v524 = vld [vmem:[%s336 + $0x5d0] sm:$0xff]
        %v525 = vld [vmem:[%s336 + $0x5d8] sm:$0xff]
        %v526 = vld [vmem:[%s336 + $0x5e0] sm:$0xff]
        %v527 = vld [vmem:[%s336 + $0x5e8] sm:$0xff]
        %v528 = vld [vmem:[%s336 + $0x5f0] sm:$0xff]
        %v529 = vld [vmem:[%s336 + $0x5f8] sm:$0xff]
        %v530 = vld [vmem:[%s336 + $0x600] sm:$0xff]
        %v531 = vld [vmem:[%s336 + $0x608] sm:$0xff]
        %v532 = vld [vmem:[%s336 + $0x610] sm:$0xff]
        %v533 = vld [vmem:[%s336 + $0x618] sm:$0xff]
        %v534 = vld [vmem:[%s336 + $0x620] sm:$0xff]
        %v535 = vld [vmem:[%s336 + $0x628] sm:$0xff]
        %v536 = vld [vmem:[%s336 + $0x630] sm:$0xff]
        %v537 = vld [vmem:[%s336 + $0x638] sm:$0xff]
        %v538 = vld [vmem:[%s336 + $0x640] sm:$0xff]
        %v539 = vld [vmem:[%s336 + $0x648] sm:$0xff]
        %v540 = vld [vmem:[%s336 + $0x650] sm:$0xff]
        %v541 = vld [vmem:[%s336 + $0x658] sm:$0xff]
        %v542 = vld [vmem:[%s336 + $0x660] sm:$0xff]
        %v543 = vld [vmem:[%s336 + $0x668] sm:$0xff]
        %v544 = vld [vmem:[%s336 + $0x670] sm:$0xff]
        %v545 = vld [vmem:[%s336 + $0x678] sm:$0xff]
        %v546 = vld [vmem:[%s336 + $0x680] sm:$0xff]
        %v547 = vld [vmem:[%s336 + $0x688] sm:$0xff]
        %v548 = vld [vmem:[%s336 + $0x690] sm:$0xff]
        %v549 = vld [vmem:[%s336 + $0x698] sm:$0xff]
        %v550 = vld [vmem:[%s336 + $0x6a0] sm:$0xff]
        %v551 = vld [vmem:[%s336 + $0x6a8] sm:$0xff]
        %v552 = vld [vmem:[%s336 + $0x6b0] sm:$0xff]
        %v553 = vld [vmem:[%s336 + $0x6b8] sm:$0xff]
        %v554 = vld [vmem:[%s336 + $0x6c0] sm:$0xff]
        %v555 = vld [vmem:[%s336 + $0x6c8] sm:$0xff]
        %v556 = vld [vmem:[%s336 + $0x6d0] sm:$0xff]
        %v557 = vld [vmem:[%s336 + $0x6d8] sm:$0xff]
        %v558 = vld [vmem:[%s336 + $0x6e0] sm:$0xff]
        %v559 = vld [vmem:[%s336 + $0x6e8] sm:$0xff]
        %v560 = vld [vmem:[%s336 + $0x6f0] sm:$0xff]
        %v561 = vld [vmem:[%s336 + $0x6f8] sm:$0xff]
        %v562 = vld [vmem:[%s336 + $0x700] sm:$0xff]
        %v563 = vld [vmem:[%s336 + $0x708] sm:$0xff]
        %v564 = vld [vmem:[%s336 + $0x710] sm:$0xff]
        %v565 = vld [vmem:[%s336 + $0x718] sm:$0xff]
        %v566 = vld [vmem:[%s336 + $0x720] sm:$0xff]
        %v567 = vld [vmem:[%s336 + $0x728] sm:$0xff]
        %v568 = vld [vmem:[%s336 + $0x730] sm:$0xff]
        %v569 = vld [vmem:[%s336 + $0x738] sm:$0xff]
        %v570 = vld [vmem:[%s336 + $0x740] sm:$0xff]
        %v571 = vld [vmem:[%s336 + $0x748] sm:$0xff]
        %v572 = vld [vmem:[%s336 + $0x750] sm:$0xff]
        %v573 = vld [vmem:[%s336 + $0x758] sm:$0xff]
        %v574 = vld [vmem:[%s336 + $0x760] sm:$0xff]
        %v575 = vld [vmem:[%s336 + $0x768] sm:$0xff]
        %v576 = vld [vmem:[%s336 + $0x770] sm:$0xff]
        %v577 = vld [vmem:[%s336 + $0x778] sm:$0xff]
        %v578 = vld [vmem:[%s336 + $0x780] sm:$0xff]
        %v579 = vld [vmem:[%s336 + $0x788] sm:$0xff]
        %v580 = vld [vmem:[%s336 + $0x790] sm:$0xff]
        %v581 = vld [vmem:[%s336 + $0x798] sm:$0xff]
        %v582 = vld [vmem:[%s336 + $0x7a0] sm:$0xff]
        %v583 = vld [vmem:[%s336 + $0x7a8] sm:$0xff]
        %v584 = vld [vmem:[%s336 + $0x7b0] sm:$0xff]
        %v585 = vld [vmem:[%s336 + $0x7b8] sm:$0xff]
        %v586 = vld [vmem:[%s336 + $0x7c0] sm:$0xff]
        %v587 = vld [vmem:[%s336 + $0x7c8] sm:$0xff]
        %v588 = vld [vmem:[%s336 + $0x7d0] sm:$0xff]
        %v589 = vld [vmem:[%s336 + $0x7d8] sm:$0xff]
        %v590 = vld [vmem:[%s336 + $0x7e0] sm:$0xff]
        %v591 = vld [vmem:[%s336 + $0x7e8] sm:$0xff]
        %v592 = vld [vmem:[%s336 + $0x7f0] sm:$0xff]
        %v593 = vld [vmem:[%s336 + $0x7f8] sm:$0xff]
        %v594 = vld [vmem:[%s336 + $0x800] sm:$0xff]
        %v595 = vld [vmem:[%s336 + $0x808] sm:$0xff]
        %v596 = vld [vmem:[%s336 + $0x810] sm:$0xff]
        %v597 = vld [vmem:[%s336 + $0x818] sm:$0xff]
        %v598 = vld [vmem:[%s336 + $0x820] sm:$0xff]
        %v599 = vld [vmem:[%s336 + $0x828] sm:$0xff]
        %v600 = vld [vmem:[%s336 + $0x830] sm:$0xff]
        %v601 = vld [vmem:[%s336 + $0x838] sm:$0xff]
        %v602 = vld [vmem:[%s336 + $0x840] sm:$0xff]
        %v603 = vld [vmem:[%s336 + $0x848] sm:$0xff]
        %v604 = vld [vmem:[%s336 + $0x850] sm:$0xff]
        %v605 = vld [vmem:[%s336 + $0x858] sm:$0xff]
        %v606 = vld [vmem:[%s336 + $0x860] sm:$0xff]
        %v607 = vld [vmem:[%s336 + $0x868] sm:$0xff]
        %v608 = vld [vmem:[%s336 + $0x870] sm:$0xff]
        %v609 = vld [vmem:[%s336 + $0x878] sm:$0xff]
        %v610 = vld [vmem:[%s336 + $0x880] sm:$0xff]
        %v611 = vld [vmem:[%s336 + $0x888] sm:$0xff]
        %v612 = vld [vmem:[%s336 + $0x890] sm:$0xff]
        %v613 = vld [vmem:[%s336 + $0x898] sm:$0xff]
        %v614 = vld [vmem:[%s336 + $0x8a0] sm:$0xff]
        %v615 = vld [vmem:[%s336 + $0x8a8] sm:$0xff]
        %v616 = vld [vmem:[%s336 + $0x8b0] sm:$0xff]
        %v617 = vld [vmem:[%s336 + $0x8b8] sm:$0xff]
        %v618 = vld [vmem:[%s336 + $0x8c0] sm:$0xff]
        %v619 = vld [vmem:[%s336 + $0x8c8] sm:$0xff]
        %v620 = vld [vmem:[%s336 + $0x8d0] sm:$0xff]
        %v621 = vld [vmem:[%s336 + $0x8d8] sm:$0xff]
        %v622 = vld [vmem:[%s336 + $0x8e0] sm:$0xff]
        %v623 = vld [vmem:[%s336 + $0x8e8] sm:$0xff]
        %v624 = vld [vmem:[%s336 + $0x8f0] sm:$0xff]
        %v625 = vld [vmem:[%s336 + $0x8f8] sm:$0xff]
        %v626 = vld [vmem:[%s336 + $0x900] sm:$0xff]
        %v627 = vld [vmem:[%s336 + $0x908] sm:$0xff]
        %v628 = vld [vmem:[%s336 + $0x910] sm:$0xff]
        %v629 = vld [vmem:[%s336 + $0x918] sm:$0xff]
        %v630 = vld [vmem:[%s336 + $0x920] sm:$0xff]
        %v631 = vld [vmem:[%s336 + $0x928] sm:$0xff]
        %v632 = vld [vmem:[%s336 + $0x930] sm:$0xff]
        %v633 = vld [vmem:[%s336 + $0x938] sm:$0xff]
        %v634 = vld [vmem:[%s336 + $0x940] sm:$0xff]
        %v635 = vld [vmem:[%s336 + $0x948] sm:$0xff]
        %v636 = vld [vmem:[%s336 + $0x950] sm:$0xff]
        %v637 = vld [vmem:[%s336 + $0x958] sm:$0xff]
        %v638 = vld [vmem:[%s336 + $0x960] sm:$0xff]
        %v639 = vld [vmem:[%s336 + $0x968] sm:$0xff]
        %v640 = vld [vmem:[%s336 + $0x970] sm:$0xff]
        %v641 = vld [vmem:[%s336 + $0x978] sm:$0xff]
        %v642 = vld [vmem:[%s336 + $0x980] sm:$0xff]
        %v643 = vld [vmem:[%s336 + $0x988] sm:$0xff]
        %v644 = vld [vmem:[%s336 + $0x990] sm:$0xff]
        %v645 = vld [vmem:[%s336 + $0x998] sm:$0xff]
        %v646 = vld [vmem:[%s336 + $0x9a0] sm:$0xff]
        %v647 = vld [vmem:[%s336 + $0x9a8] sm:$0xff]
        %v648 = vld [vmem:[%s336 + $0x9b0] sm:$0xff]
        %v649 = vld [vmem:[%s336 + $0x9b8] sm:$0xff]
        %v650 = vld [vmem:[%s336 + $0x9c0] sm:$0xff]
        %v651 = vld [vmem:[%s336 + $0x9c8] sm:$0xff]
        %v652 = vld [vmem:[%s336 + $0x9d0] sm:$0xff]
        %v653 = vld [vmem:[%s336 + $0x9d8] sm:$0xff]
        %v654 = vld [vmem:[%s336 + $0x9e0] sm:$0xff]
        %v655 = vld [vmem:[%s336 + $0x9e8] sm:$0xff]
        %v656 = vld [vmem:[%s336 + $0x9f0] sm:$0xff]
        %v657 = vld [vmem:[%s336 + $0x9f8] sm:$0xff]
        %v658 = vld [vmem:[%s336 + $0xa00] sm:$0xff]
        %v659 = vld [vmem:[%s336 + $0xa08] sm:$0xff]
        %v660 = vld [vmem:[%s336 + $0xa10] sm:$0xff]
        %v661 = vld [vmem:[%s336 + $0xa18] sm:$0xff]
        %v662 = vld [vmem:[%s336 + $0xa20] sm:$0xff]
        %v663 = vld [vmem:[%s336 + $0xa28] sm:$0xff]
        %v664 = vld [vmem:[%s336 + $0xa30] sm:$0xff]
        %v665 = vld [vmem:[%s336 + $0xa38] sm:$0xff]
        %v666 = vld [vmem:[%s336 + $0xa40] sm:$0xff]
        %v667 = vld [vmem:[%s336 + $0xa48] sm:$0xff]
        %v668 = vld [vmem:[%s336 + $0xa50] sm:$0xff]
        %v669 = vld [vmem:[%s336 + $0xa58] sm:$0xff]
        %v670 = vld [vmem:[%s336 + $0xa60] sm:$0xff]
        %v671 = vld [vmem:[%s336 + $0xa68] sm:$0xff]
        %v672 = vld [vmem:[%s336 + $0xa70] sm:$0xff]
        %v673 = vld [vmem:[%s336 + $0xa78] sm:$0xff]
        %v674 = vld [vmem:[%s336 + $0xa80] sm:$0xff]
        %v675 = vld [vmem:[%s336 + $0xa88] sm:$0xff]
        %v676 = vld [vmem:[%s336 + $0xa90] sm:$0xff]
        %v677 = vld [vmem:[%s336 + $0xa98] sm:$0xff]
        %v678 = vld [vmem:[%s336 + $0xaa0] sm:$0xff]
        %v679 = vld [vmem:[%s336 + $0xaa8] sm:$0xff]
        %v680 = vld [vmem:[%s336 + $0xab0] sm:$0xff]
        %v681 = vld [vmem:[%s336 + $0xab8] sm:$0xff]
        %v682 = vld [vmem:[%s336 + $0xac0] sm:$0xff]
        %v683 = vld [vmem:[%s336 + $0xac8] sm:$0xff]
        %v684 = vld [vmem:[%s336 + $0xad0] sm:$0xff]
        %v685 = vld [vmem:[%s336 + $0xad8] sm:$0xff]
        %v686 = vld [vmem:[%s336 + $0xae0] sm:$0xff]
        %v687 = vld [vmem:[%s336 + $0xae8] sm:$0xff]
        %v688 = vld [vmem:[%s336 + $0xaf0] sm:$0xff]
        %v689 = vld [vmem:[%s336 + $0xaf8] sm:$0xff]
        %v690 = vld [vmem:[%s336 + $0xb00] sm:$0xff]
        %v691 = vld [vmem:[%s336 + $0xb08] sm:$0xff]
        %v692 = vld [vmem:[%s336 + $0xb10] sm:$0xff]
        %v693 = vld [vmem:[%s336 + $0xb18] sm:$0xff]
        %v694 = vld [vmem:[%s336 + $0xb20] sm:$0xff]
        %v695 = vld [vmem:[%s336 + $0xb28] sm:$0xff]
        %v696 = vld [vmem:[%s336 + $0xb30] sm:$0xff]
        %v697 = vld [vmem:[%s336 + $0xb38] sm:$0xff]
        %v698 = vld [vmem:[%s336 + $0xb40] sm:$0xff]
        %v699 = vld [vmem:[%s336 + $0xb48] sm:$0xff]
        %v700 = vld [vmem:[%s336 + $0xb50] sm:$0xff]
        %v701 = vld [vmem:[%s336 + $0xb58] sm:$0xff]
        %v702 = vld [vmem:[%s336 + $0xb60] sm:$0xff]
        %v703 = vld [vmem:[%s336 + $0xb68] sm:$0xff]
        %v704 = vld [vmem:[%s336 + $0xb70] sm:$0xff]
        %v705 = vld [vmem:[%s336 + $0xb78] sm:$0xff]
        %v706 = vld [vmem:[%s336 + $0xb80] sm:$0xff]
        %v707 = vld [vmem:[%s336 + $0xb88] sm:$0xff]
        %v708 = vld [vmem:[%s336 + $0xb90] sm:$0xff]
        %v709 = vld [vmem:[%s336 + $0xb98] sm:$0xff]
        %v710 = vld [vmem:[%s336 + $0xba0] sm:$0xff]
        %v711 = vld [vmem:[%s336 + $0xba8] sm:$0xff]
        %v712 = vld [vmem:[%s336 + $0xbb0] sm:$0xff]
        %v713 = vld [vmem:[%s336 + $0xbb8] sm:$0xff]
        %v714 = vld [vmem:[%s336 + $0xbc0] sm:$0xff]
        %v715 = vld [vmem:[%s336 + $0xbc8] sm:$0xff]
        %v716 = vld [vmem:[%s336 + $0xbd0] sm:$0xff]
        %v717 = vld [vmem:[%s336 + $0xbd8] sm:$0xff]
        %v718 = vld [vmem:[%s336 + $0xbe0] sm:$0xff]
        %v719 = vld [vmem:[%s336 + $0xbe8] sm:$0xff]
        %v720 = vld [vmem:[%s336 + $0xbf0] sm:$0xff]
        %v721 = vld [vmem:[%s336 + $0xbf8] sm:$0xff]
        %v722 = vld [vmem:[%s336 + $0xc00] sm:$0xff]
        %v723 = vld [vmem:[%s336 + $0xc08] sm:$0xff]
        %v724 = vld [vmem:[%s336 + $0xc10] sm:$0xff]
        %v725 = vld [vmem:[%s336 + $0xc18] sm:$0xff]
        %v726 = vld [vmem:[%s336 + $0xc20] sm:$0xff]
        %v727 = vld [vmem:[%s336 + $0xc28] sm:$0xff]
        %v728 = vld [vmem:[%s336 + $0xc30] sm:$0xff]
        %v729 = vld [vmem:[%s336 + $0xc38] sm:$0xff]
        %v730 = vld [vmem:[%s336 + $0xc40] sm:$0xff]
        %v731 = vld [vmem:[%s336 + $0xc48] sm:$0xff]
        %v732 = vld [vmem:[%s336 + $0xc50] sm:$0xff]
        %v733 = vld [vmem:[%s336 + $0xc58] sm:$0xff]
        %v734 = vld [vmem:[%s336 + $0xc60] sm:$0xff]
        %v735 = vld [vmem:[%s336 + $0xc68] sm:$0xff]
        %v736 = vld [vmem:[%s336 + $0xc70] sm:$0xff]
        %v737 = vld [vmem:[%s336 + $0xc78] sm:$0xff]
        %v738 = vld [vmem:[%s336 + $0xc80] sm:$0xff]
        %v739 = vld [vmem:[%s336 + $0xc88] sm:$0xff]
        %v740 = vld [vmem:[%s336 + $0xc90] sm:$0xff]
        %v741 = vld [vmem:[%s336 + $0xc98] sm:$0xff]
        %v742 = vld [vmem:[%s336 + $0xca0] sm:$0xff]
        %v743 = vld [vmem:[%s336 + $0xca8] sm:$0xff]
        %v744 = vld [vmem:[%s336 + $0xcb0] sm:$0xff]
        %v745 = vld [vmem:[%s336 + $0xcb8] sm:$0xff]
        %v746 = vld [vmem:[%s336 + $0xcc0] sm:$0xff]
        %v747 = vld [vmem:[%s336 + $0xcc8] sm:$0xff]
        %v748 = vld [vmem:[%s336 + $0xcd0] sm:$0xff]
        %v749 = vld [vmem:[%s336 + $0xcd8] sm:$0xff]
        %v750 = vld [vmem:[%s336 + $0xce0] sm:$0xff]
        %v751 = vld [vmem:[%s336 + $0xce8] sm:$0xff]
        %v752 = vld [vmem:[%s336 + $0xcf0] sm:$0xff]
        %v753 = vld [vmem:[%s336 + $0xcf8] sm:$0xff]
        %v754 = vld [vmem:[%s336 + $0xd00] sm:$0xff]
        %v755 = vld [vmem:[%s336 + $0xd08] sm:$0xff]
        %v756 = vld [vmem:[%s336 + $0xd10] sm:$0xff]
        %v757 = vld [vmem:[%s336 + $0xd18] sm:$0xff]
        %v758 = vld [vmem:[%s336 + $0xd20] sm:$0xff]
        %v759 = vld [vmem:[%s336 + $0xd28] sm:$0xff]
        %v760 = vld [vmem:[%s336 + $0xd30] sm:$0xff]
        %v761 = vld [vmem:[%s336 + $0xd38] sm:$0xff]
        %v762 = vld [vmem:[%s336 + $0xd40] sm:$0xff]
        %v763 = vld [vmem:[%s336 + $0xd48] sm:$0xff]
        %v764 = vld [vmem:[%s336 + $0xd50] sm:$0xff]
        %v765 = vld [vmem:[%s336 + $0xd58] sm:$0xff]
        %v766 = vld [vmem:[%s336 + $0xd60] sm:$0xff]
        %v767 = vld [vmem:[%s336 + $0xd68] sm:$0xff]
        %v768 = vld [vmem:[%s336 + $0xd70] sm:$0xff]
        %v769 = vld [vmem:[%s336 + $0xd78] sm:$0xff]
        %v770 = vld [vmem:[%s336 + $0xd80] sm:$0xff]
        %v771 = vld [vmem:[%s336 + $0xd88] sm:$0xff]
        %v772 = vld [vmem:[%s336 + $0xd90] sm:$0xff]
        %v773 = vld [vmem:[%s336 + $0xd98] sm:$0xff]
        %v774 = vld [vmem:[%s336 + $0xda0] sm:$0xff]
        %v775 = vld [vmem:[%s336 + $0xda8] sm:$0xff]
        %v776 = vld [vmem:[%s336 + $0xdb0] sm:$0xff]
        %v777 = vld [vmem:[%s336 + $0xdb8] sm:$0xff]
        %v778 = vld [vmem:[%s336 + $0xdc0] sm:$0xff]
        %v779 = vld [vmem:[%s336 + $0xdc8] sm:$0xff]
        %v780 = vld [vmem:[%s336 + $0xdd0] sm:$0xff]
        %v781 = vld [vmem:[%s336 + $0xdd8] sm:$0xff]
        %v782 = vld [vmem:[%s336 + $0xde0] sm:$0xff]
        %v783 = vld [vmem:[%s336 + $0xde8] sm:$0xff]
        %v784 = vld [vmem:[%s336 + $0xdf0] sm:$0xff]
        %v785 = vld [vmem:[%s336 + $0xdf8] sm:$0xff]
        %v786 = vld [vmem:[%s336 + $0xe00] sm:$0xff]
        %v787 = vld [vmem:[%s336 + $0xe08] sm:$0xff]
        %v788 = vld [vmem:[%s336 + $0xe10] sm:$0xff]
        %v789 = vld [vmem:[%s336 + $0xe18] sm:$0xff]
        %v790 = vld [vmem:[%s336 + $0xe20] sm:$0xff]
        %v791 = vld [vmem:[%s336 + $0xe28] sm:$0xff]
        %v792 = vld [vmem:[%s336 + $0xe30] sm:$0xff]
        %v793 = vld [vmem:[%s336 + $0xe38] sm:$0xff]
        %v794 = vld [vmem:[%s336 + $0xe40] sm:$0xff]
        %v795 = vld [vmem:[%s336 + $0xe48] sm:$0xff]
        %v796 = vld [vmem:[%s336 + $0xe50] sm:$0xff]
        %v797 = vld [vmem:[%s336 + $0xe58] sm:$0xff]
        %v798 = vld [vmem:[%s336 + $0xe60] sm:$0xff]
        %v799 = vld [vmem:[%s336 + $0xe68] sm:$0xff]
        %v800 = vld [vmem:[%s336 + $0xe70] sm:$0xff]
        %v801 = vld [vmem:[%s336 + $0xe78] sm:$0xff]
        %v802 = vld [vmem:[%s336 + $0xe80] sm:$0xff]
        %v803 = vld [vmem:[%s336 + $0xe88] sm:$0xff]
        %v804 = vld [vmem:[%s336 + $0xe90] sm:$0xff]
        %v805 = vld [vmem:[%s336 + $0xe98] sm:$0xff]
        %v806 = vld [vmem:[%s336 + $0xea0] sm:$0xff]
        %v807 = vld [vmem:[%s336 + $0xea8] sm:$0xff]
        %v808 = vld [vmem:[%s336 + $0xeb0] sm:$0xff]
        %v809 = vld [vmem:[%s336 + $0xeb8] sm:$0xff]
        %v810 = vld [vmem:[%s336 + $0xec0] sm:$0xff]
        %v811 = vld [vmem:[%s336 + $0xec8] sm:$0xff]
        %v812 = vld [vmem:[%s336 + $0xed0] sm:$0xff]
        %v813 = vld [vmem:[%s336 + $0xed8] sm:$0xff]
        %v814 = vld [vmem:[%s336 + $0xee0] sm:$0xff]
        %v815 = vld [vmem:[%s336 + $0xee8] sm:$0xff]
        %v816 = vld [vmem:[%s336 + $0xef0] sm:$0xff]
        %v817 = vld [vmem:[%s336 + $0xef8] sm:$0xff]
        %v818 = vld [vmem:[%s336 + $0xf00] sm:$0xff]
        %v819 = vld [vmem:[%s336 + $0xf08] sm:$0xff]
        %v820 = vld [vmem:[%s336 + $0xf10] sm:$0xff]
        %v821 = vld [vmem:[%s336 + $0xf18] sm:$0xff]
        %v822 = vld [vmem:[%s336 + $0xf20] sm:$0xff]
        %v823 = vld [vmem:[%s336 + $0xf28] sm:$0xff]
        %v824 = vld [vmem:[%s336 + $0xf30] sm:$0xff]
        %v825 = vld [vmem:[%s336 + $0xf38] sm:$0xff]
        %v826 = vld [vmem:[%s336 + $0xf40] sm:$0xff]
        %v827 = vld [vmem:[%s336 + $0xf48] sm:$0xff]
        %v828 = vld [vmem:[%s336 + $0xf50] sm:$0xff]
        %v829 = vld [vmem:[%s336 + $0xf58] sm:$0xff]
        %v830 = vld [vmem:[%s336 + $0xf60] sm:$0xff]
        %v831 = vld [vmem:[%s336 + $0xf68] sm:$0xff]
        %v832 = vld [vmem:[%s336 + $0xf70] sm:$0xff]
        %v833 = vld [vmem:[%s336 + $0xf78] sm:$0xff]
        %v834 = vld [vmem:[%s336 + $0xf80] sm:$0xff]
        %v835 = vld [vmem:[%s336 + $0xf88] sm:$0xff]
        %v836 = vld [vmem:[%s336 + $0xf90] sm:$0xff]
        %v837 = vld [vmem:[%s336 + $0xf98] sm:$0xff]
        %v838 = vld [vmem:[%s336 + $0xfa0] sm:$0xff]
        %v839 = vld [vmem:[%s336 + $0xfa8] sm:$0xff]
        %v840 = vld [vmem:[%s336 + $0xfb0] sm:$0xff]
        %v841 = vld [vmem:[%s336 + $0xfb8] sm:$0xff]
        %v842 = vld [vmem:[%s336 + $0xfc0] sm:$0xff]
        %v843 = vld [vmem:[%s336 + $0xfc8] sm:$0xff]
        %v844 = vld [vmem:[%s336 + $0xfd0] sm:$0xff]
        %v845 = vld [vmem:[%s336 + $0xfd8] sm:$0xff]
        %v846 = vld [vmem:[%s336 + $0xfe0] sm:$0xff]
        %v847 = vld [vmem:[%s336 + $0xfe8] sm:$0xff]
        %v848 = vld [vmem:[%s336 + $0xff0] sm:$0xff]
        %v849 = vld [vmem:[%s336 + $0xff8] sm:$0xff]
        %vm850 = vcmask 400384
        %v851 = vsel %vm850, %v338, 0.0
        %852 = vadd.xlane.f32.xlu0 %v851
        %v853 = vpop.xlane.xlu0 %852
        %v854 = vsel %vm850, %v339, 0.0
        %855 = vadd.xlane.f32.xlu0 %v854
        %v856 = vpop.xlane.xlu0 %855
        %v857 = vsel %vm850, %v340, 0.0
        %858 = vadd.xlane.f32.xlu0 %v857
        %v859 = vpop.xlane.xlu0 %858
        %v860 = vsel %vm850, %v341, 0.0
        %861 = vadd.xlane.f32.xlu0 %v860
        %v862 = vpop.xlane.xlu0 %861
        %v863 = vsel %vm850, %v342, 0.0
        %864 = vadd.xlane.f32.xlu0 %v863
        %v865 = vpop.xlane.xlu0 %864
        %v866 = vsel %vm850, %v343, 0.0
        %867 = vadd.xlane.f32.xlu0 %v866
        %v868 = vpop.xlane.xlu0 %867
        %v869 = vsel %vm850, %v344, 0.0
        %870 = vadd.xlane.f32.xlu0 %v869
        %v871 = vpop.xlane.xlu0 %870
        %v872 = vsel %vm850, %v345, 0.0
        %873 = vadd.xlane.f32.xlu0 %v872
        %v874 = vpop.xlane.xlu0 %873
        %v875 = vsel %vm850, %v346, 0.0
        %876 = vadd.xlane.f32.xlu0 %v875
        %v877 = vpop.xlane.xlu0 %876
        %v878 = vsel %vm850, %v347, 0.0
        %879 = vadd.xlane.f32.xlu0 %v878
        %v880 = vpop.xlane.xlu0 %879
        %v881 = vsel %vm850, %v348, 0.0
        %882 = vadd.xlane.f32.xlu0 %v881
        %v883 = vpop.xlane.xlu0 %882
        %v884 = vsel %vm850, %v349, 0.0
        %885 = vadd.xlane.f32.xlu0 %v884
        %v886 = vpop.xlane.xlu0 %885
        %v887 = vsel %vm850, %v350, 0.0
        %888 = vadd.xlane.f32.xlu0 %v887
        %v889 = vpop.xlane.xlu0 %888
        %v890 = vsel %vm850, %v351, 0.0
        %891 = vadd.xlane.f32.xlu0 %v890
        %v892 = vpop.xlane.xlu0 %891
        %v893 = vsel %vm850, %v352, 0.0
        %894 = vadd.xlane.f32.xlu0 %v893
        %v895 = vpop.xlane.xlu0 %894
        %v896 = vsel %vm850, %v353, 0.0
        %897 = vadd.xlane.f32.xlu0 %v896
        %v898 = vpop.xlane.xlu0 %897
        %v899 = vsel %vm850, %v354, 0.0
        %900 = vadd.xlane.f32.xlu0 %v899
        %v901 = vpop.xlane.xlu0 %900
        %v902 = vsel %vm850, %v355, 0.0
        %903 = vadd.xlane.f32.xlu0 %v902
        %v904 = vpop.xlane.xlu0 %903
        %v905 = vsel %vm850, %v356, 0.0
        %906 = vadd.xlane.f32.xlu0 %v905
        %v907 = vpop.xlane.xlu0 %906
        %v908 = vsel %vm850, %v357, 0.0
        %909 = vadd.xlane.f32.xlu0 %v908
        %v910 = vpop.xlane.xlu0 %909
        %v911 = vsel %vm850, %v358, 0.0
        %912 = vadd.xlane.f32.xlu0 %v911
        %v913 = vpop.xlane.xlu0 %912
        %v914 = vsel %vm850, %v359, 0.0
        %915 = vadd.xlane.f32.xlu0 %v914
        %v916 = vpop.xlane.xlu0 %915
        %v917 = vsel %vm850, %v360, 0.0
        %918 = vadd.xlane.f32.xlu0 %v917
        %v919 = vpop.xlane.xlu0 %918
        %v920 = vsel %vm850, %v361, 0.0
        %921 = vadd.xlane.f32.xlu0 %v920
        %v922 = vpop.xlane.xlu0 %921
        %v923 = vsel %vm850, %v362, 0.0
        %924 = vadd.xlane.f32.xlu0 %v923
        %v925 = vpop.xlane.xlu0 %924
        %v926 = vsel %vm850, %v363, 0.0
        %927 = vadd.xlane.f32.xlu0 %v926
        %v928 = vpop.xlane.xlu0 %927
        %v929 = vsel %vm850, %v364, 0.0
        %930 = vadd.xlane.f32.xlu0 %v929
        %v931 = vpop.xlane.xlu0 %930
        %v932 = vsel %vm850, %v365, 0.0
        %933 = vadd.xlane.f32.xlu0 %v932
        %v934 = vpop.xlane.xlu0 %933
        %v935 = vsel %vm850, %v366, 0.0
        %936 = vadd.xlane.f32.xlu0 %v935
        %v937 = vpop.xlane.xlu0 %936
        %v938 = vsel %vm850, %v367, 0.0
        %939 = vadd.xlane.f32.xlu0 %v938
        %v940 = vpop.xlane.xlu0 %939
        %v941 = vsel %vm850, %v368, 0.0
        %942 = vadd.xlane.f32.xlu0 %v941
        %v943 = vpop.xlane.xlu0 %942
        %v944 = vsel %vm850, %v369, 0.0
        %945 = vadd.xlane.f32.xlu0 %v944
        %v946 = vpop.xlane.xlu0 %945
        %v947 = vsel %vm850, %v370, 0.0
        %948 = vadd.xlane.f32.xlu0 %v947
        %v949 = vpop.xlane.xlu0 %948
        %v950 = vsel %vm850, %v371, 0.0
        %951 = vadd.xlane.f32.xlu0 %v950
        %v952 = vpop.xlane.xlu0 %951
        %v953 = vsel %vm850, %v372, 0.0
        %954 = vadd.xlane.f32.xlu0 %v953
        %v955 = vpop.xlane.xlu0 %954
        %v956 = vsel %vm850, %v373, 0.0
        %957 = vadd.xlane.f32.xlu0 %v956
        %v958 = vpop.xlane.xlu0 %957
        %v959 = vsel %vm850, %v374, 0.0
        %960 = vadd.xlane.f32.xlu0 %v959
        %v961 = vpop.xlane.xlu0 %960
        %v962 = vsel %vm850, %v375, 0.0
        %963 = vadd.xlane.f32.xlu0 %v962
        %v964 = vpop.xlane.xlu0 %963
        %v965 = vsel %vm850, %v376, 0.0
        %966 = vadd.xlane.f32.xlu0 %v965
        %v967 = vpop.xlane.xlu0 %966
        %v968 = vsel %vm850, %v377, 0.0
        %969 = vadd.xlane.f32.xlu0 %v968
        %v970 = vpop.xlane.xlu0 %969
        %v971 = vsel %vm850, %v378, 0.0
        %972 = vadd.xlane.f32.xlu0 %v971
        %v973 = vpop.xlane.xlu0 %972
        %v974 = vsel %vm850, %v379, 0.0
        %975 = vadd.xlane.f32.xlu0 %v974
        %v976 = vpop.xlane.xlu0 %975
        %v977 = vsel %vm850, %v380, 0.0
        %978 = vadd.xlane.f32.xlu0 %v977
        %v979 = vpop.xlane.xlu0 %978
        %v980 = vsel %vm850, %v381, 0.0
        %981 = vadd.xlane.f32.xlu0 %v980
        %v982 = vpop.xlane.xlu0 %981
        %v983 = vsel %vm850, %v382, 0.0
        %984 = vadd.xlane.f32.xlu0 %v983
        %v985 = vpop.xlane.xlu0 %984
        %v986 = vsel %vm850, %v383, 0.0
        %987 = vadd.xlane.f32.xlu0 %v986
        %v988 = vpop.xlane.xlu0 %987
        %v989 = vsel %vm850, %v384, 0.0
        %990 = vadd.xlane.f32.xlu0 %v989
        %v991 = vpop.xlane.xlu0 %990
        %v992 = vsel %vm850, %v385, 0.0
        %993 = vadd.xlane.f32.xlu0 %v992
        %v994 = vpop.xlane.xlu0 %993
        %v995 = vsel %vm850, %v386, 0.0
        %996 = vadd.xlane.f32.xlu0 %v995
        %v997 = vpop.xlane.xlu0 %996
        %v998 = vsel %vm850, %v387, 0.0
        %999 = vadd.xlane.f32.xlu0 %v998
        %v1000 = vpop.xlane.xlu0 %999
        %v1001 = vsel %vm850, %v388, 0.0
        %1002 = vadd.xlane.f32.xlu0 %v1001
        %v1003 = vpop.xlane.xlu0 %1002
        %v1004 = vsel %vm850, %v389, 0.0
        %1005 = vadd.xlane.f32.xlu0 %v1004
        %v1006 = vpop.xlane.xlu0 %1005
        %v1007 = vsel %vm850, %v390, 0.0
        %1008 = vadd.xlane.f32.xlu0 %v1007
        %v1009 = vpop.xlane.xlu0 %1008
        %v1010 = vsel %vm850, %v391, 0.0
        %1011 = vadd.xlane.f32.xlu0 %v1010
        %v1012 = vpop.xlane.xlu0 %1011
        %v1013 = vsel %vm850, %v392, 0.0
        %1014 = vadd.xlane.f32.xlu0 %v1013
        %v1015 = vpop.xlane.xlu0 %1014
        %v1016 = vsel %vm850, %v393, 0.0
        %1017 = vadd.xlane.f32.xlu0 %v1016
        %v1018 = vpop.xlane.xlu0 %1017
        %v1019 = vsel %vm850, %v394, 0.0
        %1020 = vadd.xlane.f32.xlu0 %v1019
        %v1021 = vpop.xlane.xlu0 %1020
        %v1022 = vsel %vm850, %v395, 0.0
        %1023 = vadd.xlane.f32.xlu0 %v1022
        %v1024 = vpop.xlane.xlu0 %1023
        %v1025 = vsel %vm850, %v396, 0.0
        %1026 = vadd.xlane.f32.xlu0 %v1025
        %v1027 = vpop.xlane.xlu0 %1026
        %v1028 = vsel %vm850, %v397, 0.0
        %1029 = vadd.xlane.f32.xlu0 %v1028
        %v1030 = vpop.xlane.xlu0 %1029
        %v1031 = vsel %vm850, %v398, 0.0
        %1032 = vadd.xlane.f32.xlu0 %v1031
        %v1033 = vpop.xlane.xlu0 %1032
        %v1034 = vsel %vm850, %v399, 0.0
        %1035 = vadd.xlane.f32.xlu0 %v1034
        %v1036 = vpop.xlane.xlu0 %1035
        %v1037 = vsel %vm850, %v400, 0.0
        %1038 = vadd.xlane.f32.xlu0 %v1037
        %v1039 = vpop.xlane.xlu0 %1038
        %v1040 = vsel %vm850, %v401, 0.0
        %1041 = vadd.xlane.f32.xlu0 %v1040
        %v1042 = vpop.xlane.xlu0 %1041
        %v1043 = vsel %vm850, %v402, 0.0
        %1044 = vadd.xlane.f32.xlu0 %v1043
        %v1045 = vpop.xlane.xlu0 %1044
        %v1046 = vsel %vm850, %v403, 0.0
        %1047 = vadd.xlane.f32.xlu0 %v1046
        %v1048 = vpop.xlane.xlu0 %1047
        %v1049 = vsel %vm850, %v404, 0.0
        %1050 = vadd.xlane.f32.xlu0 %v1049
        %v1051 = vpop.xlane.xlu0 %1050
        %v1052 = vsel %vm850, %v405, 0.0
        %1053 = vadd.xlane.f32.xlu0 %v1052
        %v1054 = vpop.xlane.xlu0 %1053
        %v1055 = vsel %vm850, %v406, 0.0
        %1056 = vadd.xlane.f32.xlu0 %v1055
        %v1057 = vpop.xlane.xlu0 %1056
        %v1058 = vsel %vm850, %v407, 0.0
        %1059 = vadd.xlane.f32.xlu0 %v1058
        %v1060 = vpop.xlane.xlu0 %1059
        %v1061 = vsel %vm850, %v408, 0.0
        %1062 = vadd.xlane.f32.xlu0 %v1061
        %v1063 = vpop.xlane.xlu0 %1062
        %v1064 = vsel %vm850, %v409, 0.0
        %1065 = vadd.xlane.f32.xlu0 %v1064
        %v1066 = vpop.xlane.xlu0 %1065
        %v1067 = vsel %vm850, %v410, 0.0
        %1068 = vadd.xlane.f32.xlu0 %v1067
        %v1069 = vpop.xlane.xlu0 %1068
        %v1070 = vsel %vm850, %v411, 0.0
        %1071 = vadd.xlane.f32.xlu0 %v1070
        %v1072 = vpop.xlane.xlu0 %1071
        %v1073 = vsel %vm850, %v412, 0.0
        %1074 = vadd.xlane.f32.xlu0 %v1073
        %v1075 = vpop.xlane.xlu0 %1074
        %v1076 = vsel %vm850, %v413, 0.0
        %1077 = vadd.xlane.f32.xlu0 %v1076
        %v1078 = vpop.xlane.xlu0 %1077
        %v1079 = vsel %vm850, %v414, 0.0
        %1080 = vadd.xlane.f32.xlu0 %v1079
        %v1081 = vpop.xlane.xlu0 %1080
        %v1082 = vsel %vm850, %v415, 0.0
        %1083 = vadd.xlane.f32.xlu0 %v1082
        %v1084 = vpop.xlane.xlu0 %1083
        %v1085 = vsel %vm850, %v416, 0.0
        %1086 = vadd.xlane.f32.xlu0 %v1085
        %v1087 = vpop.xlane.xlu0 %1086
        %v1088 = vsel %vm850, %v417, 0.0
        %1089 = vadd.xlane.f32.xlu0 %v1088
        %v1090 = vpop.xlane.xlu0 %1089
        %v1091 = vsel %vm850, %v418, 0.0
        %1092 = vadd.xlane.f32.xlu0 %v1091
        %v1093 = vpop.xlane.xlu0 %1092
        %v1094 = vsel %vm850, %v419, 0.0
        %1095 = vadd.xlane.f32.xlu0 %v1094
        %v1096 = vpop.xlane.xlu0 %1095
        %v1097 = vsel %vm850, %v420, 0.0
        %1098 = vadd.xlane.f32.xlu0 %v1097
        %v1099 = vpop.xlane.xlu0 %1098
        %v1100 = vsel %vm850, %v421, 0.0
        %1101 = vadd.xlane.f32.xlu0 %v1100
        %v1102 = vpop.xlane.xlu0 %1101
        %v1103 = vsel %vm850, %v422, 0.0
        %1104 = vadd.xlane.f32.xlu0 %v1103
        %v1105 = vpop.xlane.xlu0 %1104
        %v1106 = vsel %vm850, %v423, 0.0
        %1107 = vadd.xlane.f32.xlu0 %v1106
        %v1108 = vpop.xlane.xlu0 %1107
        %v1109 = vsel %vm850, %v424, 0.0
        %1110 = vadd.xlane.f32.xlu0 %v1109
        %v1111 = vpop.xlane.xlu0 %1110
        %v1112 = vsel %vm850, %v425, 0.0
        %1113 = vadd.xlane.f32.xlu0 %v1112
        %v1114 = vpop.xlane.xlu0 %1113
        %v1115 = vsel %vm850, %v426, 0.0
        %1116 = vadd.xlane.f32.xlu0 %v1115
        %v1117 = vpop.xlane.xlu0 %1116
        %v1118 = vsel %vm850, %v427, 0.0
        %1119 = vadd.xlane.f32.xlu0 %v1118
        %v1120 = vpop.xlane.xlu0 %1119
        %v1121 = vsel %vm850, %v428, 0.0
        %1122 = vadd.xlane.f32.xlu0 %v1121
        %v1123 = vpop.xlane.xlu0 %1122
        %v1124 = vsel %vm850, %v429, 0.0
        %1125 = vadd.xlane.f32.xlu0 %v1124
        %v1126 = vpop.xlane.xlu0 %1125
        %v1127 = vsel %vm850, %v430, 0.0
        %1128 = vadd.xlane.f32.xlu0 %v1127
        %v1129 = vpop.xlane.xlu0 %1128
        %v1130 = vsel %vm850, %v431, 0.0
        %1131 = vadd.xlane.f32.xlu0 %v1130
        %v1132 = vpop.xlane.xlu0 %1131
        %v1133 = vsel %vm850, %v432, 0.0
        %1134 = vadd.xlane.f32.xlu0 %v1133
        %v1135 = vpop.xlane.xlu0 %1134
        %v1136 = vsel %vm850, %v433, 0.0
        %1137 = vadd.xlane.f32.xlu0 %v1136
        %v1138 = vpop.xlane.xlu0 %1137
        %v1139 = vsel %vm850, %v434, 0.0
        %1140 = vadd.xlane.f32.xlu0 %v1139
        %v1141 = vpop.xlane.xlu0 %1140
        %v1142 = vsel %vm850, %v435, 0.0
        %1143 = vadd.xlane.f32.xlu0 %v1142
        %v1144 = vpop.xlane.xlu0 %1143
        %v1145 = vsel %vm850, %v436, 0.0
        %1146 = vadd.xlane.f32.xlu0 %v1145
        %v1147 = vpop.xlane.xlu0 %1146
        %v1148 = vsel %vm850, %v437, 0.0
        %1149 = vadd.xlane.f32.xlu0 %v1148
        %v1150 = vpop.xlane.xlu0 %1149
        %v1151 = vsel %vm850, %v438, 0.0
        %1152 = vadd.xlane.f32.xlu0 %v1151
        %v1153 = vpop.xlane.xlu0 %1152
        %v1154 = vsel %vm850, %v439, 0.0
        %1155 = vadd.xlane.f32.xlu0 %v1154
        %v1156 = vpop.xlane.xlu0 %1155
        %v1157 = vsel %vm850, %v440, 0.0
        %1158 = vadd.xlane.f32.xlu0 %v1157
        %v1159 = vpop.xlane.xlu0 %1158
        %v1160 = vsel %vm850, %v441, 0.0
        %1161 = vadd.xlane.f32.xlu0 %v1160
        %v1162 = vpop.xlane.xlu0 %1161
        %v1163 = vsel %vm850, %v442, 0.0
        %1164 = vadd.xlane.f32.xlu0 %v1163
        %v1165 = vpop.xlane.xlu0 %1164
        %v1166 = vsel %vm850, %v443, 0.0
        %1167 = vadd.xlane.f32.xlu0 %v1166
        %v1168 = vpop.xlane.xlu0 %1167
        %v1169 = vsel %vm850, %v444, 0.0
        %1170 = vadd.xlane.f32.xlu0 %v1169
        %v1171 = vpop.xlane.xlu0 %1170
        %v1172 = vsel %vm850, %v445, 0.0
        %1173 = vadd.xlane.f32.xlu0 %v1172
        %v1174 = vpop.xlane.xlu0 %1173
        %v1175 = vsel %vm850, %v446, 0.0
        %1176 = vadd.xlane.f32.xlu0 %v1175
        %v1177 = vpop.xlane.xlu0 %1176
        %v1178 = vsel %vm850, %v447, 0.0
        %1179 = vadd.xlane.f32.xlu0 %v1178
        %v1180 = vpop.xlane.xlu0 %1179
        %v1181 = vsel %vm850, %v448, 0.0
        %1182 = vadd.xlane.f32.xlu0 %v1181
        %v1183 = vpop.xlane.xlu0 %1182
        %v1184 = vsel %vm850, %v449, 0.0
        %1185 = vadd.xlane.f32.xlu0 %v1184
        %v1186 = vpop.xlane.xlu0 %1185
        %v1187 = vsel %vm850, %v450, 0.0
        %1188 = vadd.xlane.f32.xlu0 %v1187
        %v1189 = vpop.xlane.xlu0 %1188
        %v1190 = vsel %vm850, %v451, 0.0
        %1191 = vadd.xlane.f32.xlu0 %v1190
        %v1192 = vpop.xlane.xlu0 %1191
        %v1193 = vsel %vm850, %v452, 0.0
        %1194 = vadd.xlane.f32.xlu0 %v1193
        %v1195 = vpop.xlane.xlu0 %1194
        %v1196 = vsel %vm850, %v453, 0.0
        %1197 = vadd.xlane.f32.xlu0 %v1196
        %v1198 = vpop.xlane.xlu0 %1197
        %v1199 = vsel %vm850, %v454, 0.0
        %1200 = vadd.xlane.f32.xlu0 %v1199
        %v1201 = vpop.xlane.xlu0 %1200
        %v1202 = vsel %vm850, %v455, 0.0
        %1203 = vadd.xlane.f32.xlu0 %v1202
        %v1204 = vpop.xlane.xlu0 %1203
        %v1205 = vsel %vm850, %v456, 0.0
        %1206 = vadd.xlane.f32.xlu0 %v1205
        %v1207 = vpop.xlane.xlu0 %1206
        %v1208 = vsel %vm850, %v457, 0.0
        %1209 = vadd.xlane.f32.xlu0 %v1208
        %v1210 = vpop.xlane.xlu0 %1209
        %v1211 = vsel %vm850, %v458, 0.0
        %1212 = vadd.xlane.f32.xlu0 %v1211
        %v1213 = vpop.xlane.xlu0 %1212
        %v1214 = vsel %vm850, %v459, 0.0
        %1215 = vadd.xlane.f32.xlu0 %v1214
        %v1216 = vpop.xlane.xlu0 %1215
        %v1217 = vsel %vm850, %v460, 0.0
        %1218 = vadd.xlane.f32.xlu0 %v1217
        %v1219 = vpop.xlane.xlu0 %1218
        %v1220 = vsel %vm850, %v461, 0.0
        %1221 = vadd.xlane.f32.xlu0 %v1220
        %v1222 = vpop.xlane.xlu0 %1221
        %v1223 = vsel %vm850, %v462, 0.0
        %1224 = vadd.xlane.f32.xlu0 %v1223
        %v1225 = vpop.xlane.xlu0 %1224
        %v1226 = vsel %vm850, %v463, 0.0
        %1227 = vadd.xlane.f32.xlu0 %v1226
        %v1228 = vpop.xlane.xlu0 %1227
        %v1229 = vsel %vm850, %v464, 0.0
        %1230 = vadd.xlane.f32.xlu0 %v1229
        %v1231 = vpop.xlane.xlu0 %1230
        %v1232 = vsel %vm850, %v465, 0.0
        %1233 = vadd.xlane.f32.xlu0 %v1232
        %v1234 = vpop.xlane.xlu0 %1233
        %v1235 = vsel %vm850, %v466, 0.0
        %1236 = vadd.xlane.f32.xlu0 %v1235
        %v1237 = vpop.xlane.xlu0 %1236
        %v1238 = vsel %vm850, %v467, 0.0
        %1239 = vadd.xlane.f32.xlu0 %v1238
        %v1240 = vpop.xlane.xlu0 %1239
        %v1241 = vsel %vm850, %v468, 0.0
        %1242 = vadd.xlane.f32.xlu0 %v1241
        %v1243 = vpop.xlane.xlu0 %1242
        %v1244 = vsel %vm850, %v469, 0.0
        %1245 = vadd.xlane.f32.xlu0 %v1244
        %v1246 = vpop.xlane.xlu0 %1245
        %v1247 = vsel %vm850, %v470, 0.0
        %1248 = vadd.xlane.f32.xlu0 %v1247
        %v1249 = vpop.xlane.xlu0 %1248
        %v1250 = vsel %vm850, %v471, 0.0
        %1251 = vadd.xlane.f32.xlu0 %v1250
        %v1252 = vpop.xlane.xlu0 %1251
        %v1253 = vsel %vm850, %v472, 0.0
        %1254 = vadd.xlane.f32.xlu0 %v1253
        %v1255 = vpop.xlane.xlu0 %1254
        %v1256 = vsel %vm850, %v473, 0.0
        %1257 = vadd.xlane.f32.xlu0 %v1256
        %v1258 = vpop.xlane.xlu0 %1257
        %v1259 = vsel %vm850, %v474, 0.0
        %1260 = vadd.xlane.f32.xlu0 %v1259
        %v1261 = vpop.xlane.xlu0 %1260
        %v1262 = vsel %vm850, %v475, 0.0
        %1263 = vadd.xlane.f32.xlu0 %v1262
        %v1264 = vpop.xlane.xlu0 %1263
        %v1265 = vsel %vm850, %v476, 0.0
        %1266 = vadd.xlane.f32.xlu0 %v1265
        %v1267 = vpop.xlane.xlu0 %1266
        %v1268 = vsel %vm850, %v477, 0.0
        %1269 = vadd.xlane.f32.xlu0 %v1268
        %v1270 = vpop.xlane.xlu0 %1269
        %v1271 = vsel %vm850, %v478, 0.0
        %1272 = vadd.xlane.f32.xlu0 %v1271
        %v1273 = vpop.xlane.xlu0 %1272
        %v1274 = vsel %vm850, %v479, 0.0
        %1275 = vadd.xlane.f32.xlu0 %v1274
        %v1276 = vpop.xlane.xlu0 %1275
        %v1277 = vsel %vm850, %v480, 0.0
        %1278 = vadd.xlane.f32.xlu0 %v1277
        %v1279 = vpop.xlane.xlu0 %1278
        %v1280 = vsel %vm850, %v481, 0.0
        %1281 = vadd.xlane.f32.xlu0 %v1280
        %v1282 = vpop.xlane.xlu0 %1281
        %v1283 = vsel %vm850, %v482, 0.0
        %1284 = vadd.xlane.f32.xlu0 %v1283
        %v1285 = vpop.xlane.xlu0 %1284
        %v1286 = vsel %vm850, %v483, 0.0
        %1287 = vadd.xlane.f32.xlu0 %v1286
        %v1288 = vpop.xlane.xlu0 %1287
        %v1289 = vsel %vm850, %v484, 0.0
        %1290 = vadd.xlane.f32.xlu0 %v1289
        %v1291 = vpop.xlane.xlu0 %1290
        %v1292 = vsel %vm850, %v485, 0.0
        %1293 = vadd.xlane.f32.xlu0 %v1292
        %v1294 = vpop.xlane.xlu0 %1293
        %v1295 = vsel %vm850, %v486, 0.0
        %1296 = vadd.xlane.f32.xlu0 %v1295
        %v1297 = vpop.xlane.xlu0 %1296
        %v1298 = vsel %vm850, %v487, 0.0
        %1299 = vadd.xlane.f32.xlu0 %v1298
        %v1300 = vpop.xlane.xlu0 %1299
        %v1301 = vsel %vm850, %v488, 0.0
        %1302 = vadd.xlane.f32.xlu0 %v1301
        %v1303 = vpop.xlane.xlu0 %1302
        %v1304 = vsel %vm850, %v489, 0.0
        %1305 = vadd.xlane.f32.xlu0 %v1304
        %v1306 = vpop.xlane.xlu0 %1305
        %v1307 = vsel %vm850, %v490, 0.0
        %1308 = vadd.xlane.f32.xlu0 %v1307
        %v1309 = vpop.xlane.xlu0 %1308
        %v1310 = vsel %vm850, %v491, 0.0
        %1311 = vadd.xlane.f32.xlu0 %v1310
        %v1312 = vpop.xlane.xlu0 %1311
        %v1313 = vsel %vm850, %v492, 0.0
        %1314 = vadd.xlane.f32.xlu0 %v1313
        %v1315 = vpop.xlane.xlu0 %1314
        %v1316 = vsel %vm850, %v493, 0.0
        %1317 = vadd.xlane.f32.xlu0 %v1316
        %v1318 = vpop.xlane.xlu0 %1317
        %v1319 = vsel %vm850, %v494, 0.0
        %1320 = vadd.xlane.f32.xlu0 %v1319
        %v1321 = vpop.xlane.xlu0 %1320
        %v1322 = vsel %vm850, %v495, 0.0
        %1323 = vadd.xlane.f32.xlu0 %v1322
        %v1324 = vpop.xlane.xlu0 %1323
        %v1325 = vsel %vm850, %v496, 0.0
        %1326 = vadd.xlane.f32.xlu0 %v1325
        %v1327 = vpop.xlane.xlu0 %1326
        %v1328 = vsel %vm850, %v497, 0.0
        %1329 = vadd.xlane.f32.xlu0 %v1328
        %v1330 = vpop.xlane.xlu0 %1329
        %v1331 = vsel %vm850, %v498, 0.0
        %1332 = vadd.xlane.f32.xlu0 %v1331
        %v1333 = vpop.xlane.xlu0 %1332
        %v1334 = vsel %vm850, %v499, 0.0
        %1335 = vadd.xlane.f32.xlu0 %v1334
        %v1336 = vpop.xlane.xlu0 %1335
        %v1337 = vsel %vm850, %v500, 0.0
        %1338 = vadd.xlane.f32.xlu0 %v1337
        %v1339 = vpop.xlane.xlu0 %1338
        %v1340 = vsel %vm850, %v501, 0.0
        %1341 = vadd.xlane.f32.xlu0 %v1340
        %v1342 = vpop.xlane.xlu0 %1341
        %v1343 = vsel %vm850, %v502, 0.0
        %1344 = vadd.xlane.f32.xlu0 %v1343
        %v1345 = vpop.xlane.xlu0 %1344
        %v1346 = vsel %vm850, %v503, 0.0
        %1347 = vadd.xlane.f32.xlu0 %v1346
        %v1348 = vpop.xlane.xlu0 %1347
        %v1349 = vsel %vm850, %v504, 0.0
        %1350 = vadd.xlane.f32.xlu0 %v1349
        %v1351 = vpop.xlane.xlu0 %1350
        %v1352 = vsel %vm850, %v505, 0.0
        %1353 = vadd.xlane.f32.xlu0 %v1352
        %v1354 = vpop.xlane.xlu0 %1353
        %v1355 = vsel %vm850, %v506, 0.0
        %1356 = vadd.xlane.f32.xlu0 %v1355
        %v1357 = vpop.xlane.xlu0 %1356
        %v1358 = vsel %vm850, %v507, 0.0
        %1359 = vadd.xlane.f32.xlu0 %v1358
        %v1360 = vpop.xlane.xlu0 %1359
        %v1361 = vsel %vm850, %v508, 0.0
        %1362 = vadd.xlane.f32.xlu0 %v1361
        %v1363 = vpop.xlane.xlu0 %1362
        %v1364 = vsel %vm850, %v509, 0.0
        %1365 = vadd.xlane.f32.xlu0 %v1364
        %v1366 = vpop.xlane.xlu0 %1365
        %v1367 = vsel %vm850, %v510, 0.0
        %1368 = vadd.xlane.f32.xlu0 %v1367
        %v1369 = vpop.xlane.xlu0 %1368
        %v1370 = vsel %vm850, %v511, 0.0
        %1371 = vadd.xlane.f32.xlu0 %v1370
        %v1372 = vpop.xlane.xlu0 %1371
        %v1373 = vsel %vm850, %v512, 0.0
        %1374 = vadd.xlane.f32.xlu0 %v1373
        %v1375 = vpop.xlane.xlu0 %1374
        %v1376 = vsel %vm850, %v513, 0.0
        %1377 = vadd.xlane.f32.xlu0 %v1376
        %v1378 = vpop.xlane.xlu0 %1377
        %v1379 = vsel %vm850, %v514, 0.0
        %1380 = vadd.xlane.f32.xlu0 %v1379
        %v1381 = vpop.xlane.xlu0 %1380
        %v1382 = vsel %vm850, %v515, 0.0
        %1383 = vadd.xlane.f32.xlu0 %v1382
        %v1384 = vpop.xlane.xlu0 %1383
        %v1385 = vsel %vm850, %v516, 0.0
        %1386 = vadd.xlane.f32.xlu0 %v1385
        %v1387 = vpop.xlane.xlu0 %1386
        %v1388 = vsel %vm850, %v517, 0.0
        %1389 = vadd.xlane.f32.xlu0 %v1388
        %v1390 = vpop.xlane.xlu0 %1389
        %v1391 = vsel %vm850, %v518, 0.0
        %1392 = vadd.xlane.f32.xlu0 %v1391
        %v1393 = vpop.xlane.xlu0 %1392
        %v1394 = vsel %vm850, %v519, 0.0
        %1395 = vadd.xlane.f32.xlu0 %v1394
        %v1396 = vpop.xlane.xlu0 %1395
        %v1397 = vsel %vm850, %v520, 0.0
        %1398 = vadd.xlane.f32.xlu0 %v1397
        %v1399 = vpop.xlane.xlu0 %1398
        %v1400 = vsel %vm850, %v521, 0.0
        %1401 = vadd.xlane.f32.xlu0 %v1400
        %v1402 = vpop.xlane.xlu0 %1401
        %v1403 = vsel %vm850, %v522, 0.0
        %1404 = vadd.xlane.f32.xlu0 %v1403
        %v1405 = vpop.xlane.xlu0 %1404
        %v1406 = vsel %vm850, %v523, 0.0
        %1407 = vadd.xlane.f32.xlu0 %v1406
        %v1408 = vpop.xlane.xlu0 %1407
        %v1409 = vsel %vm850, %v524, 0.0
        %1410 = vadd.xlane.f32.xlu0 %v1409
        %v1411 = vpop.xlane.xlu0 %1410
        %v1412 = vsel %vm850, %v525, 0.0
        %1413 = vadd.xlane.f32.xlu0 %v1412
        %v1414 = vpop.xlane.xlu0 %1413
        %v1415 = vsel %vm850, %v526, 0.0
        %1416 = vadd.xlane.f32.xlu0 %v1415
        %v1417 = vpop.xlane.xlu0 %1416
        %v1418 = vsel %vm850, %v527, 0.0
        %1419 = vadd.xlane.f32.xlu0 %v1418
        %v1420 = vpop.xlane.xlu0 %1419
        %v1421 = vsel %vm850, %v528, 0.0
        %1422 = vadd.xlane.f32.xlu0 %v1421
        %v1423 = vpop.xlane.xlu0 %1422
        %v1424 = vsel %vm850, %v529, 0.0
        %1425 = vadd.xlane.f32.xlu0 %v1424
        %v1426 = vpop.xlane.xlu0 %1425
        %v1427 = vsel %vm850, %v530, 0.0
        %1428 = vadd.xlane.f32.xlu0 %v1427
        %v1429 = vpop.xlane.xlu0 %1428
        %v1430 = vsel %vm850, %v531, 0.0
        %1431 = vadd.xlane.f32.xlu0 %v1430
        %v1432 = vpop.xlane.xlu0 %1431
        %v1433 = vsel %vm850, %v532, 0.0
        %1434 = vadd.xlane.f32.xlu0 %v1433
        %v1435 = vpop.xlane.xlu0 %1434
        %v1436 = vsel %vm850, %v533, 0.0
        %1437 = vadd.xlane.f32.xlu0 %v1436
        %v1438 = vpop.xlane.xlu0 %1437
        %v1439 = vsel %vm850, %v534, 0.0
        %1440 = vadd.xlane.f32.xlu0 %v1439
        %v1441 = vpop.xlane.xlu0 %1440
        %v1442 = vsel %vm850, %v535, 0.0
        %1443 = vadd.xlane.f32.xlu0 %v1442
        %v1444 = vpop.xlane.xlu0 %1443
        %v1445 = vsel %vm850, %v536, 0.0
        %1446 = vadd.xlane.f32.xlu0 %v1445
        %v1447 = vpop.xlane.xlu0 %1446
        %v1448 = vsel %vm850, %v537, 0.0
        %1449 = vadd.xlane.f32.xlu0 %v1448
        %v1450 = vpop.xlane.xlu0 %1449
        %v1451 = vsel %vm850, %v538, 0.0
        %1452 = vadd.xlane.f32.xlu0 %v1451
        %v1453 = vpop.xlane.xlu0 %1452
        %v1454 = vsel %vm850, %v539, 0.0
        %1455 = vadd.xlane.f32.xlu0 %v1454
        %v1456 = vpop.xlane.xlu0 %1455
        %v1457 = vsel %vm850, %v540, 0.0
        %1458 = vadd.xlane.f32.xlu0 %v1457
        %v1459 = vpop.xlane.xlu0 %1458
        %v1460 = vsel %vm850, %v541, 0.0
        %1461 = vadd.xlane.f32.xlu0 %v1460
        %v1462 = vpop.xlane.xlu0 %1461
        %v1463 = vsel %vm850, %v542, 0.0
        %1464 = vadd.xlane.f32.xlu0 %v1463
        %v1465 = vpop.xlane.xlu0 %1464
        %v1466 = vsel %vm850, %v543, 0.0
        %1467 = vadd.xlane.f32.xlu0 %v1466
        %v1468 = vpop.xlane.xlu0 %1467
        %v1469 = vsel %vm850, %v544, 0.0
        %1470 = vadd.xlane.f32.xlu0 %v1469
        %v1471 = vpop.xlane.xlu0 %1470
        %v1472 = vsel %vm850, %v545, 0.0
        %1473 = vadd.xlane.f32.xlu0 %v1472
        %v1474 = vpop.xlane.xlu0 %1473
        %v1475 = vsel %vm850, %v546, 0.0
        %1476 = vadd.xlane.f32.xlu0 %v1475
        %v1477 = vpop.xlane.xlu0 %1476
        %v1478 = vsel %vm850, %v547, 0.0
        %1479 = vadd.xlane.f32.xlu0 %v1478
        %v1480 = vpop.xlane.xlu0 %1479
        %v1481 = vsel %vm850, %v548, 0.0
        %1482 = vadd.xlane.f32.xlu0 %v1481
        %v1483 = vpop.xlane.xlu0 %1482
        %v1484 = vsel %vm850, %v549, 0.0
        %1485 = vadd.xlane.f32.xlu0 %v1484
        %v1486 = vpop.xlane.xlu0 %1485
        %v1487 = vsel %vm850, %v550, 0.0
        %1488 = vadd.xlane.f32.xlu0 %v1487
        %v1489 = vpop.xlane.xlu0 %1488
        %v1490 = vsel %vm850, %v551, 0.0
        %1491 = vadd.xlane.f32.xlu0 %v1490
        %v1492 = vpop.xlane.xlu0 %1491
        %v1493 = vsel %vm850, %v552, 0.0
        %1494 = vadd.xlane.f32.xlu0 %v1493
        %v1495 = vpop.xlane.xlu0 %1494
        %v1496 = vsel %vm850, %v553, 0.0
        %1497 = vadd.xlane.f32.xlu0 %v1496
        %v1498 = vpop.xlane.xlu0 %1497
        %v1499 = vsel %vm850, %v554, 0.0
        %1500 = vadd.xlane.f32.xlu0 %v1499
        %v1501 = vpop.xlane.xlu0 %1500
        %v1502 = vsel %vm850, %v555, 0.0
        %1503 = vadd.xlane.f32.xlu0 %v1502
        %v1504 = vpop.xlane.xlu0 %1503
        %v1505 = vsel %vm850, %v556, 0.0
        %1506 = vadd.xlane.f32.xlu0 %v1505
        %v1507 = vpop.xlane.xlu0 %1506
        %v1508 = vsel %vm850, %v557, 0.0
        %1509 = vadd.xlane.f32.xlu0 %v1508
        %v1510 = vpop.xlane.xlu0 %1509
        %v1511 = vsel %vm850, %v558, 0.0
        %1512 = vadd.xlane.f32.xlu0 %v1511
        %v1513 = vpop.xlane.xlu0 %1512
        %v1514 = vsel %vm850, %v559, 0.0
        %1515 = vadd.xlane.f32.xlu0 %v1514
        %v1516 = vpop.xlane.xlu0 %1515
        %v1517 = vsel %vm850, %v560, 0.0
        %1518 = vadd.xlane.f32.xlu0 %v1517
        %v1519 = vpop.xlane.xlu0 %1518
        %v1520 = vsel %vm850, %v561, 0.0
        %1521 = vadd.xlane.f32.xlu0 %v1520
        %v1522 = vpop.xlane.xlu0 %1521
        %v1523 = vsel %vm850, %v562, 0.0
        %1524 = vadd.xlane.f32.xlu0 %v1523
        %v1525 = vpop.xlane.xlu0 %1524
        %v1526 = vsel %vm850, %v563, 0.0
        %1527 = vadd.xlane.f32.xlu0 %v1526
        %v1528 = vpop.xlane.xlu0 %1527
        %v1529 = vsel %vm850, %v564, 0.0
        %1530 = vadd.xlane.f32.xlu0 %v1529
        %v1531 = vpop.xlane.xlu0 %1530
        %v1532 = vsel %vm850, %v565, 0.0
        %1533 = vadd.xlane.f32.xlu0 %v1532
        %v1534 = vpop.xlane.xlu0 %1533
        %v1535 = vsel %vm850, %v566, 0.0
        %1536 = vadd.xlane.f32.xlu0 %v1535
        %v1537 = vpop.xlane.xlu0 %1536
        %v1538 = vsel %vm850, %v567, 0.0
        %1539 = vadd.xlane.f32.xlu0 %v1538
        %v1540 = vpop.xlane.xlu0 %1539
        %v1541 = vsel %vm850, %v568, 0.0
        %1542 = vadd.xlane.f32.xlu0 %v1541
        %v1543 = vpop.xlane.xlu0 %1542
        %v1544 = vsel %vm850, %v569, 0.0
        %1545 = vadd.xlane.f32.xlu0 %v1544
        %v1546 = vpop.xlane.xlu0 %1545
        %v1547 = vsel %vm850, %v570, 0.0
        %1548 = vadd.xlane.f32.xlu0 %v1547
        %v1549 = vpop.xlane.xlu0 %1548
        %v1550 = vsel %vm850, %v571, 0.0
        %1551 = vadd.xlane.f32.xlu0 %v1550
        %v1552 = vpop.xlane.xlu0 %1551
        %v1553 = vsel %vm850, %v572, 0.0
        %1554 = vadd.xlane.f32.xlu0 %v1553
        %v1555 = vpop.xlane.xlu0 %1554
        %v1556 = vsel %vm850, %v573, 0.0
        %1557 = vadd.xlane.f32.xlu0 %v1556
        %v1558 = vpop.xlane.xlu0 %1557
        %v1559 = vsel %vm850, %v574, 0.0
        %1560 = vadd.xlane.f32.xlu0 %v1559
        %v1561 = vpop.xlane.xlu0 %1560
        %v1562 = vsel %vm850, %v575, 0.0
        %1563 = vadd.xlane.f32.xlu0 %v1562
        %v1564 = vpop.xlane.xlu0 %1563
        %v1565 = vsel %vm850, %v576, 0.0
        %1566 = vadd.xlane.f32.xlu0 %v1565
        %v1567 = vpop.xlane.xlu0 %1566
        %v1568 = vsel %vm850, %v577, 0.0
        %1569 = vadd.xlane.f32.xlu0 %v1568
        %v1570 = vpop.xlane.xlu0 %1569
        %v1571 = vsel %vm850, %v578, 0.0
        %1572 = vadd.xlane.f32.xlu0 %v1571
        %v1573 = vpop.xlane.xlu0 %1572
        %v1574 = vsel %vm850, %v579, 0.0
        %1575 = vadd.xlane.f32.xlu0 %v1574
        %v1576 = vpop.xlane.xlu0 %1575
        %v1577 = vsel %vm850, %v580, 0.0
        %1578 = vadd.xlane.f32.xlu0 %v1577
        %v1579 = vpop.xlane.xlu0 %1578
        %v1580 = vsel %vm850, %v581, 0.0
        %1581 = vadd.xlane.f32.xlu0 %v1580
        %v1582 = vpop.xlane.xlu0 %1581
        %v1583 = vsel %vm850, %v582, 0.0
        %1584 = vadd.xlane.f32.xlu0 %v1583
        %v1585 = vpop.xlane.xlu0 %1584
        %v1586 = vsel %vm850, %v583, 0.0
        %1587 = vadd.xlane.f32.xlu0 %v1586
        %v1588 = vpop.xlane.xlu0 %1587
        %v1589 = vsel %vm850, %v584, 0.0
        %1590 = vadd.xlane.f32.xlu0 %v1589
        %v1591 = vpop.xlane.xlu0 %1590
        %v1592 = vsel %vm850, %v585, 0.0
        %1593 = vadd.xlane.f32.xlu0 %v1592
        %v1594 = vpop.xlane.xlu0 %1593
        %v1595 = vsel %vm850, %v586, 0.0
        %1596 = vadd.xlane.f32.xlu0 %v1595
        %v1597 = vpop.xlane.xlu0 %1596
        %v1598 = vsel %vm850, %v587, 0.0
        %1599 = vadd.xlane.f32.xlu0 %v1598
        %v1600 = vpop.xlane.xlu0 %1599
        %v1601 = vsel %vm850, %v588, 0.0
        %1602 = vadd.xlane.f32.xlu0 %v1601
        %v1603 = vpop.xlane.xlu0 %1602
        %v1604 = vsel %vm850, %v589, 0.0
        %1605 = vadd.xlane.f32.xlu0 %v1604
        %v1606 = vpop.xlane.xlu0 %1605
        %v1607 = vsel %vm850, %v590, 0.0
        %1608 = vadd.xlane.f32.xlu0 %v1607
        %v1609 = vpop.xlane.xlu0 %1608
        %v1610 = vsel %vm850, %v591, 0.0
        %1611 = vadd.xlane.f32.xlu0 %v1610
        %v1612 = vpop.xlane.xlu0 %1611
        %v1613 = vsel %vm850, %v592, 0.0
        %1614 = vadd.xlane.f32.xlu0 %v1613
        %v1615 = vpop.xlane.xlu0 %1614
        %v1616 = vsel %vm850, %v593, 0.0
        %1617 = vadd.xlane.f32.xlu0 %v1616
        %v1618 = vpop.xlane.xlu0 %1617
        %v1619 = vsel %vm850, %v594, 0.0
        %1620 = vadd.xlane.f32.xlu0 %v1619
        %v1621 = vpop.xlane.xlu0 %1620
        %v1622 = vsel %vm850, %v595, 0.0
        %1623 = vadd.xlane.f32.xlu0 %v1622
        %v1624 = vpop.xlane.xlu0 %1623
        %v1625 = vsel %vm850, %v596, 0.0
        %1626 = vadd.xlane.f32.xlu0 %v1625
        %v1627 = vpop.xlane.xlu0 %1626
        %v1628 = vsel %vm850, %v597, 0.0
        %1629 = vadd.xlane.f32.xlu0 %v1628
        %v1630 = vpop.xlane.xlu0 %1629
        %v1631 = vsel %vm850, %v598, 0.0
        %1632 = vadd.xlane.f32.xlu0 %v1631
        %v1633 = vpop.xlane.xlu0 %1632
        %v1634 = vsel %vm850, %v599, 0.0
        %1635 = vadd.xlane.f32.xlu0 %v1634
        %v1636 = vpop.xlane.xlu0 %1635
        %v1637 = vsel %vm850, %v600, 0.0
        %1638 = vadd.xlane.f32.xlu0 %v1637
        %v1639 = vpop.xlane.xlu0 %1638
        %v1640 = vsel %vm850, %v601, 0.0
        %1641 = vadd.xlane.f32.xlu0 %v1640
        %v1642 = vpop.xlane.xlu0 %1641
        %v1643 = vsel %vm850, %v602, 0.0
        %1644 = vadd.xlane.f32.xlu0 %v1643
        %v1645 = vpop.xlane.xlu0 %1644
        %v1646 = vsel %vm850, %v603, 0.0
        %1647 = vadd.xlane.f32.xlu0 %v1646
        %v1648 = vpop.xlane.xlu0 %1647
        %v1649 = vsel %vm850, %v604, 0.0
        %1650 = vadd.xlane.f32.xlu0 %v1649
        %v1651 = vpop.xlane.xlu0 %1650
        %v1652 = vsel %vm850, %v605, 0.0
        %1653 = vadd.xlane.f32.xlu0 %v1652
        %v1654 = vpop.xlane.xlu0 %1653
        %v1655 = vsel %vm850, %v606, 0.0
        %1656 = vadd.xlane.f32.xlu0 %v1655
        %v1657 = vpop.xlane.xlu0 %1656
        %v1658 = vsel %vm850, %v607, 0.0
        %1659 = vadd.xlane.f32.xlu0 %v1658
        %v1660 = vpop.xlane.xlu0 %1659
        %v1661 = vsel %vm850, %v608, 0.0
        %1662 = vadd.xlane.f32.xlu0 %v1661
        %v1663 = vpop.xlane.xlu0 %1662
        %v1664 = vsel %vm850, %v609, 0.0
        %1665 = vadd.xlane.f32.xlu0 %v1664
        %v1666 = vpop.xlane.xlu0 %1665
        %v1667 = vsel %vm850, %v610, 0.0
        %1668 = vadd.xlane.f32.xlu0 %v1667
        %v1669 = vpop.xlane.xlu0 %1668
        %v1670 = vsel %vm850, %v611, 0.0
        %1671 = vadd.xlane.f32.xlu0 %v1670
        %v1672 = vpop.xlane.xlu0 %1671
        %v1673 = vsel %vm850, %v612, 0.0
        %1674 = vadd.xlane.f32.xlu0 %v1673
        %v1675 = vpop.xlane.xlu0 %1674
        %v1676 = vsel %vm850, %v613, 0.0
        %1677 = vadd.xlane.f32.xlu0 %v1676
        %v1678 = vpop.xlane.xlu0 %1677
        %v1679 = vsel %vm850, %v614, 0.0
        %1680 = vadd.xlane.f32.xlu0 %v1679
        %v1681 = vpop.xlane.xlu0 %1680
        %v1682 = vsel %vm850, %v615, 0.0
        %1683 = vadd.xlane.f32.xlu0 %v1682
        %v1684 = vpop.xlane.xlu0 %1683
        %v1685 = vsel %vm850, %v616, 0.0
        %1686 = vadd.xlane.f32.xlu0 %v1685
        %v1687 = vpop.xlane.xlu0 %1686
        %v1688 = vsel %vm850, %v617, 0.0
        %1689 = vadd.xlane.f32.xlu0 %v1688
        %v1690 = vpop.xlane.xlu0 %1689
        %v1691 = vsel %vm850, %v618, 0.0
        %1692 = vadd.xlane.f32.xlu0 %v1691
        %v1693 = vpop.xlane.xlu0 %1692
        %v1694 = vsel %vm850, %v619, 0.0
        %1695 = vadd.xlane.f32.xlu0 %v1694
        %v1696 = vpop.xlane.xlu0 %1695
        %v1697 = vsel %vm850, %v620, 0.0
        %1698 = vadd.xlane.f32.xlu0 %v1697
        %v1699 = vpop.xlane.xlu0 %1698
        %v1700 = vsel %vm850, %v621, 0.0
        %1701 = vadd.xlane.f32.xlu0 %v1700
        %v1702 = vpop.xlane.xlu0 %1701
        %v1703 = vsel %vm850, %v622, 0.0
        %1704 = vadd.xlane.f32.xlu0 %v1703
        %v1705 = vpop.xlane.xlu0 %1704
        %v1706 = vsel %vm850, %v623, 0.0
        %1707 = vadd.xlane.f32.xlu0 %v1706
        %v1708 = vpop.xlane.xlu0 %1707
        %v1709 = vsel %vm850, %v624, 0.0
        %1710 = vadd.xlane.f32.xlu0 %v1709
        %v1711 = vpop.xlane.xlu0 %1710
        %v1712 = vsel %vm850, %v625, 0.0
        %1713 = vadd.xlane.f32.xlu0 %v1712
        %v1714 = vpop.xlane.xlu0 %1713
        %v1715 = vsel %vm850, %v626, 0.0
        %1716 = vadd.xlane.f32.xlu0 %v1715
        %v1717 = vpop.xlane.xlu0 %1716
        %v1718 = vsel %vm850, %v627, 0.0
        %1719 = vadd.xlane.f32.xlu0 %v1718
        %v1720 = vpop.xlane.xlu0 %1719
        %v1721 = vsel %vm850, %v628, 0.0
        %1722 = vadd.xlane.f32.xlu0 %v1721
        %v1723 = vpop.xlane.xlu0 %1722
        %v1724 = vsel %vm850, %v629, 0.0
        %1725 = vadd.xlane.f32.xlu0 %v1724
        %v1726 = vpop.xlane.xlu0 %1725
        %v1727 = vsel %vm850, %v630, 0.0
        %1728 = vadd.xlane.f32.xlu0 %v1727
        %v1729 = vpop.xlane.xlu0 %1728
        %v1730 = vsel %vm850, %v631, 0.0
        %1731 = vadd.xlane.f32.xlu0 %v1730
        %v1732 = vpop.xlane.xlu0 %1731
        %v1733 = vsel %vm850, %v632, 0.0
        %1734 = vadd.xlane.f32.xlu0 %v1733
        %v1735 = vpop.xlane.xlu0 %1734
        %v1736 = vsel %vm850, %v633, 0.0
        %1737 = vadd.xlane.f32.xlu0 %v1736
        %v1738 = vpop.xlane.xlu0 %1737
        %v1739 = vsel %vm850, %v634, 0.0
        %1740 = vadd.xlane.f32.xlu0 %v1739
        %v1741 = vpop.xlane.xlu0 %1740
        %v1742 = vsel %vm850, %v635, 0.0
        %1743 = vadd.xlane.f32.xlu0 %v1742
        %v1744 = vpop.xlane.xlu0 %1743
        %v1745 = vsel %vm850, %v636, 0.0
        %1746 = vadd.xlane.f32.xlu0 %v1745
        %v1747 = vpop.xlane.xlu0 %1746
        %v1748 = vsel %vm850, %v637, 0.0
        %1749 = vadd.xlane.f32.xlu0 %v1748
        %v1750 = vpop.xlane.xlu0 %1749
        %v1751 = vsel %vm850, %v638, 0.0
        %1752 = vadd.xlane.f32.xlu0 %v1751
        %v1753 = vpop.xlane.xlu0 %1752
        %v1754 = vsel %vm850, %v639, 0.0
        %1755 = vadd.xlane.f32.xlu0 %v1754
        %v1756 = vpop.xlane.xlu0 %1755
        %v1757 = vsel %vm850, %v640, 0.0
        %1758 = vadd.xlane.f32.xlu0 %v1757
        %v1759 = vpop.xlane.xlu0 %1758
        %v1760 = vsel %vm850, %v641, 0.0
        %1761 = vadd.xlane.f32.xlu0 %v1760
        %v1762 = vpop.xlane.xlu0 %1761
        %v1763 = vsel %vm850, %v642, 0.0
        %1764 = vadd.xlane.f32.xlu0 %v1763
        %v1765 = vpop.xlane.xlu0 %1764
        %v1766 = vsel %vm850, %v643, 0.0
        %1767 = vadd.xlane.f32.xlu0 %v1766
        %v1768 = vpop.xlane.xlu0 %1767
        %v1769 = vsel %vm850, %v644, 0.0
        %1770 = vadd.xlane.f32.xlu0 %v1769
        %v1771 = vpop.xlane.xlu0 %1770
        %v1772 = vsel %vm850, %v645, 0.0
        %1773 = vadd.xlane.f32.xlu0 %v1772
        %v1774 = vpop.xlane.xlu0 %1773
        %v1775 = vsel %vm850, %v646, 0.0
        %1776 = vadd.xlane.f32.xlu0 %v1775
        %v1777 = vpop.xlane.xlu0 %1776
        %v1778 = vsel %vm850, %v647, 0.0
        %1779 = vadd.xlane.f32.xlu0 %v1778
        %v1780 = vpop.xlane.xlu0 %1779
        %v1781 = vsel %vm850, %v648, 0.0
        %1782 = vadd.xlane.f32.xlu0 %v1781
        %v1783 = vpop.xlane.xlu0 %1782
        %v1784 = vsel %vm850, %v649, 0.0
        %1785 = vadd.xlane.f32.xlu0 %v1784
        %v1786 = vpop.xlane.xlu0 %1785
        %v1787 = vsel %vm850, %v650, 0.0
        %1788 = vadd.xlane.f32.xlu0 %v1787
        %v1789 = vpop.xlane.xlu0 %1788
        %v1790 = vsel %vm850, %v651, 0.0
        %1791 = vadd.xlane.f32.xlu0 %v1790
        %v1792 = vpop.xlane.xlu0 %1791
        %v1793 = vsel %vm850, %v652, 0.0
        %1794 = vadd.xlane.f32.xlu0 %v1793
        %v1795 = vpop.xlane.xlu0 %1794
        %v1796 = vsel %vm850, %v653, 0.0
        %1797 = vadd.xlane.f32.xlu0 %v1796
        %v1798 = vpop.xlane.xlu0 %1797
        %v1799 = vsel %vm850, %v654, 0.0
        %1800 = vadd.xlane.f32.xlu0 %v1799
        %v1801 = vpop.xlane.xlu0 %1800
        %v1802 = vsel %vm850, %v655, 0.0
        %1803 = vadd.xlane.f32.xlu0 %v1802
        %v1804 = vpop.xlane.xlu0 %1803
        %v1805 = vsel %vm850, %v656, 0.0
        %1806 = vadd.xlane.f32.xlu0 %v1805
        %v1807 = vpop.xlane.xlu0 %1806
        %v1808 = vsel %vm850, %v657, 0.0
        %1809 = vadd.xlane.f32.xlu0 %v1808
        %v1810 = vpop.xlane.xlu0 %1809
        %v1811 = vsel %vm850, %v658, 0.0
        %1812 = vadd.xlane.f32.xlu0 %v1811
        %v1813 = vpop.xlane.xlu0 %1812
        %v1814 = vsel %vm850, %v659, 0.0
        %1815 = vadd.xlane.f32.xlu0 %v1814
        %v1816 = vpop.xlane.xlu0 %1815
        %v1817 = vsel %vm850, %v660, 0.0
        %1818 = vadd.xlane.f32.xlu0 %v1817
        %v1819 = vpop.xlane.xlu0 %1818
        %v1820 = vsel %vm850, %v661, 0.0
        %1821 = vadd.xlane.f32.xlu0 %v1820
        %v1822 = vpop.xlane.xlu0 %1821
        %v1823 = vsel %vm850, %v662, 0.0
        %1824 = vadd.xlane.f32.xlu0 %v1823
        %v1825 = vpop.xlane.xlu0 %1824
        %v1826 = vsel %vm850, %v663, 0.0
        %1827 = vadd.xlane.f32.xlu0 %v1826
        %v1828 = vpop.xlane.xlu0 %1827
        %v1829 = vsel %vm850, %v664, 0.0
        %1830 = vadd.xlane.f32.xlu0 %v1829
        %v1831 = vpop.xlane.xlu0 %1830
        %v1832 = vsel %vm850, %v665, 0.0
        %1833 = vadd.xlane.f32.xlu0 %v1832
        %v1834 = vpop.xlane.xlu0 %1833
        %v1835 = vsel %vm850, %v666, 0.0
        %1836 = vadd.xlane.f32.xlu0 %v1835
        %v1837 = vpop.xlane.xlu0 %1836
        %v1838 = vsel %vm850, %v667, 0.0
        %1839 = vadd.xlane.f32.xlu0 %v1838
        %v1840 = vpop.xlane.xlu0 %1839
        %v1841 = vsel %vm850, %v668, 0.0
        %1842 = vadd.xlane.f32.xlu0 %v1841
        %v1843 = vpop.xlane.xlu0 %1842
        %v1844 = vsel %vm850, %v669, 0.0
        %1845 = vadd.xlane.f32.xlu0 %v1844
        %v1846 = vpop.xlane.xlu0 %1845
        %v1847 = vsel %vm850, %v670, 0.0
        %1848 = vadd.xlane.f32.xlu0 %v1847
        %v1849 = vpop.xlane.xlu0 %1848
        %v1850 = vsel %vm850, %v671, 0.0
        %1851 = vadd.xlane.f32.xlu0 %v1850
        %v1852 = vpop.xlane.xlu0 %1851
        %v1853 = vsel %vm850, %v672, 0.0
        %1854 = vadd.xlane.f32.xlu0 %v1853
        %v1855 = vpop.xlane.xlu0 %1854
        %v1856 = vsel %vm850, %v673, 0.0
        %1857 = vadd.xlane.f32.xlu0 %v1856
        %v1858 = vpop.xlane.xlu0 %1857
        %v1859 = vsel %vm850, %v674, 0.0
        %1860 = vadd.xlane.f32.xlu0 %v1859
        %v1861 = vpop.xlane.xlu0 %1860
        %v1862 = vsel %vm850, %v675, 0.0
        %1863 = vadd.xlane.f32.xlu0 %v1862
        %v1864 = vpop.xlane.xlu0 %1863
        %v1865 = vsel %vm850, %v676, 0.0
        %1866 = vadd.xlane.f32.xlu0 %v1865
        %v1867 = vpop.xlane.xlu0 %1866
        %v1868 = vsel %vm850, %v677, 0.0
        %1869 = vadd.xlane.f32.xlu0 %v1868
        %v1870 = vpop.xlane.xlu0 %1869
        %v1871 = vsel %vm850, %v678, 0.0
        %1872 = vadd.xlane.f32.xlu0 %v1871
        %v1873 = vpop.xlane.xlu0 %1872
        %v1874 = vsel %vm850, %v679, 0.0
        %1875 = vadd.xlane.f32.xlu0 %v1874
        %v1876 = vpop.xlane.xlu0 %1875
        %v1877 = vsel %vm850, %v680, 0.0
        %1878 = vadd.xlane.f32.xlu0 %v1877
        %v1879 = vpop.xlane.xlu0 %1878
        %v1880 = vsel %vm850, %v681, 0.0
        %1881 = vadd.xlane.f32.xlu0 %v1880
        %v1882 = vpop.xlane.xlu0 %1881
        %v1883 = vsel %vm850, %v682, 0.0
        %1884 = vadd.xlane.f32.xlu0 %v1883
        %v1885 = vpop.xlane.xlu0 %1884
        %v1886 = vsel %vm850, %v683, 0.0
        %1887 = vadd.xlane.f32.xlu0 %v1886
        %v1888 = vpop.xlane.xlu0 %1887
        %v1889 = vsel %vm850, %v684, 0.0
        %1890 = vadd.xlane.f32.xlu0 %v1889
        %v1891 = vpop.xlane.xlu0 %1890
        %v1892 = vsel %vm850, %v685, 0.0
        %1893 = vadd.xlane.f32.xlu0 %v1892
        %v1894 = vpop.xlane.xlu0 %1893
        %v1895 = vsel %vm850, %v686, 0.0
        %1896 = vadd.xlane.f32.xlu0 %v1895
        %v1897 = vpop.xlane.xlu0 %1896
        %v1898 = vsel %vm850, %v687, 0.0
        %1899 = vadd.xlane.f32.xlu0 %v1898
        %v1900 = vpop.xlane.xlu0 %1899
        %v1901 = vsel %vm850, %v688, 0.0
        %1902 = vadd.xlane.f32.xlu0 %v1901
        %v1903 = vpop.xlane.xlu0 %1902
        %v1904 = vsel %vm850, %v689, 0.0
        %1905 = vadd.xlane.f32.xlu0 %v1904
        %v1906 = vpop.xlane.xlu0 %1905
        %v1907 = vsel %vm850, %v690, 0.0
        %1908 = vadd.xlane.f32.xlu0 %v1907
        %v1909 = vpop.xlane.xlu0 %1908
        %v1910 = vsel %vm850, %v691, 0.0
        %1911 = vadd.xlane.f32.xlu0 %v1910
        %v1912 = vpop.xlane.xlu0 %1911
        %v1913 = vsel %vm850, %v692, 0.0
        %1914 = vadd.xlane.f32.xlu0 %v1913
        %v1915 = vpop.xlane.xlu0 %1914
        %v1916 = vsel %vm850, %v693, 0.0
        %1917 = vadd.xlane.f32.xlu0 %v1916
        %v1918 = vpop.xlane.xlu0 %1917
        %v1919 = vsel %vm850, %v694, 0.0
        %1920 = vadd.xlane.f32.xlu0 %v1919
        %v1921 = vpop.xlane.xlu0 %1920
        %v1922 = vsel %vm850, %v695, 0.0
        %1923 = vadd.xlane.f32.xlu0 %v1922
        %v1924 = vpop.xlane.xlu0 %1923
        %v1925 = vsel %vm850, %v696, 0.0
        %1926 = vadd.xlane.f32.xlu0 %v1925
        %v1927 = vpop.xlane.xlu0 %1926
        %v1928 = vsel %vm850, %v697, 0.0
        %1929 = vadd.xlane.f32.xlu0 %v1928
        %v1930 = vpop.xlane.xlu0 %1929
        %v1931 = vsel %vm850, %v698, 0.0
        %1932 = vadd.xlane.f32.xlu0 %v1931
        %v1933 = vpop.xlane.xlu0 %1932
        %v1934 = vsel %vm850, %v699, 0.0
        %1935 = vadd.xlane.f32.xlu0 %v1934
        %v1936 = vpop.xlane.xlu0 %1935
        %v1937 = vsel %vm850, %v700, 0.0
        %1938 = vadd.xlane.f32.xlu0 %v1937
        %v1939 = vpop.xlane.xlu0 %1938
        %v1940 = vsel %vm850, %v701, 0.0
        %1941 = vadd.xlane.f32.xlu0 %v1940
        %v1942 = vpop.xlane.xlu0 %1941
        %v1943 = vsel %vm850, %v702, 0.0
        %1944 = vadd.xlane.f32.xlu0 %v1943
        %v1945 = vpop.xlane.xlu0 %1944
        %v1946 = vsel %vm850, %v703, 0.0
        %1947 = vadd.xlane.f32.xlu0 %v1946
        %v1948 = vpop.xlane.xlu0 %1947
        %v1949 = vsel %vm850, %v704, 0.0
        %1950 = vadd.xlane.f32.xlu0 %v1949
        %v1951 = vpop.xlane.xlu0 %1950
        %v1952 = vsel %vm850, %v705, 0.0
        %1953 = vadd.xlane.f32.xlu0 %v1952
        %v1954 = vpop.xlane.xlu0 %1953
        %v1955 = vsel %vm850, %v706, 0.0
        %1956 = vadd.xlane.f32.xlu0 %v1955
        %v1957 = vpop.xlane.xlu0 %1956
        %v1958 = vsel %vm850, %v707, 0.0
        %1959 = vadd.xlane.f32.xlu0 %v1958
        %v1960 = vpop.xlane.xlu0 %1959
        %v1961 = vsel %vm850, %v708, 0.0
        %1962 = vadd.xlane.f32.xlu0 %v1961
        %v1963 = vpop.xlane.xlu0 %1962
        %v1964 = vsel %vm850, %v709, 0.0
        %1965 = vadd.xlane.f32.xlu0 %v1964
        %v1966 = vpop.xlane.xlu0 %1965
        %v1967 = vsel %vm850, %v710, 0.0
        %1968 = vadd.xlane.f32.xlu0 %v1967
        %v1969 = vpop.xlane.xlu0 %1968
        %v1970 = vsel %vm850, %v711, 0.0
        %1971 = vadd.xlane.f32.xlu0 %v1970
        %v1972 = vpop.xlane.xlu0 %1971
        %v1973 = vsel %vm850, %v712, 0.0
        %1974 = vadd.xlane.f32.xlu0 %v1973
        %v1975 = vpop.xlane.xlu0 %1974
        %v1976 = vsel %vm850, %v713, 0.0
        %1977 = vadd.xlane.f32.xlu0 %v1976
        %v1978 = vpop.xlane.xlu0 %1977
        %v1979 = vsel %vm850, %v714, 0.0
        %1980 = vadd.xlane.f32.xlu0 %v1979
        %v1981 = vpop.xlane.xlu0 %1980
        %v1982 = vsel %vm850, %v715, 0.0
        %1983 = vadd.xlane.f32.xlu0 %v1982
        %v1984 = vpop.xlane.xlu0 %1983
        %v1985 = vsel %vm850, %v716, 0.0
        %1986 = vadd.xlane.f32.xlu0 %v1985
        %v1987 = vpop.xlane.xlu0 %1986
        %v1988 = vsel %vm850, %v717, 0.0
        %1989 = vadd.xlane.f32.xlu0 %v1988
        %v1990 = vpop.xlane.xlu0 %1989
        %v1991 = vsel %vm850, %v718, 0.0
        %1992 = vadd.xlane.f32.xlu0 %v1991
        %v1993 = vpop.xlane.xlu0 %1992
        %v1994 = vsel %vm850, %v719, 0.0
        %1995 = vadd.xlane.f32.xlu0 %v1994
        %v1996 = vpop.xlane.xlu0 %1995
        %v1997 = vsel %vm850, %v720, 0.0
        %1998 = vadd.xlane.f32.xlu0 %v1997
        %v1999 = vpop.xlane.xlu0 %1998
        %v2000 = vsel %vm850, %v721, 0.0
        %2001 = vadd.xlane.f32.xlu0 %v2000
        %v2002 = vpop.xlane.xlu0 %2001
        %v2003 = vsel %vm850, %v722, 0.0
        %2004 = vadd.xlane.f32.xlu0 %v2003
        %v2005 = vpop.xlane.xlu0 %2004
        %v2006 = vsel %vm850, %v723, 0.0
        %2007 = vadd.xlane.f32.xlu0 %v2006
        %v2008 = vpop.xlane.xlu0 %2007
        %v2009 = vsel %vm850, %v724, 0.0
        %2010 = vadd.xlane.f32.xlu0 %v2009
        %v2011 = vpop.xlane.xlu0 %2010
        %v2012 = vsel %vm850, %v725, 0.0
        %2013 = vadd.xlane.f32.xlu0 %v2012
        %v2014 = vpop.xlane.xlu0 %2013
        %v2015 = vsel %vm850, %v726, 0.0
        %2016 = vadd.xlane.f32.xlu0 %v2015
        %v2017 = vpop.xlane.xlu0 %2016
        %v2018 = vsel %vm850, %v727, 0.0
        %2019 = vadd.xlane.f32.xlu0 %v2018
        %v2020 = vpop.xlane.xlu0 %2019
        %v2021 = vsel %vm850, %v728, 0.0
        %2022 = vadd.xlane.f32.xlu0 %v2021
        %v2023 = vpop.xlane.xlu0 %2022
        %v2024 = vsel %vm850, %v729, 0.0
        %2025 = vadd.xlane.f32.xlu0 %v2024
        %v2026 = vpop.xlane.xlu0 %2025
        %v2027 = vsel %vm850, %v730, 0.0
        %2028 = vadd.xlane.f32.xlu0 %v2027
        %v2029 = vpop.xlane.xlu0 %2028
        %v2030 = vsel %vm850, %v731, 0.0
        %2031 = vadd.xlane.f32.xlu0 %v2030
        %v2032 = vpop.xlane.xlu0 %2031
        %v2033 = vsel %vm850, %v732, 0.0
        %2034 = vadd.xlane.f32.xlu0 %v2033
        %v2035 = vpop.xlane.xlu0 %2034
        %v2036 = vsel %vm850, %v733, 0.0
        %2037 = vadd.xlane.f32.xlu0 %v2036
        %v2038 = vpop.xlane.xlu0 %2037
        %v2039 = vsel %vm850, %v734, 0.0
        %2040 = vadd.xlane.f32.xlu0 %v2039
        %v2041 = vpop.xlane.xlu0 %2040
        %v2042 = vsel %vm850, %v735, 0.0
        %2043 = vadd.xlane.f32.xlu0 %v2042
        %v2044 = vpop.xlane.xlu0 %2043
        %v2045 = vsel %vm850, %v736, 0.0
        %2046 = vadd.xlane.f32.xlu0 %v2045
        %v2047 = vpop.xlane.xlu0 %2046
        %v2048 = vsel %vm850, %v737, 0.0
        %2049 = vadd.xlane.f32.xlu0 %v2048
        %v2050 = vpop.xlane.xlu0 %2049
        %v2051 = vsel %vm850, %v738, 0.0
        %2052 = vadd.xlane.f32.xlu0 %v2051
        %v2053 = vpop.xlane.xlu0 %2052
        %v2054 = vsel %vm850, %v739, 0.0
        %2055 = vadd.xlane.f32.xlu0 %v2054
        %v2056 = vpop.xlane.xlu0 %2055
        %v2057 = vsel %vm850, %v740, 0.0
        %2058 = vadd.xlane.f32.xlu0 %v2057
        %v2059 = vpop.xlane.xlu0 %2058
        %v2060 = vsel %vm850, %v741, 0.0
        %2061 = vadd.xlane.f32.xlu0 %v2060
        %v2062 = vpop.xlane.xlu0 %2061
        %v2063 = vsel %vm850, %v742, 0.0
        %2064 = vadd.xlane.f32.xlu0 %v2063
        %v2065 = vpop.xlane.xlu0 %2064
        %v2066 = vsel %vm850, %v743, 0.0
        %2067 = vadd.xlane.f32.xlu0 %v2066
        %v2068 = vpop.xlane.xlu0 %2067
        %v2069 = vsel %vm850, %v744, 0.0
        %2070 = vadd.xlane.f32.xlu0 %v2069
        %v2071 = vpop.xlane.xlu0 %2070
        %v2072 = vsel %vm850, %v745, 0.0
        %2073 = vadd.xlane.f32.xlu0 %v2072
        %v2074 = vpop.xlane.xlu0 %2073
        %v2075 = vsel %vm850, %v746, 0.0
        %2076 = vadd.xlane.f32.xlu0 %v2075
        %v2077 = vpop.xlane.xlu0 %2076
        %v2078 = vsel %vm850, %v747, 0.0
        %2079 = vadd.xlane.f32.xlu0 %v2078
        %v2080 = vpop.xlane.xlu0 %2079
        %v2081 = vsel %vm850, %v748, 0.0
        %2082 = vadd.xlane.f32.xlu0 %v2081
        %v2083 = vpop.xlane.xlu0 %2082
        %v2084 = vsel %vm850, %v749, 0.0
        %2085 = vadd.xlane.f32.xlu0 %v2084
        %v2086 = vpop.xlane.xlu0 %2085
        %v2087 = vsel %vm850, %v750, 0.0
        %2088 = vadd.xlane.f32.xlu0 %v2087
        %v2089 = vpop.xlane.xlu0 %2088
        %v2090 = vsel %vm850, %v751, 0.0
        %2091 = vadd.xlane.f32.xlu0 %v2090
        %v2092 = vpop.xlane.xlu0 %2091
        %v2093 = vsel %vm850, %v752, 0.0
        %2094 = vadd.xlane.f32.xlu0 %v2093
        %v2095 = vpop.xlane.xlu0 %2094
        %v2096 = vsel %vm850, %v753, 0.0
        %2097 = vadd.xlane.f32.xlu0 %v2096
        %v2098 = vpop.xlane.xlu0 %2097
        %v2099 = vsel %vm850, %v754, 0.0
        %2100 = vadd.xlane.f32.xlu0 %v2099
        %v2101 = vpop.xlane.xlu0 %2100
        %v2102 = vsel %vm850, %v755, 0.0
        %2103 = vadd.xlane.f32.xlu0 %v2102
        %v2104 = vpop.xlane.xlu0 %2103
        %v2105 = vsel %vm850, %v756, 0.0
        %2106 = vadd.xlane.f32.xlu0 %v2105
        %v2107 = vpop.xlane.xlu0 %2106
        %v2108 = vsel %vm850, %v757, 0.0
        %2109 = vadd.xlane.f32.xlu0 %v2108
        %v2110 = vpop.xlane.xlu0 %2109
        %v2111 = vsel %vm850, %v758, 0.0
        %2112 = vadd.xlane.f32.xlu0 %v2111
        %v2113 = vpop.xlane.xlu0 %2112
        %v2114 = vsel %vm850, %v759, 0.0
        %2115 = vadd.xlane.f32.xlu0 %v2114
        %v2116 = vpop.xlane.xlu0 %2115
        %v2117 = vsel %vm850, %v760, 0.0
        %2118 = vadd.xlane.f32.xlu0 %v2117
        %v2119 = vpop.xlane.xlu0 %2118
        %v2120 = vsel %vm850, %v761, 0.0
        %2121 = vadd.xlane.f32.xlu0 %v2120
        %v2122 = vpop.xlane.xlu0 %2121
        %v2123 = vsel %vm850, %v762, 0.0
        %2124 = vadd.xlane.f32.xlu0 %v2123
        %v2125 = vpop.xlane.xlu0 %2124
        %v2126 = vsel %vm850, %v763, 0.0
        %2127 = vadd.xlane.f32.xlu0 %v2126
        %v2128 = vpop.xlane.xlu0 %2127
        %v2129 = vsel %vm850, %v764, 0.0
        %2130 = vadd.xlane.f32.xlu0 %v2129
        %v2131 = vpop.xlane.xlu0 %2130
        %v2132 = vsel %vm850, %v765, 0.0
        %2133 = vadd.xlane.f32.xlu0 %v2132
        %v2134 = vpop.xlane.xlu0 %2133
        %v2135 = vsel %vm850, %v766, 0.0
        %2136 = vadd.xlane.f32.xlu0 %v2135
        %v2137 = vpop.xlane.xlu0 %2136
        %v2138 = vsel %vm850, %v767, 0.0
        %2139 = vadd.xlane.f32.xlu0 %v2138
        %v2140 = vpop.xlane.xlu0 %2139
        %v2141 = vsel %vm850, %v768, 0.0
        %2142 = vadd.xlane.f32.xlu0 %v2141
        %v2143 = vpop.xlane.xlu0 %2142
        %v2144 = vsel %vm850, %v769, 0.0
        %2145 = vadd.xlane.f32.xlu0 %v2144
        %v2146 = vpop.xlane.xlu0 %2145
        %v2147 = vsel %vm850, %v770, 0.0
        %2148 = vadd.xlane.f32.xlu0 %v2147
        %v2149 = vpop.xlane.xlu0 %2148
        %v2150 = vsel %vm850, %v771, 0.0
        %2151 = vadd.xlane.f32.xlu0 %v2150
        %v2152 = vpop.xlane.xlu0 %2151
        %v2153 = vsel %vm850, %v772, 0.0
        %2154 = vadd.xlane.f32.xlu0 %v2153
        %v2155 = vpop.xlane.xlu0 %2154
        %v2156 = vsel %vm850, %v773, 0.0
        %2157 = vadd.xlane.f32.xlu0 %v2156
        %v2158 = vpop.xlane.xlu0 %2157
        %v2159 = vsel %vm850, %v774, 0.0
        %2160 = vadd.xlane.f32.xlu0 %v2159
        %v2161 = vpop.xlane.xlu0 %2160
        %v2162 = vsel %vm850, %v775, 0.0
        %2163 = vadd.xlane.f32.xlu0 %v2162
        %v2164 = vpop.xlane.xlu0 %2163
        %v2165 = vsel %vm850, %v776, 0.0
        %2166 = vadd.xlane.f32.xlu0 %v2165
        %v2167 = vpop.xlane.xlu0 %2166
        %v2168 = vsel %vm850, %v777, 0.0
        %2169 = vadd.xlane.f32.xlu0 %v2168
        %v2170 = vpop.xlane.xlu0 %2169
        %v2171 = vsel %vm850, %v778, 0.0
        %2172 = vadd.xlane.f32.xlu0 %v2171
        %v2173 = vpop.xlane.xlu0 %2172
        %v2174 = vsel %vm850, %v779, 0.0
        %2175 = vadd.xlane.f32.xlu0 %v2174
        %v2176 = vpop.xlane.xlu0 %2175
        %v2177 = vsel %vm850, %v780, 0.0
        %2178 = vadd.xlane.f32.xlu0 %v2177
        %v2179 = vpop.xlane.xlu0 %2178
        %v2180 = vsel %vm850, %v781, 0.0
        %2181 = vadd.xlane.f32.xlu0 %v2180
        %v2182 = vpop.xlane.xlu0 %2181
        %v2183 = vsel %vm850, %v782, 0.0
        %2184 = vadd.xlane.f32.xlu0 %v2183
        %v2185 = vpop.xlane.xlu0 %2184
        %v2186 = vsel %vm850, %v783, 0.0
        %2187 = vadd.xlane.f32.xlu0 %v2186
        %v2188 = vpop.xlane.xlu0 %2187
        %v2189 = vsel %vm850, %v784, 0.0
        %2190 = vadd.xlane.f32.xlu0 %v2189
        %v2191 = vpop.xlane.xlu0 %2190
        %v2192 = vsel %vm850, %v785, 0.0
        %2193 = vadd.xlane.f32.xlu0 %v2192
        %v2194 = vpop.xlane.xlu0 %2193
        %v2195 = vsel %vm850, %v786, 0.0
        %2196 = vadd.xlane.f32.xlu0 %v2195
        %v2197 = vpop.xlane.xlu0 %2196
        %v2198 = vsel %vm850, %v787, 0.0
        %2199 = vadd.xlane.f32.xlu0 %v2198
        %v2200 = vpop.xlane.xlu0 %2199
        %v2201 = vsel %vm850, %v788, 0.0
        %2202 = vadd.xlane.f32.xlu0 %v2201
        %v2203 = vpop.xlane.xlu0 %2202
        %v2204 = vsel %vm850, %v789, 0.0
        %2205 = vadd.xlane.f32.xlu0 %v2204
        %v2206 = vpop.xlane.xlu0 %2205
        %v2207 = vsel %vm850, %v790, 0.0
        %2208 = vadd.xlane.f32.xlu0 %v2207
        %v2209 = vpop.xlane.xlu0 %2208
        %v2210 = vsel %vm850, %v791, 0.0
        %2211 = vadd.xlane.f32.xlu0 %v2210
        %v2212 = vpop.xlane.xlu0 %2211
        %v2213 = vsel %vm850, %v792, 0.0
        %2214 = vadd.xlane.f32.xlu0 %v2213
        %v2215 = vpop.xlane.xlu0 %2214
        %v2216 = vsel %vm850, %v793, 0.0
        %2217 = vadd.xlane.f32.xlu0 %v2216
        %v2218 = vpop.xlane.xlu0 %2217
        %v2219 = vsel %vm850, %v794, 0.0
        %2220 = vadd.xlane.f32.xlu0 %v2219
        %v2221 = vpop.xlane.xlu0 %2220
        %v2222 = vsel %vm850, %v795, 0.0
        %2223 = vadd.xlane.f32.xlu0 %v2222
        %v2224 = vpop.xlane.xlu0 %2223
        %v2225 = vsel %vm850, %v796, 0.0
        %2226 = vadd.xlane.f32.xlu0 %v2225
        %v2227 = vpop.xlane.xlu0 %2226
        %v2228 = vsel %vm850, %v797, 0.0
        %2229 = vadd.xlane.f32.xlu0 %v2228
        %v2230 = vpop.xlane.xlu0 %2229
        %v2231 = vsel %vm850, %v798, 0.0
        %2232 = vadd.xlane.f32.xlu0 %v2231
        %v2233 = vpop.xlane.xlu0 %2232
        %v2234 = vsel %vm850, %v799, 0.0
        %2235 = vadd.xlane.f32.xlu0 %v2234
        %v2236 = vpop.xlane.xlu0 %2235
        %v2237 = vsel %vm850, %v800, 0.0
        %2238 = vadd.xlane.f32.xlu0 %v2237
        %v2239 = vpop.xlane.xlu0 %2238
        %v2240 = vsel %vm850, %v801, 0.0
        %2241 = vadd.xlane.f32.xlu0 %v2240
        %v2242 = vpop.xlane.xlu0 %2241
        %v2243 = vsel %vm850, %v802, 0.0
        %2244 = vadd.xlane.f32.xlu0 %v2243
        %v2245 = vpop.xlane.xlu0 %2244
        %v2246 = vsel %vm850, %v803, 0.0
        %2247 = vadd.xlane.f32.xlu0 %v2246
        %v2248 = vpop.xlane.xlu0 %2247
        %v2249 = vsel %vm850, %v804, 0.0
        %2250 = vadd.xlane.f32.xlu0 %v2249
        %v2251 = vpop.xlane.xlu0 %2250
        %v2252 = vsel %vm850, %v805, 0.0
        %2253 = vadd.xlane.f32.xlu0 %v2252
        %v2254 = vpop.xlane.xlu0 %2253
        %v2255 = vsel %vm850, %v806, 0.0
        %2256 = vadd.xlane.f32.xlu0 %v2255
        %v2257 = vpop.xlane.xlu0 %2256
        %v2258 = vsel %vm850, %v807, 0.0
        %2259 = vadd.xlane.f32.xlu0 %v2258
        %v2260 = vpop.xlane.xlu0 %2259
        %v2261 = vsel %vm850, %v808, 0.0
        %2262 = vadd.xlane.f32.xlu0 %v2261
        %v2263 = vpop.xlane.xlu0 %2262
        %v2264 = vsel %vm850, %v809, 0.0
        %2265 = vadd.xlane.f32.xlu0 %v2264
        %v2266 = vpop.xlane.xlu0 %2265
        %v2267 = vsel %vm850, %v810, 0.0
        %2268 = vadd.xlane.f32.xlu0 %v2267
        %v2269 = vpop.xlane.xlu0 %2268
        %v2270 = vsel %vm850, %v811, 0.0
        %2271 = vadd.xlane.f32.xlu0 %v2270
        %v2272 = vpop.xlane.xlu0 %2271
        %v2273 = vsel %vm850, %v812, 0.0
        %2274 = vadd.xlane.f32.xlu0 %v2273
        %v2275 = vpop.xlane.xlu0 %2274
        %v2276 = vsel %vm850, %v813, 0.0
        %2277 = vadd.xlane.f32.xlu0 %v2276
        %v2278 = vpop.xlane.xlu0 %2277
        %v2279 = vsel %vm850, %v814, 0.0
        %2280 = vadd.xlane.f32.xlu0 %v2279
        %v2281 = vpop.xlane.xlu0 %2280
        %v2282 = vsel %vm850, %v815, 0.0
        %2283 = vadd.xlane.f32.xlu0 %v2282
        %v2284 = vpop.xlane.xlu0 %2283
        %v2285 = vsel %vm850, %v816, 0.0
        %2286 = vadd.xlane.f32.xlu0 %v2285
        %v2287 = vpop.xlane.xlu0 %2286
        %v2288 = vsel %vm850, %v817, 0.0
        %2289 = vadd.xlane.f32.xlu0 %v2288
        %v2290 = vpop.xlane.xlu0 %2289
        %v2291 = vsel %vm850, %v818, 0.0
        %2292 = vadd.xlane.f32.xlu0 %v2291
        %v2293 = vpop.xlane.xlu0 %2292
        %v2294 = vsel %vm850, %v819, 0.0
        %2295 = vadd.xlane.f32.xlu0 %v2294
        %v2296 = vpop.xlane.xlu0 %2295
        %v2297 = vsel %vm850, %v820, 0.0
        %2298 = vadd.xlane.f32.xlu0 %v2297
        %v2299 = vpop.xlane.xlu0 %2298
        %v2300 = vsel %vm850, %v821, 0.0
        %2301 = vadd.xlane.f32.xlu0 %v2300
        %v2302 = vpop.xlane.xlu0 %2301
        %v2303 = vsel %vm850, %v822, 0.0
        %2304 = vadd.xlane.f32.xlu0 %v2303
        %v2305 = vpop.xlane.xlu0 %2304
        %v2306 = vsel %vm850, %v823, 0.0
        %2307 = vadd.xlane.f32.xlu0 %v2306
        %v2308 = vpop.xlane.xlu0 %2307
        %v2309 = vsel %vm850, %v824, 0.0
        %2310 = vadd.xlane.f32.xlu0 %v2309
        %v2311 = vpop.xlane.xlu0 %2310
        %v2312 = vsel %vm850, %v825, 0.0
        %2313 = vadd.xlane.f32.xlu0 %v2312
        %v2314 = vpop.xlane.xlu0 %2313
        %v2315 = vsel %vm850, %v826, 0.0
        %2316 = vadd.xlane.f32.xlu0 %v2315
        %v2317 = vpop.xlane.xlu0 %2316
        %v2318 = vsel %vm850, %v827, 0.0
        %2319 = vadd.xlane.f32.xlu0 %v2318
        %v2320 = vpop.xlane.xlu0 %2319
        %v2321 = vsel %vm850, %v828, 0.0
        %2322 = vadd.xlane.f32.xlu0 %v2321
        %v2323 = vpop.xlane.xlu0 %2322
        %v2324 = vsel %vm850, %v829, 0.0
        %2325 = vadd.xlane.f32.xlu0 %v2324
        %v2326 = vpop.xlane.xlu0 %2325
        %v2327 = vsel %vm850, %v830, 0.0
        %2328 = vadd.xlane.f32.xlu0 %v2327
        %v2329 = vpop.xlane.xlu0 %2328
        %v2330 = vsel %vm850, %v831, 0.0
        %2331 = vadd.xlane.f32.xlu0 %v2330
        %v2332 = vpop.xlane.xlu0 %2331
        %v2333 = vsel %vm850, %v832, 0.0
        %2334 = vadd.xlane.f32.xlu0 %v2333
        %v2335 = vpop.xlane.xlu0 %2334
        %v2336 = vsel %vm850, %v833, 0.0
        %2337 = vadd.xlane.f32.xlu0 %v2336
        %v2338 = vpop.xlane.xlu0 %2337
        %v2339 = vsel %vm850, %v834, 0.0
        %2340 = vadd.xlane.f32.xlu0 %v2339
        %v2341 = vpop.xlane.xlu0 %2340
        %v2342 = vsel %vm850, %v835, 0.0
        %2343 = vadd.xlane.f32.xlu0 %v2342
        %v2344 = vpop.xlane.xlu0 %2343
        %v2345 = vsel %vm850, %v836, 0.0
        %2346 = vadd.xlane.f32.xlu0 %v2345
        %v2347 = vpop.xlane.xlu0 %2346
        %v2348 = vsel %vm850, %v837, 0.0
        %2349 = vadd.xlane.f32.xlu0 %v2348
        %v2350 = vpop.xlane.xlu0 %2349
        %v2351 = vsel %vm850, %v838, 0.0
        %2352 = vadd.xlane.f32.xlu0 %v2351
        %v2353 = vpop.xlane.xlu0 %2352
        %v2354 = vsel %vm850, %v839, 0.0
        %2355 = vadd.xlane.f32.xlu0 %v2354
        %v2356 = vpop.xlane.xlu0 %2355
        %v2357 = vsel %vm850, %v840, 0.0
        %2358 = vadd.xlane.f32.xlu0 %v2357
        %v2359 = vpop.xlane.xlu0 %2358
        %v2360 = vsel %vm850, %v841, 0.0
        %2361 = vadd.xlane.f32.xlu0 %v2360
        %v2362 = vpop.xlane.xlu0 %2361
        %v2363 = vsel %vm850, %v842, 0.0
        %2364 = vadd.xlane.f32.xlu0 %v2363
        %v2365 = vpop.xlane.xlu0 %2364
        %v2366 = vsel %vm850, %v843, 0.0
        %2367 = vadd.xlane.f32.xlu0 %v2366
        %v2368 = vpop.xlane.xlu0 %2367
        %v2369 = vsel %vm850, %v844, 0.0
        %2370 = vadd.xlane.f32.xlu0 %v2369
        %v2371 = vpop.xlane.xlu0 %2370
        %v2372 = vsel %vm850, %v845, 0.0
        %2373 = vadd.xlane.f32.xlu0 %v2372
        %v2374 = vpop.xlane.xlu0 %2373
        %v2375 = vsel %vm850, %v846, 0.0
        %2376 = vadd.xlane.f32.xlu0 %v2375
        %v2377 = vpop.xlane.xlu0 %2376
        %v2378 = vsel %vm850, %v847, 0.0
        %2379 = vadd.xlane.f32.xlu0 %v2378
        %v2380 = vpop.xlane.xlu0 %2379
        %v2381 = vsel %vm850, %v848, 0.0
        %2382 = vadd.xlane.f32.xlu0 %v2381
        %v2383 = vpop.xlane.xlu0 %2382
        %v2384 = vsel %vm850, %v849, 0.0
        %2385 = vadd.xlane.f32.xlu0 %v2384
        %v2386 = vpop.xlane.xlu0 %2385
        %v2387 = vrcp.pop 49.0
        %v2388 = vmul.f32 %v853, %v2387
        %v2389 = vmul.f32 %v856, %v2387
        %v2390 = vmul.f32 %v859, %v2387
        %v2391 = vmul.f32 %v862, %v2387
        %v2392 = vmul.f32 %v865, %v2387
        %v2393 = vmul.f32 %v868, %v2387
        %v2394 = vmul.f32 %v871, %v2387
        %v2395 = vmul.f32 %v874, %v2387
        %v2396 = vmul.f32 %v877, %v2387
        %v2397 = vmul.f32 %v880, %v2387
        %v2398 = vmul.f32 %v883, %v2387
        %v2399 = vmul.f32 %v886, %v2387
        %v2400 = vmul.f32 %v889, %v2387
        %v2401 = vmul.f32 %v892, %v2387
        %v2402 = vmul.f32 %v895, %v2387
        %v2403 = vmul.f32 %v898, %v2387
        %v2404 = vmul.f32 %v901, %v2387
        %v2405 = vmul.f32 %v904, %v2387
        %v2406 = vmul.f32 %v907, %v2387
        %v2407 = vmul.f32 %v910, %v2387
        %v2408 = vmul.f32 %v913, %v2387
        %v2409 = vmul.f32 %v916, %v2387
        %v2410 = vmul.f32 %v919, %v2387
        %v2411 = vmul.f32 %v922, %v2387
        %v2412 = vmul.f32 %v925, %v2387
        %v2413 = vmul.f32 %v928, %v2387
        %v2414 = vmul.f32 %v931, %v2387
        %v2415 = vmul.f32 %v934, %v2387
        %v2416 = vmul.f32 %v937, %v2387
        %v2417 = vmul.f32 %v940, %v2387
        %v2418 = vmul.f32 %v943, %v2387
        %v2419 = vmul.f32 %v946, %v2387
        %v2420 = vmul.f32 %v949, %v2387
        %v2421 = vmul.f32 %v952, %v2387
        %v2422 = vmul.f32 %v955, %v2387
        %v2423 = vmul.f32 %v958, %v2387
        %v2424 = vmul.f32 %v961, %v2387
        %v2425 = vmul.f32 %v964, %v2387
        %v2426 = vmul.f32 %v967, %v2387
        %v2427 = vmul.f32 %v970, %v2387
        %v2428 = vmul.f32 %v973, %v2387
        %v2429 = vmul.f32 %v976, %v2387
        %v2430 = vmul.f32 %v979, %v2387
        %v2431 = vmul.f32 %v982, %v2387
        %v2432 = vmul.f32 %v985, %v2387
        %v2433 = vmul.f32 %v988, %v2387
        %v2434 = vmul.f32 %v991, %v2387
        %v2435 = vmul.f32 %v994, %v2387
        %v2436 = vmul.f32 %v997, %v2387
        %v2437 = vmul.f32 %v1000, %v2387
        %v2438 = vmul.f32 %v1003, %v2387
        %v2439 = vmul.f32 %v1006, %v2387
        %v2440 = vmul.f32 %v1009, %v2387
        %v2441 = vmul.f32 %v1012, %v2387
        %v2442 = vmul.f32 %v1015, %v2387
        %v2443 = vmul.f32 %v1018, %v2387
        %v2444 = vmul.f32 %v1021, %v2387
        %v2445 = vmul.f32 %v1024, %v2387
        %v2446 = vmul.f32 %v1027, %v2387
        %v2447 = vmul.f32 %v1030, %v2387
        %v2448 = vmul.f32 %v1033, %v2387
        %v2449 = vmul.f32 %v1036, %v2387
        %v2450 = vmul.f32 %v1039, %v2387
        %v2451 = vmul.f32 %v1042, %v2387
        %v2452 = vmul.f32 %v1045, %v2387
        %v2453 = vmul.f32 %v1048, %v2387
        %v2454 = vmul.f32 %v1051, %v2387
        %v2455 = vmul.f32 %v1054, %v2387
        %v2456 = vmul.f32 %v1057, %v2387
        %v2457 = vmul.f32 %v1060, %v2387
        %v2458 = vmul.f32 %v1063, %v2387
        %v2459 = vmul.f32 %v1066, %v2387
        %v2460 = vmul.f32 %v1069, %v2387
        %v2461 = vmul.f32 %v1072, %v2387
        %v2462 = vmul.f32 %v1075, %v2387
        %v2463 = vmul.f32 %v1078, %v2387
        %v2464 = vmul.f32 %v1081, %v2387
        %v2465 = vmul.f32 %v1084, %v2387
        %v2466 = vmul.f32 %v1087, %v2387
        %v2467 = vmul.f32 %v1090, %v2387
        %v2468 = vmul.f32 %v1093, %v2387
        %v2469 = vmul.f32 %v1096, %v2387
        %v2470 = vmul.f32 %v1099, %v2387
        %v2471 = vmul.f32 %v1102, %v2387
        %v2472 = vmul.f32 %v1105, %v2387
        %v2473 = vmul.f32 %v1108, %v2387
        %v2474 = vmul.f32 %v1111, %v2387
        %v2475 = vmul.f32 %v1114, %v2387
        %v2476 = vmul.f32 %v1117, %v2387
        %v2477 = vmul.f32 %v1120, %v2387
        %v2478 = vmul.f32 %v1123, %v2387
        %v2479 = vmul.f32 %v1126, %v2387
        %v2480 = vmul.f32 %v1129, %v2387
        %v2481 = vmul.f32 %v1132, %v2387
        %v2482 = vmul.f32 %v1135, %v2387
        %v2483 = vmul.f32 %v1138, %v2387
        %v2484 = vmul.f32 %v1141, %v2387
        %v2485 = vmul.f32 %v1144, %v2387
        %v2486 = vmul.f32 %v1147, %v2387
        %v2487 = vmul.f32 %v1150, %v2387
        %v2488 = vmul.f32 %v1153, %v2387
        %v2489 = vmul.f32 %v1156, %v2387
        %v2490 = vmul.f32 %v1159, %v2387
        %v2491 = vmul.f32 %v1162, %v2387
        %v2492 = vmul.f32 %v1165, %v2387
        %v2493 = vmul.f32 %v1168, %v2387
        %v2494 = vmul.f32 %v1171, %v2387
        %v2495 = vmul.f32 %v1174, %v2387
        %v2496 = vmul.f32 %v1177, %v2387
        %v2497 = vmul.f32 %v1180, %v2387
        %v2498 = vmul.f32 %v1183, %v2387
        %v2499 = vmul.f32 %v1186, %v2387
        %v2500 = vmul.f32 %v1189, %v2387
        %v2501 = vmul.f32 %v1192, %v2387
        %v2502 = vmul.f32 %v1195, %v2387
        %v2503 = vmul.f32 %v1198, %v2387
        %v2504 = vmul.f32 %v1201, %v2387
        %v2505 = vmul.f32 %v1204, %v2387
        %v2506 = vmul.f32 %v1207, %v2387
        %v2507 = vmul.f32 %v1210, %v2387
        %v2508 = vmul.f32 %v1213, %v2387
        %v2509 = vmul.f32 %v1216, %v2387
        %v2510 = vmul.f32 %v1219, %v2387
        %v2511 = vmul.f32 %v1222, %v2387
        %v2512 = vmul.f32 %v1225, %v2387
        %v2513 = vmul.f32 %v1228, %v2387
        %v2514 = vmul.f32 %v1231, %v2387
        %v2515 = vmul.f32 %v1234, %v2387
        %v2516 = vmul.f32 %v1237, %v2387
        %v2517 = vmul.f32 %v1240, %v2387
        %v2518 = vmul.f32 %v1243, %v2387
        %v2519 = vmul.f32 %v1246, %v2387
        %v2520 = vmul.f32 %v1249, %v2387
        %v2521 = vmul.f32 %v1252, %v2387
        %v2522 = vmul.f32 %v1255, %v2387
        %v2523 = vmul.f32 %v1258, %v2387
        %v2524 = vmul.f32 %v1261, %v2387
        %v2525 = vmul.f32 %v1264, %v2387
        %v2526 = vmul.f32 %v1267, %v2387
        %v2527 = vmul.f32 %v1270, %v2387
        %v2528 = vmul.f32 %v1273, %v2387
        %v2529 = vmul.f32 %v1276, %v2387
        %v2530 = vmul.f32 %v1279, %v2387
        %v2531 = vmul.f32 %v1282, %v2387
        %v2532 = vmul.f32 %v1285, %v2387
        %v2533 = vmul.f32 %v1288, %v2387
        %v2534 = vmul.f32 %v1291, %v2387
        %v2535 = vmul.f32 %v1294, %v2387
        %v2536 = vmul.f32 %v1297, %v2387
        %v2537 = vmul.f32 %v1300, %v2387
        %v2538 = vmul.f32 %v1303, %v2387
        %v2539 = vmul.f32 %v1306, %v2387
        %v2540 = vmul.f32 %v1309, %v2387
        %v2541 = vmul.f32 %v1312, %v2387
        %v2542 = vmul.f32 %v1315, %v2387
        %v2543 = vmul.f32 %v1318, %v2387
        %v2544 = vmul.f32 %v1321, %v2387
        %v2545 = vmul.f32 %v1324, %v2387
        %v2546 = vmul.f32 %v1327, %v2387
        %v2547 = vmul.f32 %v1330, %v2387
        %v2548 = vmul.f32 %v1333, %v2387
        %v2549 = vmul.f32 %v1336, %v2387
        %v2550 = vmul.f32 %v1339, %v2387
        %v2551 = vmul.f32 %v1342, %v2387
        %v2552 = vmul.f32 %v1345, %v2387
        %v2553 = vmul.f32 %v1348, %v2387
        %v2554 = vmul.f32 %v1351, %v2387
        %v2555 = vmul.f32 %v1354, %v2387
        %v2556 = vmul.f32 %v1357, %v2387
        %v2557 = vmul.f32 %v1360, %v2387
        %v2558 = vmul.f32 %v1363, %v2387
        %v2559 = vmul.f32 %v1366, %v2387
        %v2560 = vmul.f32 %v1369, %v2387
        %v2561 = vmul.f32 %v1372, %v2387
        %v2562 = vmul.f32 %v1375, %v2387
        %v2563 = vmul.f32 %v1378, %v2387
        %v2564 = vmul.f32 %v1381, %v2387
        %v2565 = vmul.f32 %v1384, %v2387
        %v2566 = vmul.f32 %v1387, %v2387
        %v2567 = vmul.f32 %v1390, %v2387
        %v2568 = vmul.f32 %v1393, %v2387
        %v2569 = vmul.f32 %v1396, %v2387
        %v2570 = vmul.f32 %v1399, %v2387
        %v2571 = vmul.f32 %v1402, %v2387
        %v2572 = vmul.f32 %v1405, %v2387
        %v2573 = vmul.f32 %v1408, %v2387
        %v2574 = vmul.f32 %v1411, %v2387
        %v2575 = vmul.f32 %v1414, %v2387
        %v2576 = vmul.f32 %v1417, %v2387
        %v2577 = vmul.f32 %v1420, %v2387
        %v2578 = vmul.f32 %v1423, %v2387
        %v2579 = vmul.f32 %v1426, %v2387
        %v2580 = vmul.f32 %v1429, %v2387
        %v2581 = vmul.f32 %v1432, %v2387
        %v2582 = vmul.f32 %v1435, %v2387
        %v2583 = vmul.f32 %v1438, %v2387
        %v2584 = vmul.f32 %v1441, %v2387
        %v2585 = vmul.f32 %v1444, %v2387
        %v2586 = vmul.f32 %v1447, %v2387
        %v2587 = vmul.f32 %v1450, %v2387
        %v2588 = vmul.f32 %v1453, %v2387
        %v2589 = vmul.f32 %v1456, %v2387
        %v2590 = vmul.f32 %v1459, %v2387
        %v2591 = vmul.f32 %v1462, %v2387
        %v2592 = vmul.f32 %v1465, %v2387
        %v2593 = vmul.f32 %v1468, %v2387
        %v2594 = vmul.f32 %v1471, %v2387
        %v2595 = vmul.f32 %v1474, %v2387
        %v2596 = vmul.f32 %v1477, %v2387
        %v2597 = vmul.f32 %v1480, %v2387
        %v2598 = vmul.f32 %v1483, %v2387
        %v2599 = vmul.f32 %v1486, %v2387
        %v2600 = vmul.f32 %v1489, %v2387
        %v2601 = vmul.f32 %v1492, %v2387
        %v2602 = vmul.f32 %v1495, %v2387
        %v2603 = vmul.f32 %v1498, %v2387
        %v2604 = vmul.f32 %v1501, %v2387
        %v2605 = vmul.f32 %v1504, %v2387
        %v2606 = vmul.f32 %v1507, %v2387
        %v2607 = vmul.f32 %v1510, %v2387
        %v2608 = vmul.f32 %v1513, %v2387
        %v2609 = vmul.f32 %v1516, %v2387
        %v2610 = vmul.f32 %v1519, %v2387
        %v2611 = vmul.f32 %v1522, %v2387
        %v2612 = vmul.f32 %v1525, %v2387
        %v2613 = vmul.f32 %v1528, %v2387
        %v2614 = vmul.f32 %v1531, %v2387
        %v2615 = vmul.f32 %v1534, %v2387
        %v2616 = vmul.f32 %v1537, %v2387
        %v2617 = vmul.f32 %v1540, %v2387
        %v2618 = vmul.f32 %v1543, %v2387
        %v2619 = vmul.f32 %v1546, %v2387
        %v2620 = vmul.f32 %v1549, %v2387
        %v2621 = vmul.f32 %v1552, %v2387
        %v2622 = vmul.f32 %v1555, %v2387
        %v2623 = vmul.f32 %v1558, %v2387
        %v2624 = vmul.f32 %v1561, %v2387
        %v2625 = vmul.f32 %v1564, %v2387
        %v2626 = vmul.f32 %v1567, %v2387
        %v2627 = vmul.f32 %v1570, %v2387
        %v2628 = vmul.f32 %v1573, %v2387
        %v2629 = vmul.f32 %v1576, %v2387
        %v2630 = vmul.f32 %v1579, %v2387
        %v2631 = vmul.f32 %v1582, %v2387
        %v2632 = vmul.f32 %v1585, %v2387
        %v2633 = vmul.f32 %v1588, %v2387
        %v2634 = vmul.f32 %v1591, %v2387
        %v2635 = vmul.f32 %v1594, %v2387
        %v2636 = vmul.f32 %v1597, %v2387
        %v2637 = vmul.f32 %v1600, %v2387
        %v2638 = vmul.f32 %v1603, %v2387
        %v2639 = vmul.f32 %v1606, %v2387
        %v2640 = vmul.f32 %v1609, %v2387
        %v2641 = vmul.f32 %v1612, %v2387
        %v2642 = vmul.f32 %v1615, %v2387
        %v2643 = vmul.f32 %v1618, %v2387
        %v2644 = vmul.f32 %v1621, %v2387
        %v2645 = vmul.f32 %v1624, %v2387
        %v2646 = vmul.f32 %v1627, %v2387
        %v2647 = vmul.f32 %v1630, %v2387
        %v2648 = vmul.f32 %v1633, %v2387
        %v2649 = vmul.f32 %v1636, %v2387
        %v2650 = vmul.f32 %v1639, %v2387
        %v2651 = vmul.f32 %v1642, %v2387
        %v2652 = vmul.f32 %v1645, %v2387
        %v2653 = vmul.f32 %v1648, %v2387
        %v2654 = vmul.f32 %v1651, %v2387
        %v2655 = vmul.f32 %v1654, %v2387
        %v2656 = vmul.f32 %v1657, %v2387
        %v2657 = vmul.f32 %v1660, %v2387
        %v2658 = vmul.f32 %v1663, %v2387
        %v2659 = vmul.f32 %v1666, %v2387
        %v2660 = vmul.f32 %v1669, %v2387
        %v2661 = vmul.f32 %v1672, %v2387
        %v2662 = vmul.f32 %v1675, %v2387
        %v2663 = vmul.f32 %v1678, %v2387
        %v2664 = vmul.f32 %v1681, %v2387
        %v2665 = vmul.f32 %v1684, %v2387
        %v2666 = vmul.f32 %v1687, %v2387
        %v2667 = vmul.f32 %v1690, %v2387
        %v2668 = vmul.f32 %v1693, %v2387
        %v2669 = vmul.f32 %v1696, %v2387
        %v2670 = vmul.f32 %v1699, %v2387
        %v2671 = vmul.f32 %v1702, %v2387
        %v2672 = vmul.f32 %v1705, %v2387
        %v2673 = vmul.f32 %v1708, %v2387
        %v2674 = vmul.f32 %v1711, %v2387
        %v2675 = vmul.f32 %v1714, %v2387
        %v2676 = vmul.f32 %v1717, %v2387
        %v2677 = vmul.f32 %v1720, %v2387
        %v2678 = vmul.f32 %v1723, %v2387
        %v2679 = vmul.f32 %v1726, %v2387
        %v2680 = vmul.f32 %v1729, %v2387
        %v2681 = vmul.f32 %v1732, %v2387
        %v2682 = vmul.f32 %v1735, %v2387
        %v2683 = vmul.f32 %v1738, %v2387
        %v2684 = vmul.f32 %v1741, %v2387
        %v2685 = vmul.f32 %v1744, %v2387
        %v2686 = vmul.f32 %v1747, %v2387
        %v2687 = vmul.f32 %v1750, %v2387
        %v2688 = vmul.f32 %v1753, %v2387
        %v2689 = vmul.f32 %v1756, %v2387
        %v2690 = vmul.f32 %v1759, %v2387
        %v2691 = vmul.f32 %v1762, %v2387
        %v2692 = vmul.f32 %v1765, %v2387
        %v2693 = vmul.f32 %v1768, %v2387
        %v2694 = vmul.f32 %v1771, %v2387
        %v2695 = vmul.f32 %v1774, %v2387
        %v2696 = vmul.f32 %v1777, %v2387
        %v2697 = vmul.f32 %v1780, %v2387
        %v2698 = vmul.f32 %v1783, %v2387
        %v2699 = vmul.f32 %v1786, %v2387
        %v2700 = vmul.f32 %v1789, %v2387
        %v2701 = vmul.f32 %v1792, %v2387
        %v2702 = vmul.f32 %v1795, %v2387
        %v2703 = vmul.f32 %v1798, %v2387
        %v2704 = vmul.f32 %v1801, %v2387
        %v2705 = vmul.f32 %v1804, %v2387
        %v2706 = vmul.f32 %v1807, %v2387
        %v2707 = vmul.f32 %v1810, %v2387
        %v2708 = vmul.f32 %v1813, %v2387
        %v2709 = vmul.f32 %v1816, %v2387
        %v2710 = vmul.f32 %v1819, %v2387
        %v2711 = vmul.f32 %v1822, %v2387
        %v2712 = vmul.f32 %v1825, %v2387
        %v2713 = vmul.f32 %v1828, %v2387
        %v2714 = vmul.f32 %v1831, %v2387
        %v2715 = vmul.f32 %v1834, %v2387
        %v2716 = vmul.f32 %v1837, %v2387
        %v2717 = vmul.f32 %v1840, %v2387
        %v2718 = vmul.f32 %v1843, %v2387
        %v2719 = vmul.f32 %v1846, %v2387
        %v2720 = vmul.f32 %v1849, %v2387
        %v2721 = vmul.f32 %v1852, %v2387
        %v2722 = vmul.f32 %v1855, %v2387
        %v2723 = vmul.f32 %v1858, %v2387
        %v2724 = vmul.f32 %v1861, %v2387
        %v2725 = vmul.f32 %v1864, %v2387
        %v2726 = vmul.f32 %v1867, %v2387
        %v2727 = vmul.f32 %v1870, %v2387
        %v2728 = vmul.f32 %v1873, %v2387
        %v2729 = vmul.f32 %v1876, %v2387
        %v2730 = vmul.f32 %v1879, %v2387
        %v2731 = vmul.f32 %v1882, %v2387
        %v2732 = vmul.f32 %v1885, %v2387
        %v2733 = vmul.f32 %v1888, %v2387
        %v2734 = vmul.f32 %v1891, %v2387
        %v2735 = vmul.f32 %v1894, %v2387
        %v2736 = vmul.f32 %v1897, %v2387
        %v2737 = vmul.f32 %v1900, %v2387
        %v2738 = vmul.f32 %v1903, %v2387
        %v2739 = vmul.f32 %v1906, %v2387
        %v2740 = vmul.f32 %v1909, %v2387
        %v2741 = vmul.f32 %v1912, %v2387
        %v2742 = vmul.f32 %v1915, %v2387
        %v2743 = vmul.f32 %v1918, %v2387
        %v2744 = vmul.f32 %v1921, %v2387
        %v2745 = vmul.f32 %v1924, %v2387
        %v2746 = vmul.f32 %v1927, %v2387
        %v2747 = vmul.f32 %v1930, %v2387
        %v2748 = vmul.f32 %v1933, %v2387
        %v2749 = vmul.f32 %v1936, %v2387
        %v2750 = vmul.f32 %v1939, %v2387
        %v2751 = vmul.f32 %v1942, %v2387
        %v2752 = vmul.f32 %v1945, %v2387
        %v2753 = vmul.f32 %v1948, %v2387
        %v2754 = vmul.f32 %v1951, %v2387
        %v2755 = vmul.f32 %v1954, %v2387
        %v2756 = vmul.f32 %v1957, %v2387
        %v2757 = vmul.f32 %v1960, %v2387
        %v2758 = vmul.f32 %v1963, %v2387
        %v2759 = vmul.f32 %v1966, %v2387
        %v2760 = vmul.f32 %v1969, %v2387
        %v2761 = vmul.f32 %v1972, %v2387
        %v2762 = vmul.f32 %v1975, %v2387
        %v2763 = vmul.f32 %v1978, %v2387
        %v2764 = vmul.f32 %v1981, %v2387
        %v2765 = vmul.f32 %v1984, %v2387
        %v2766 = vmul.f32 %v1987, %v2387
        %v2767 = vmul.f32 %v1990, %v2387
        %v2768 = vmul.f32 %v1993, %v2387
        %v2769 = vmul.f32 %v1996, %v2387
        %v2770 = vmul.f32 %v1999, %v2387
        %v2771 = vmul.f32 %v2002, %v2387
        %v2772 = vmul.f32 %v2005, %v2387
        %v2773 = vmul.f32 %v2008, %v2387
        %v2774 = vmul.f32 %v2011, %v2387
        %v2775 = vmul.f32 %v2014, %v2387
        %v2776 = vmul.f32 %v2017, %v2387
        %v2777 = vmul.f32 %v2020, %v2387
        %v2778 = vmul.f32 %v2023, %v2387
        %v2779 = vmul.f32 %v2026, %v2387
        %v2780 = vmul.f32 %v2029, %v2387
        %v2781 = vmul.f32 %v2032, %v2387
        %v2782 = vmul.f32 %v2035, %v2387
        %v2783 = vmul.f32 %v2038, %v2387
        %v2784 = vmul.f32 %v2041, %v2387
        %v2785 = vmul.f32 %v2044, %v2387
        %v2786 = vmul.f32 %v2047, %v2387
        %v2787 = vmul.f32 %v2050, %v2387
        %v2788 = vmul.f32 %v2053, %v2387
        %v2789 = vmul.f32 %v2056, %v2387
        %v2790 = vmul.f32 %v2059, %v2387
        %v2791 = vmul.f32 %v2062, %v2387
        %v2792 = vmul.f32 %v2065, %v2387
        %v2793 = vmul.f32 %v2068, %v2387
        %v2794 = vmul.f32 %v2071, %v2387
        %v2795 = vmul.f32 %v2074, %v2387
        %v2796 = vmul.f32 %v2077, %v2387
        %v2797 = vmul.f32 %v2080, %v2387
        %v2798 = vmul.f32 %v2083, %v2387
        %v2799 = vmul.f32 %v2086, %v2387
        %v2800 = vmul.f32 %v2089, %v2387
        %v2801 = vmul.f32 %v2092, %v2387
        %v2802 = vmul.f32 %v2095, %v2387
        %v2803 = vmul.f32 %v2098, %v2387
        %v2804 = vmul.f32 %v2101, %v2387
        %v2805 = vmul.f32 %v2104, %v2387
        %v2806 = vmul.f32 %v2107, %v2387
        %v2807 = vmul.f32 %v2110, %v2387
        %v2808 = vmul.f32 %v2113, %v2387
        %v2809 = vmul.f32 %v2116, %v2387
        %v2810 = vmul.f32 %v2119, %v2387
        %v2811 = vmul.f32 %v2122, %v2387
        %v2812 = vmul.f32 %v2125, %v2387
        %v2813 = vmul.f32 %v2128, %v2387
        %v2814 = vmul.f32 %v2131, %v2387
        %v2815 = vmul.f32 %v2134, %v2387
        %v2816 = vmul.f32 %v2137, %v2387
        %v2817 = vmul.f32 %v2140, %v2387
        %v2818 = vmul.f32 %v2143, %v2387
        %v2819 = vmul.f32 %v2146, %v2387
        %v2820 = vmul.f32 %v2149, %v2387
        %v2821 = vmul.f32 %v2152, %v2387
        %v2822 = vmul.f32 %v2155, %v2387
        %v2823 = vmul.f32 %v2158, %v2387
        %v2824 = vmul.f32 %v2161, %v2387
        %v2825 = vmul.f32 %v2164, %v2387
        %v2826 = vmul.f32 %v2167, %v2387
        %v2827 = vmul.f32 %v2170, %v2387
        %v2828 = vmul.f32 %v2173, %v2387
        %v2829 = vmul.f32 %v2176, %v2387
        %v2830 = vmul.f32 %v2179, %v2387
        %v2831 = vmul.f32 %v2182, %v2387
        %v2832 = vmul.f32 %v2185, %v2387
        %v2833 = vmul.f32 %v2188, %v2387
        %v2834 = vmul.f32 %v2191, %v2387
        %v2835 = vmul.f32 %v2194, %v2387
        %v2836 = vmul.f32 %v2197, %v2387
        %v2837 = vmul.f32 %v2200, %v2387
        %v2838 = vmul.f32 %v2203, %v2387
        %v2839 = vmul.f32 %v2206, %v2387
        %v2840 = vmul.f32 %v2209, %v2387
        %v2841 = vmul.f32 %v2212, %v2387
        %v2842 = vmul.f32 %v2215, %v2387
        %v2843 = vmul.f32 %v2218, %v2387
        %v2844 = vmul.f32 %v2221, %v2387
        %v2845 = vmul.f32 %v2224, %v2387
        %v2846 = vmul.f32 %v2227, %v2387
        %v2847 = vmul.f32 %v2230, %v2387
        %v2848 = vmul.f32 %v2233, %v2387
        %v2849 = vmul.f32 %v2236, %v2387
        %v2850 = vmul.f32 %v2239, %v2387
        %v2851 = vmul.f32 %v2242, %v2387
        %v2852 = vmul.f32 %v2245, %v2387
        %v2853 = vmul.f32 %v2248, %v2387
        %v2854 = vmul.f32 %v2251, %v2387
        %v2855 = vmul.f32 %v2254, %v2387
        %v2856 = vmul.f32 %v2257, %v2387
        %v2857 = vmul.f32 %v2260, %v2387
        %v2858 = vmul.f32 %v2263, %v2387
        %v2859 = vmul.f32 %v2266, %v2387
        %v2860 = vmul.f32 %v2269, %v2387
        %v2861 = vmul.f32 %v2272, %v2387
        %v2862 = vmul.f32 %v2275, %v2387
        %v2863 = vmul.f32 %v2278, %v2387
        %v2864 = vmul.f32 %v2281, %v2387
        %v2865 = vmul.f32 %v2284, %v2387
        %v2866 = vmul.f32 %v2287, %v2387
        %v2867 = vmul.f32 %v2290, %v2387
        %v2868 = vmul.f32 %v2293, %v2387
        %v2869 = vmul.f32 %v2296, %v2387
        %v2870 = vmul.f32 %v2299, %v2387
        %v2871 = vmul.f32 %v2302, %v2387
        %v2872 = vmul.f32 %v2305, %v2387
        %v2873 = vmul.f32 %v2308, %v2387
        %v2874 = vmul.f32 %v2311, %v2387
        %v2875 = vmul.f32 %v2314, %v2387
        %v2876 = vmul.f32 %v2317, %v2387
        %v2877 = vmul.f32 %v2320, %v2387
        %v2878 = vmul.f32 %v2323, %v2387
        %v2879 = vmul.f32 %v2326, %v2387
        %v2880 = vmul.f32 %v2329, %v2387
        %v2881 = vmul.f32 %v2332, %v2387
        %v2882 = vmul.f32 %v2335, %v2387
        %v2883 = vmul.f32 %v2338, %v2387
        %v2884 = vmul.f32 %v2341, %v2387
        %v2885 = vmul.f32 %v2344, %v2387
        %v2886 = vmul.f32 %v2347, %v2387
        %v2887 = vmul.f32 %v2350, %v2387
        %v2888 = vmul.f32 %v2353, %v2387
        %v2889 = vmul.f32 %v2356, %v2387
        %v2890 = vmul.f32 %v2359, %v2387
        %v2891 = vmul.f32 %v2362, %v2387
        %v2892 = vmul.f32 %v2365, %v2387
        %v2893 = vmul.f32 %v2368, %v2387
        %v2894 = vmul.f32 %v2371, %v2387
        %v2895 = vmul.f32 %v2374, %v2387
        %v2896 = vmul.f32 %v2377, %v2387
        %v2897 = vmul.f32 %v2380, %v2387
        %v2898 = vmul.f32 %v2383, %v2387
        %v2899 = vmul.f32 %v2386, %v2387
        %s2900 = sld [smem:[#allocation2]]
        %s2901 = sld [smem:[#allocation3]]
        %v2902 = vld [vmem:[%s1] sm:$0xff]
        %v2903 = vld [vmem:[%s1 + $0x8] sm:$0xff]
        %v2904 = vld [vmem:[%s1 + $0x10] sm:$0xff]
        %v2905 = vld [vmem:[%s1 + $0x18] sm:$0xff]
        %v2906 = vld [vmem:[%s1 + $0x20] sm:$0xff]
        %v2907 = vld [vmem:[%s1 + $0x28] sm:$0xff]
        %v2908 = vld [vmem:[%s1 + $0x30] sm:$0xff]
        %v2909 = vld [vmem:[%s1 + $0x38] sm:$0xff]
        %v2910 = vld [vmem:[%s1 + $0x40] sm:$0xff]
        %v2911 = vld [vmem:[%s1 + $0x48] sm:$0xff]
        %v2912 = vld [vmem:[%s1 + $0x50] sm:$0xff]
        %v2913 = vld [vmem:[%s1 + $0x58] sm:$0xff]
        %v2914 = vld [vmem:[%s1 + $0x60] sm:$0xff]
        %v2915 = vld [vmem:[%s1 + $0x68] sm:$0xff]
        %v2916 = vld [vmem:[%s1 + $0x70] sm:$0xff]
        %v2917 = vld [vmem:[%s1 + $0x78] sm:$0xff]
        %v2918 = vld [vmem:[%s1 + $0x80] sm:$0xff]
        %v2919 = vld [vmem:[%s1 + $0x88] sm:$0xff]
        %v2920 = vld [vmem:[%s1 + $0x90] sm:$0xff]
        %v2921 = vld [vmem:[%s1 + $0x98] sm:$0xff]
        %v2922 = vld [vmem:[%s1 + $0xa0] sm:$0xff]
        %v2923 = vld [vmem:[%s1 + $0xa8] sm:$0xff]
        %v2924 = vld [vmem:[%s1 + $0xb0] sm:$0xff]
        %v2925 = vld [vmem:[%s1 + $0xb8] sm:$0xff]
        %v2926 = vld [vmem:[%s1 + $0xc0] sm:$0xff]
        %v2927 = vld [vmem:[%s1 + $0xc8] sm:$0xff]
        %v2928 = vld [vmem:[%s1 + $0xd0] sm:$0xff]
        %v2929 = vld [vmem:[%s1 + $0xd8] sm:$0xff]
        %v2930 = vld [vmem:[%s1 + $0xe0] sm:$0xff]
        %v2931 = vld [vmem:[%s1 + $0xe8] sm:$0xff]
        %v2932 = vld [vmem:[%s1 + $0xf0] sm:$0xff]
        %v2933 = vld [vmem:[%s1 + $0xf8] sm:$0xff]
        %v2934 = vld [vmem:[%s1 + $0x100] sm:$0xff]
        %v2935 = vld [vmem:[%s1 + $0x108] sm:$0xff]
        %v2936 = vld [vmem:[%s1 + $0x110] sm:$0xff]
        %v2937 = vld [vmem:[%s1 + $0x118] sm:$0xff]
        %v2938 = vld [vmem:[%s1 + $0x120] sm:$0xff]
        %v2939 = vld [vmem:[%s1 + $0x128] sm:$0xff]
        %v2940 = vld [vmem:[%s1 + $0x130] sm:$0xff]
        %v2941 = vld [vmem:[%s1 + $0x138] sm:$0xff]
        %v2942 = vld [vmem:[%s1 + $0x140] sm:$0xff]
        %v2943 = vld [vmem:[%s1 + $0x148] sm:$0xff]
        %v2944 = vld [vmem:[%s1 + $0x150] sm:$0xff]
        %v2945 = vld [vmem:[%s1 + $0x158] sm:$0xff]
        %v2946 = vld [vmem:[%s1 + $0x160] sm:$0xff]
        %v2947 = vld [vmem:[%s1 + $0x168] sm:$0xff]
        %v2948 = vld [vmem:[%s1 + $0x170] sm:$0xff]
        %v2949 = vld [vmem:[%s1 + $0x178] sm:$0xff]
        %v2950 = vld [vmem:[%s1 + $0x180] sm:$0xff]
        %v2951 = vld [vmem:[%s1 + $0x188] sm:$0xff]
        %v2952 = vld [vmem:[%s1 + $0x190] sm:$0xff]
        %v2953 = vld [vmem:[%s1 + $0x198] sm:$0xff]
        %v2954 = vld [vmem:[%s1 + $0x1a0] sm:$0xff]
        %v2955 = vld [vmem:[%s1 + $0x1a8] sm:$0xff]
        %v2956 = vld [vmem:[%s1 + $0x1b0] sm:$0xff]
        %v2957 = vld [vmem:[%s1 + $0x1b8] sm:$0xff]
        %v2958 = vld [vmem:[%s1 + $0x1c0] sm:$0xff]
        %v2959 = vld [vmem:[%s1 + $0x1c8] sm:$0xff]
        %v2960 = vld [vmem:[%s1 + $0x1d0] sm:$0xff]
        %v2961 = vld [vmem:[%s1 + $0x1d8] sm:$0xff]
        %v2962 = vld [vmem:[%s1 + $0x1e0] sm:$0xff]
        %v2963 = vld [vmem:[%s1 + $0x1e8] sm:$0xff]
        %v2964 = vld [vmem:[%s1 + $0x1f0] sm:$0xff]
        %v2965 = vld [vmem:[%s1 + $0x1f8] sm:$0xff]
        %v2966 = vld [vmem:[%s1 + $0x200] sm:$0xff]
        %v2967 = vld [vmem:[%s1 + $0x208] sm:$0xff]
        %v2968 = vld [vmem:[%s1 + $0x210] sm:$0xff]
        %v2969 = vld [vmem:[%s1 + $0x218] sm:$0xff]
        %v2970 = vld [vmem:[%s1 + $0x220] sm:$0xff]
        %v2971 = vld [vmem:[%s1 + $0x228] sm:$0xff]
        %v2972 = vld [vmem:[%s1 + $0x230] sm:$0xff]
        %v2973 = vld [vmem:[%s1 + $0x238] sm:$0xff]
        %v2974 = vld [vmem:[%s1 + $0x240] sm:$0xff]
        %v2975 = vld [vmem:[%s1 + $0x248] sm:$0xff]
        %v2976 = vld [vmem:[%s1 + $0x250] sm:$0xff]
        %v2977 = vld [vmem:[%s1 + $0x258] sm:$0xff]
        %v2978 = vld [vmem:[%s1 + $0x260] sm:$0xff]
        %v2979 = vld [vmem:[%s1 + $0x268] sm:$0xff]
        %v2980 = vld [vmem:[%s1 + $0x270] sm:$0xff]
        %v2981 = vld [vmem:[%s1 + $0x278] sm:$0xff]
        %v2982 = vld [vmem:[%s1 + $0x280] sm:$0xff]
        %v2983 = vld [vmem:[%s1 + $0x288] sm:$0xff]
        %v2984 = vld [vmem:[%s1 + $0x290] sm:$0xff]
        %v2985 = vld [vmem:[%s1 + $0x298] sm:$0xff]
        %v2986 = vld [vmem:[%s1 + $0x2a0] sm:$0xff]
        %v2987 = vld [vmem:[%s1 + $0x2a8] sm:$0xff]
        %v2988 = vld [vmem:[%s1 + $0x2b0] sm:$0xff]
        %v2989 = vld [vmem:[%s1 + $0x2b8] sm:$0xff]
        %v2990 = vld [vmem:[%s1 + $0x2c0] sm:$0xff]
        %v2991 = vld [vmem:[%s1 + $0x2c8] sm:$0xff]
        %v2992 = vld [vmem:[%s1 + $0x2d0] sm:$0xff]
        %v2993 = vld [vmem:[%s1 + $0x2d8] sm:$0xff]
        %v2994 = vld [vmem:[%s1 + $0x2e0] sm:$0xff]
        %v2995 = vld [vmem:[%s1 + $0x2e8] sm:$0xff]
        %v2996 = vld [vmem:[%s1 + $0x2f0] sm:$0xff]
        %v2997 = vld [vmem:[%s1 + $0x2f8] sm:$0xff]
        %v2998 = vld [vmem:[%s1 + $0x300] sm:$0xff]
        %v2999 = vld [vmem:[%s1 + $0x308] sm:$0xff]
        %v3000 = vld [vmem:[%s1 + $0x310] sm:$0xff]
        %v3001 = vld [vmem:[%s1 + $0x318] sm:$0xff]
        %v3002 = vld [vmem:[%s1 + $0x320] sm:$0xff]
        %v3003 = vld [vmem:[%s1 + $0x328] sm:$0xff]
        %v3004 = vld [vmem:[%s1 + $0x330] sm:$0xff]
        %v3005 = vld [vmem:[%s1 + $0x338] sm:$0xff]
        %v3006 = vld [vmem:[%s1 + $0x340] sm:$0xff]
        %v3007 = vld [vmem:[%s1 + $0x348] sm:$0xff]
        %v3008 = vld [vmem:[%s1 + $0x350] sm:$0xff]
        %v3009 = vld [vmem:[%s1 + $0x358] sm:$0xff]
        %v3010 = vld [vmem:[%s1 + $0x360] sm:$0xff]
        %v3011 = vld [vmem:[%s1 + $0x368] sm:$0xff]
        %v3012 = vld [vmem:[%s1 + $0x370] sm:$0xff]
        %v3013 = vld [vmem:[%s1 + $0x378] sm:$0xff]
        %v3014 = vld [vmem:[%s1 + $0x380] sm:$0xff]
        %v3015 = vld [vmem:[%s1 + $0x388] sm:$0xff]
        %v3016 = vld [vmem:[%s1 + $0x390] sm:$0xff]
        %v3017 = vld [vmem:[%s1 + $0x398] sm:$0xff]
        %v3018 = vld [vmem:[%s1 + $0x3a0] sm:$0xff]
        %v3019 = vld [vmem:[%s1 + $0x3a8] sm:$0xff]
        %v3020 = vld [vmem:[%s1 + $0x3b0] sm:$0xff]
        %v3021 = vld [vmem:[%s1 + $0x3b8] sm:$0xff]
        %v3022 = vld [vmem:[%s1 + $0x3c0] sm:$0xff]
        %v3023 = vld [vmem:[%s1 + $0x3c8] sm:$0xff]
        %v3024 = vld [vmem:[%s1 + $0x3d0] sm:$0xff]
        %v3025 = vld [vmem:[%s1 + $0x3d8] sm:$0xff]
        %v3026 = vld [vmem:[%s1 + $0x3e0] sm:$0xff]
        %v3027 = vld [vmem:[%s1 + $0x3e8] sm:$0xff]
        %v3028 = vld [vmem:[%s1 + $0x3f0] sm:$0xff]
        %v3029 = vld [vmem:[%s1 + $0x3f8] sm:$0xff]
        %v3030 = vld [vmem:[%s2] sm:$0x3]
        %v3032 = vlaneseq
        %v3033 = vshrl.u32 %v3032, 7
        %v3034 = vsub.s32 0, %v3033
        %v3035 = vrot.slane %v3030, %v3034
        %v3036 = vlaneseq
        %v3037 = vshrl.u32 %v3036, 7
        %v3038 = vsub.s32 1, %v3037
        %v3039 = vrot.slane %v3030, %v3038
        %v3554 = vlaneseq
        %v3555 = vand.u32 %v3554, 127
        %v3556 = vlaneseq
        %v3557 = vshrl.u32 %v3556, 7
        %v3558 = vsub.s32 %v3555, %v3557
        %v3559 = vrot.slane %v2388, %v3558
        %v3560 = vadd.s32 %v3555, 4294967288
        %v3561 = vlaneseq
        %v3562 = vshrl.u32 %v3561, 7
        %v3563 = vsub.s32 %v3560, %v3562
        %v3564 = vrot.slane %v2389, %v3563
        %vm3565 = vcmask 130112
        %v3566 = vsel %vm3565, %v3564, %v3559
        %v3567 = vadd.s32 %v3555, 4294967280
        %v3568 = vlaneseq
        %v3569 = vshrl.u32 %v3568, 7
        %v3570 = vsub.s32 %v3567, %v3569
        %v3571 = vrot.slane %v2390, %v3570
        %vm3572 = vcmask 195712
        %v3573 = vsel %vm3572, %v3571, %v3566
        %v3574 = vadd.s32 %v3555, 4294967272
        %v3575 = vlaneseq
        %v3576 = vshrl.u32 %v3575, 7
        %v3577 = vsub.s32 %v3574, %v3576
        %v3578 = vrot.slane %v2391, %v3577
        %vm3579 = vcmask 261312
        %v3580 = vsel %vm3579, %v3578, %v3573
        %v3581 = vadd.s32 %v3555, 4294967264
        %v3582 = vlaneseq
        %v3583 = vshrl.u32 %v3582, 7
        %v3584 = vsub.s32 %v3581, %v3583
        %v3585 = vrot.slane %v2392, %v3584
        %vm3586 = vcmask 326912
        %v3587 = vsel %vm3586, %v3585, %v3580
        %v3588 = vadd.s32 %v3555, 4294967256
        %v3589 = vlaneseq
        %v3590 = vshrl.u32 %v3589, 7
        %v3591 = vsub.s32 %v3588, %v3590
        %v3592 = vrot.slane %v2393, %v3591
        %vm3593 = vcmask 392512
        %v3594 = vsel %vm3593, %v3592, %v3587
        %v3595 = vadd.s32 %v3555, 4294967248
        %v3596 = vlaneseq
        %v3597 = vshrl.u32 %v3596, 7
        %v3598 = vsub.s32 %v3595, %v3597
        %v3599 = vrot.slane %v2394, %v3598
        %vm3600 = vcmask 458112
        %v3601 = vsel %vm3600, %v3599, %v3594
        %v3602 = vadd.s32 %v3555, 4294967240
        %v3603 = vlaneseq
        %v3604 = vshrl.u32 %v3603, 7
        %v3605 = vsub.s32 %v3602, %v3604
        %v3606 = vrot.slane %v2395, %v3605
        %vm3607 = vcmask 523712
        %v3608 = vsel %vm3607, %v3606, %v3601
        %v3609 = vadd.s32 %v3555, 4294967232
        %v3610 = vlaneseq
        %v3611 = vshrl.u32 %v3610, 7
        %v3612 = vsub.s32 %v3609, %v3611
        %v3613 = vrot.slane %v2396, %v3612
        %vm3614 = vcmask 589312
        %v3615 = vsel %vm3614, %v3613, %v3608
        %v3616 = vadd.s32 %v3555, 4294967224
        %v3617 = vlaneseq
        %v3618 = vshrl.u32 %v3617, 7
        %v3619 = vsub.s32 %v3616, %v3618
        %v3620 = vrot.slane %v2397, %v3619
        %vm3621 = vcmask 654912
        %v3622 = vsel %vm3621, %v3620, %v3615
        %v3623 = vadd.s32 %v3555, 4294967216
        %v3624 = vlaneseq
        %v3625 = vshrl.u32 %v3624, 7
        %v3626 = vsub.s32 %v3623, %v3625
        %v3627 = vrot.slane %v2398, %v3626
        %vm3628 = vcmask 720512
        %v3629 = vsel %vm3628, %v3627, %v3622
        %v3630 = vadd.s32 %v3555, 4294967208
        %v3631 = vlaneseq
        %v3632 = vshrl.u32 %v3631, 7
        %v3633 = vsub.s32 %v3630, %v3632
        %v3634 = vrot.slane %v2399, %v3633
        %vm3635 = vcmask 786112
        %v3636 = vsel %vm3635, %v3634, %v3629
        %v3637 = vadd.s32 %v3555, 4294967200
        %v3638 = vlaneseq
        %v3639 = vshrl.u32 %v3638, 7
        %v3640 = vsub.s32 %v3637, %v3639
        %v3641 = vrot.slane %v2400, %v3640
        %vm3642 = vcmask 851712
        %v3643 = vsel %vm3642, %v3641, %v3636
        %v3644 = vadd.s32 %v3555, 4294967192
        %v3645 = vlaneseq
        %v3646 = vshrl.u32 %v3645, 7
        %v3647 = vsub.s32 %v3644, %v3646
        %v3648 = vrot.slane %v2401, %v3647
        %vm3649 = vcmask 917312
        %v3650 = vsel %vm3649, %v3648, %v3643
        %v3651 = vadd.s32 %v3555, 4294967184
        %v3652 = vlaneseq
        %v3653 = vshrl.u32 %v3652, 7
        %v3654 = vsub.s32 %v3651, %v3653
        %v3655 = vrot.slane %v2402, %v3654
        %vm3656 = vcmask 982912
        %v3657 = vsel %vm3656, %v3655, %v3650
        %v3658 = vadd.s32 %v3555, 4294967176
        %v3659 = vlaneseq
        %v3660 = vshrl.u32 %v3659, 7
        %v3661 = vsub.s32 %v3658, %v3660
        %v3662 = vrot.slane %v2403, %v3661
        %vm3663 = vcmask 1048512
        %v3664 = vsel %vm3663, %v3662, %v3657
        %v3665 = vlaneseq
        %v3666 = vshrl.u32 %v3665, 7
        %v3667 = vsub.s32 %v3555, %v3666
        %v3668 = vrot.slane %v2404, %v3667
        %v3669 = vlaneseq
        %v3670 = vshrl.u32 %v3669, 7
        %v3671 = vsub.s32 %v3560, %v3670
        %v3672 = vrot.slane %v2405, %v3671
        %v3673 = vsel %vm3565, %v3672, %v3668
        %v3674 = vlaneseq
        %v3675 = vshrl.u32 %v3674, 7
        %v3676 = vsub.s32 %v3567, %v3675
        %v3677 = vrot.slane %v2406, %v3676
        %v3678 = vsel %vm3572, %v3677, %v3673
        %v3679 = vlaneseq
        %v3680 = vshrl.u32 %v3679, 7
        %v3681 = vsub.s32 %v3574, %v3680
        %v3682 = vrot.slane %v2407, %v3681
        %v3683 = vsel %vm3579, %v3682, %v3678
        %v3684 = vlaneseq
        %v3685 = vshrl.u32 %v3684, 7
        %v3686 = vsub.s32 %v3581, %v3685
        %v3687 = vrot.slane %v2408, %v3686
        %v3688 = vsel %vm3586, %v3687, %v3683
        %v3689 = vlaneseq
        %v3690 = vshrl.u32 %v3689, 7
        %v3691 = vsub.s32 %v3588, %v3690
        %v3692 = vrot.slane %v2409, %v3691
        %v3693 = vsel %vm3593, %v3692, %v3688
        %v3694 = vlaneseq
        %v3695 = vshrl.u32 %v3694, 7
        %v3696 = vsub.s32 %v3595, %v3695
        %v3697 = vrot.slane %v2410, %v3696
        %v3698 = vsel %vm3600, %v3697, %v3693
        %v3699 = vlaneseq
        %v3700 = vshrl.u32 %v3699, 7
        %v3701 = vsub.s32 %v3602, %v3700
        %v3702 = vrot.slane %v2411, %v3701
        %v3703 = vsel %vm3607, %v3702, %v3698
        %v3704 = vlaneseq
        %v3705 = vshrl.u32 %v3704, 7
        %v3706 = vsub.s32 %v3609, %v3705
        %v3707 = vrot.slane %v2412, %v3706
        %v3708 = vsel %vm3614, %v3707, %v3703
        %v3709 = vlaneseq
        %v3710 = vshrl.u32 %v3709, 7
        %v3711 = vsub.s32 %v3616, %v3710
        %v3712 = vrot.slane %v2413, %v3711
        %v3713 = vsel %vm3621, %v3712, %v3708
        %v3714 = vlaneseq
        %v3715 = vshrl.u32 %v3714, 7
        %v3716 = vsub.s32 %v3623, %v3715
        %v3717 = vrot.slane %v2414, %v3716
        %v3718 = vsel %vm3628, %v3717, %v3713
        %v3719 = vlaneseq
        %v3720 = vshrl.u32 %v3719, 7
        %v3721 = vsub.s32 %v3630, %v3720
        %v3722 = vrot.slane %v2415, %v3721
        %v3723 = vsel %vm3635, %v3722, %v3718
        %v3724 = vlaneseq
        %v3725 = vshrl.u32 %v3724, 7
        %v3726 = vsub.s32 %v3637, %v3725
        %v3727 = vrot.slane %v2416, %v3726
        %v3728 = vsel %vm3642, %v3727, %v3723
        %v3729 = vlaneseq
        %v3730 = vshrl.u32 %v3729, 7
        %v3731 = vsub.s32 %v3644, %v3730
        %v3732 = vrot.slane %v2417, %v3731
        %v3733 = vsel %vm3649, %v3732, %v3728
        %v3734 = vlaneseq
        %v3735 = vshrl.u32 %v3734, 7
        %v3736 = vsub.s32 %v3651, %v3735
        %v3737 = vrot.slane %v2418, %v3736
        %v3738 = vsel %vm3656, %v3737, %v3733
        %v3739 = vlaneseq
        %v3740 = vshrl.u32 %v3739, 7
        %v3741 = vsub.s32 %v3658, %v3740
        %v3742 = vrot.slane %v2419, %v3741
        %v3743 = vsel %vm3663, %v3742, %v3738
        %v3744 = vlaneseq
        %v3745 = vshrl.u32 %v3744, 7
        %v3746 = vsub.s32 %v3555, %v3745
        %v3747 = vrot.slane %v2420, %v3746
        %v3748 = vlaneseq
        %v3749 = vshrl.u32 %v3748, 7
        %v3750 = vsub.s32 %v3560, %v3749
        %v3751 = vrot.slane %v2421, %v3750
        %v3752 = vsel %vm3565, %v3751, %v3747
        %v3753 = vlaneseq
        %v3754 = vshrl.u32 %v3753, 7
        %v3755 = vsub.s32 %v3567, %v3754
        %v3756 = vrot.slane %v2422, %v3755
        %v3757 = vsel %vm3572, %v3756, %v3752
        %v3758 = vlaneseq
        %v3759 = vshrl.u32 %v3758, 7
        %v3760 = vsub.s32 %v3574, %v3759
        %v3761 = vrot.slane %v2423, %v3760
        %v3762 = vsel %vm3579, %v3761, %v3757
        %v3763 = vlaneseq
        %v3764 = vshrl.u32 %v3763, 7
        %v3765 = vsub.s32 %v3581, %v3764
        %v3766 = vrot.slane %v2424, %v3765
        %v3767 = vsel %vm3586, %v3766, %v3762
        %v3768 = vlaneseq
        %v3769 = vshrl.u32 %v3768, 7
        %v3770 = vsub.s32 %v3588, %v3769
        %v3771 = vrot.slane %v2425, %v3770
        %v3772 = vsel %vm3593, %v3771, %v3767
        %v3773 = vlaneseq
        %v3774 = vshrl.u32 %v3773, 7
        %v3775 = vsub.s32 %v3595, %v3774
        %v3776 = vrot.slane %v2426, %v3775
        %v3777 = vsel %vm3600, %v3776, %v3772
        %v3778 = vlaneseq
        %v3779 = vshrl.u32 %v3778, 7
        %v3780 = vsub.s32 %v3602, %v3779
        %v3781 = vrot.slane %v2427, %v3780
        %v3782 = vsel %vm3607, %v3781, %v3777
        %v3783 = vlaneseq
        %v3784 = vshrl.u32 %v3783, 7
        %v3785 = vsub.s32 %v3609, %v3784
        %v3786 = vrot.slane %v2428, %v3785
        %v3787 = vsel %vm3614, %v3786, %v3782
        %v3788 = vlaneseq
        %v3789 = vshrl.u32 %v3788, 7
        %v3790 = vsub.s32 %v3616, %v3789
        %v3791 = vrot.slane %v2429, %v3790
        %v3792 = vsel %vm3621, %v3791, %v3787
        %v3793 = vlaneseq
        %v3794 = vshrl.u32 %v3793, 7
        %v3795 = vsub.s32 %v3623, %v3794
        %v3796 = vrot.slane %v2430, %v3795
        %v3797 = vsel %vm3628, %v3796, %v3792
        %v3798 = vlaneseq
        %v3799 = vshrl.u32 %v3798, 7
        %v3800 = vsub.s32 %v3630, %v3799
        %v3801 = vrot.slane %v2431, %v3800
        %v3802 = vsel %vm3635, %v3801, %v3797
        %v3803 = vlaneseq
        %v3804 = vshrl.u32 %v3803, 7
        %v3805 = vsub.s32 %v3637, %v3804
        %v3806 = vrot.slane %v2432, %v3805
        %v3807 = vsel %vm3642, %v3806, %v3802
        %v3808 = vlaneseq
        %v3809 = vshrl.u32 %v3808, 7
        %v3810 = vsub.s32 %v3644, %v3809
        %v3811 = vrot.slane %v2433, %v3810
        %v3812 = vsel %vm3649, %v3811, %v3807
        %v3813 = vlaneseq
        %v3814 = vshrl.u32 %v3813, 7
        %v3815 = vsub.s32 %v3651, %v3814
        %v3816 = vrot.slane %v2434, %v3815
        %v3817 = vsel %vm3656, %v3816, %v3812
        %v3818 = vlaneseq
        %v3819 = vshrl.u32 %v3818, 7
        %v3820 = vsub.s32 %v3658, %v3819
        %v3821 = vrot.slane %v2435, %v3820
        %v3822 = vsel %vm3663, %v3821, %v3817
        %v3823 = vlaneseq
        %v3824 = vshrl.u32 %v3823, 7
        %v3825 = vsub.s32 %v3555, %v3824
        %v3826 = vrot.slane %v2436, %v3825
        %v3827 = vlaneseq
        %v3828 = vshrl.u32 %v3827, 7
        %v3829 = vsub.s32 %v3560, %v3828
        %v3830 = vrot.slane %v2437, %v3829
        %v3831 = vsel %vm3565, %v3830, %v3826
        %v3832 = vlaneseq
        %v3833 = vshrl.u32 %v3832, 7
        %v3834 = vsub.s32 %v3567, %v3833
        %v3835 = vrot.slane %v2438, %v3834
        %v3836 = vsel %vm3572, %v3835, %v3831
        %v3837 = vlaneseq
        %v3838 = vshrl.u32 %v3837, 7
        %v3839 = vsub.s32 %v3574, %v3838
        %v3840 = vrot.slane %v2439, %v3839
        %v3841 = vsel %vm3579, %v3840, %v3836
        %v3842 = vlaneseq
        %v3843 = vshrl.u32 %v3842, 7
        %v3844 = vsub.s32 %v3581, %v3843
        %v3845 = vrot.slane %v2440, %v3844
        %v3846 = vsel %vm3586, %v3845, %v3841
        %v3847 = vlaneseq
        %v3848 = vshrl.u32 %v3847, 7
        %v3849 = vsub.s32 %v3588, %v3848
        %v3850 = vrot.slane %v2441, %v3849
        %v3851 = vsel %vm3593, %v3850, %v3846
        %v3852 = vlaneseq
        %v3853 = vshrl.u32 %v3852, 7
        %v3854 = vsub.s32 %v3595, %v3853
        %v3855 = vrot.slane %v2442, %v3854
        %v3856 = vsel %vm3600, %v3855, %v3851
        %v3857 = vlaneseq
        %v3858 = vshrl.u32 %v3857, 7
        %v3859 = vsub.s32 %v3602, %v3858
        %v3860 = vrot.slane %v2443, %v3859
        %v3861 = vsel %vm3607, %v3860, %v3856
        %v3862 = vlaneseq
        %v3863 = vshrl.u32 %v3862, 7
        %v3864 = vsub.s32 %v3609, %v3863
        %v3865 = vrot.slane %v2444, %v3864
        %v3866 = vsel %vm3614, %v3865, %v3861
        %v3867 = vlaneseq
        %v3868 = vshrl.u32 %v3867, 7
        %v3869 = vsub.s32 %v3616, %v3868
        %v3870 = vrot.slane %v2445, %v3869
        %v3871 = vsel %vm3621, %v3870, %v3866
        %v3872 = vlaneseq
        %v3873 = vshrl.u32 %v3872, 7
        %v3874 = vsub.s32 %v3623, %v3873
        %v3875 = vrot.slane %v2446, %v3874
        %v3876 = vsel %vm3628, %v3875, %v3871
        %v3877 = vlaneseq
        %v3878 = vshrl.u32 %v3877, 7
        %v3879 = vsub.s32 %v3630, %v3878
        %v3880 = vrot.slane %v2447, %v3879
        %v3881 = vsel %vm3635, %v3880, %v3876
        %v3882 = vlaneseq
        %v3883 = vshrl.u32 %v3882, 7
        %v3884 = vsub.s32 %v3637, %v3883
        %v3885 = vrot.slane %v2448, %v3884
        %v3886 = vsel %vm3642, %v3885, %v3881
        %v3887 = vlaneseq
        %v3888 = vshrl.u32 %v3887, 7
        %v3889 = vsub.s32 %v3644, %v3888
        %v3890 = vrot.slane %v2449, %v3889
        %v3891 = vsel %vm3649, %v3890, %v3886
        %v3892 = vlaneseq
        %v3893 = vshrl.u32 %v3892, 7
        %v3894 = vsub.s32 %v3651, %v3893
        %v3895 = vrot.slane %v2450, %v3894
        %v3896 = vsel %vm3656, %v3895, %v3891
        %v3897 = vlaneseq
        %v3898 = vshrl.u32 %v3897, 7
        %v3899 = vsub.s32 %v3658, %v3898
        %v3900 = vrot.slane %v2451, %v3899
        %v3901 = vsel %vm3663, %v3900, %v3896
        %v3902 = vlaneseq
        %v3903 = vshrl.u32 %v3902, 7
        %v3904 = vsub.s32 %v3555, %v3903
        %v3905 = vrot.slane %v2452, %v3904
        %v3906 = vlaneseq
        %v3907 = vshrl.u32 %v3906, 7
        %v3908 = vsub.s32 %v3560, %v3907
        %v3909 = vrot.slane %v2453, %v3908
        %v3910 = vsel %vm3565, %v3909, %v3905
        %v3911 = vlaneseq
        %v3912 = vshrl.u32 %v3911, 7
        %v3913 = vsub.s32 %v3567, %v3912
        %v3914 = vrot.slane %v2454, %v3913
        %v3915 = vsel %vm3572, %v3914, %v3910
        %v3916 = vlaneseq
        %v3917 = vshrl.u32 %v3916, 7
        %v3918 = vsub.s32 %v3574, %v3917
        %v3919 = vrot.slane %v2455, %v3918
        %v3920 = vsel %vm3579, %v3919, %v3915
        %v3921 = vlaneseq
        %v3922 = vshrl.u32 %v3921, 7
        %v3923 = vsub.s32 %v3581, %v3922
        %v3924 = vrot.slane %v2456, %v3923
        %v3925 = vsel %vm3586, %v3924, %v3920
        %v3926 = vlaneseq
        %v3927 = vshrl.u32 %v3926, 7
        %v3928 = vsub.s32 %v3588, %v3927
        %v3929 = vrot.slane %v2457, %v3928
        %v3930 = vsel %vm3593, %v3929, %v3925
        %v3931 = vlaneseq
        %v3932 = vshrl.u32 %v3931, 7
        %v3933 = vsub.s32 %v3595, %v3932
        %v3934 = vrot.slane %v2458, %v3933
        %v3935 = vsel %vm3600, %v3934, %v3930
        %v3936 = vlaneseq
        %v3937 = vshrl.u32 %v3936, 7
        %v3938 = vsub.s32 %v3602, %v3937
        %v3939 = vrot.slane %v2459, %v3938
        %v3940 = vsel %vm3607, %v3939, %v3935
        %v3941 = vlaneseq
        %v3942 = vshrl.u32 %v3941, 7
        %v3943 = vsub.s32 %v3609, %v3942
        %v3944 = vrot.slane %v2460, %v3943
        %v3945 = vsel %vm3614, %v3944, %v3940
        %v3946 = vlaneseq
        %v3947 = vshrl.u32 %v3946, 7
        %v3948 = vsub.s32 %v3616, %v3947
        %v3949 = vrot.slane %v2461, %v3948
        %v3950 = vsel %vm3621, %v3949, %v3945
        %v3951 = vlaneseq
        %v3952 = vshrl.u32 %v3951, 7
        %v3953 = vsub.s32 %v3623, %v3952
        %v3954 = vrot.slane %v2462, %v3953
        %v3955 = vsel %vm3628, %v3954, %v3950
        %v3956 = vlaneseq
        %v3957 = vshrl.u32 %v3956, 7
        %v3958 = vsub.s32 %v3630, %v3957
        %v3959 = vrot.slane %v2463, %v3958
        %v3960 = vsel %vm3635, %v3959, %v3955
        %v3961 = vlaneseq
        %v3962 = vshrl.u32 %v3961, 7
        %v3963 = vsub.s32 %v3637, %v3962
        %v3964 = vrot.slane %v2464, %v3963
        %v3965 = vsel %vm3642, %v3964, %v3960
        %v3966 = vlaneseq
        %v3967 = vshrl.u32 %v3966, 7
        %v3968 = vsub.s32 %v3644, %v3967
        %v3969 = vrot.slane %v2465, %v3968
        %v3970 = vsel %vm3649, %v3969, %v3965
        %v3971 = vlaneseq
        %v3972 = vshrl.u32 %v3971, 7
        %v3973 = vsub.s32 %v3651, %v3972
        %v3974 = vrot.slane %v2466, %v3973
        %v3975 = vsel %vm3656, %v3974, %v3970
        %v3976 = vlaneseq
        %v3977 = vshrl.u32 %v3976, 7
        %v3978 = vsub.s32 %v3658, %v3977
        %v3979 = vrot.slane %v2467, %v3978
        %v3980 = vsel %vm3663, %v3979, %v3975
        %v3981 = vlaneseq
        %v3982 = vshrl.u32 %v3981, 7
        %v3983 = vsub.s32 %v3555, %v3982
        %v3984 = vrot.slane %v2468, %v3983
        %v3985 = vlaneseq
        %v3986 = vshrl.u32 %v3985, 7
        %v3987 = vsub.s32 %v3560, %v3986
        %v3988 = vrot.slane %v2469, %v3987
        %v3989 = vsel %vm3565, %v3988, %v3984
        %v3990 = vlaneseq
        %v3991 = vshrl.u32 %v3990, 7
        %v3992 = vsub.s32 %v3567, %v3991
        %v3993 = vrot.slane %v2470, %v3992
        %v3994 = vsel %vm3572, %v3993, %v3989
        %v3995 = vlaneseq
        %v3996 = vshrl.u32 %v3995, 7
        %v3997 = vsub.s32 %v3574, %v3996
        %v3998 = vrot.slane %v2471, %v3997
        %v3999 = vsel %vm3579, %v3998, %v3994
        %v4000 = vlaneseq
        %v4001 = vshrl.u32 %v4000, 7
        %v4002 = vsub.s32 %v3581, %v4001
        %v4003 = vrot.slane %v2472, %v4002
        %v4004 = vsel %vm3586, %v4003, %v3999
        %v4005 = vlaneseq
        %v4006 = vshrl.u32 %v4005, 7
        %v4007 = vsub.s32 %v3588, %v4006
        %v4008 = vrot.slane %v2473, %v4007
        %v4009 = vsel %vm3593, %v4008, %v4004
        %v4010 = vlaneseq
        %v4011 = vshrl.u32 %v4010, 7
        %v4012 = vsub.s32 %v3595, %v4011
        %v4013 = vrot.slane %v2474, %v4012
        %v4014 = vsel %vm3600, %v4013, %v4009
        %v4015 = vlaneseq
        %v4016 = vshrl.u32 %v4015, 7
        %v4017 = vsub.s32 %v3602, %v4016
        %v4018 = vrot.slane %v2475, %v4017
        %v4019 = vsel %vm3607, %v4018, %v4014
        %v4020 = vlaneseq
        %v4021 = vshrl.u32 %v4020, 7
        %v4022 = vsub.s32 %v3609, %v4021
        %v4023 = vrot.slane %v2476, %v4022
        %v4024 = vsel %vm3614, %v4023, %v4019
        %v4025 = vlaneseq
        %v4026 = vshrl.u32 %v4025, 7
        %v4027 = vsub.s32 %v3616, %v4026
        %v4028 = vrot.slane %v2477, %v4027
        %v4029 = vsel %vm3621, %v4028, %v4024
        %v4030 = vlaneseq
        %v4031 = vshrl.u32 %v4030, 7
        %v4032 = vsub.s32 %v3623, %v4031
        %v4033 = vrot.slane %v2478, %v4032
        %v4034 = vsel %vm3628, %v4033, %v4029
        %v4035 = vlaneseq
        %v4036 = vshrl.u32 %v4035, 7
        %v4037 = vsub.s32 %v3630, %v4036
        %v4038 = vrot.slane %v2479, %v4037
        %v4039 = vsel %vm3635, %v4038, %v4034
        %v4040 = vlaneseq
        %v4041 = vshrl.u32 %v4040, 7
        %v4042 = vsub.s32 %v3637, %v4041
        %v4043 = vrot.slane %v2480, %v4042
        %v4044 = vsel %vm3642, %v4043, %v4039
        %v4045 = vlaneseq
        %v4046 = vshrl.u32 %v4045, 7
        %v4047 = vsub.s32 %v3644, %v4046
        %v4048 = vrot.slane %v2481, %v4047
        %v4049 = vsel %vm3649, %v4048, %v4044
        %v4050 = vlaneseq
        %v4051 = vshrl.u32 %v4050, 7
        %v4052 = vsub.s32 %v3651, %v4051
        %v4053 = vrot.slane %v2482, %v4052
        %v4054 = vsel %vm3656, %v4053, %v4049
        %v4055 = vlaneseq
        %v4056 = vshrl.u32 %v4055, 7
        %v4057 = vsub.s32 %v3658, %v4056
        %v4058 = vrot.slane %v2483, %v4057
        %v4059 = vsel %vm3663, %v4058, %v4054
        %v4060 = vlaneseq
        %v4061 = vshrl.u32 %v4060, 7
        %v4062 = vsub.s32 %v3555, %v4061
        %v4063 = vrot.slane %v2484, %v4062
        %v4064 = vlaneseq
        %v4065 = vshrl.u32 %v4064, 7
        %v4066 = vsub.s32 %v3560, %v4065
        %v4067 = vrot.slane %v2485, %v4066
        %v4068 = vsel %vm3565, %v4067, %v4063
        %v4069 = vlaneseq
        %v4070 = vshrl.u32 %v4069, 7
        %v4071 = vsub.s32 %v3567, %v4070
        %v4072 = vrot.slane %v2486, %v4071
        %v4073 = vsel %vm3572, %v4072, %v4068
        %v4074 = vlaneseq
        %v4075 = vshrl.u32 %v4074, 7
        %v4076 = vsub.s32 %v3574, %v4075
        %v4077 = vrot.slane %v2487, %v4076
        %v4078 = vsel %vm3579, %v4077, %v4073
        %v4079 = vlaneseq
        %v4080 = vshrl.u32 %v4079, 7
        %v4081 = vsub.s32 %v3581, %v4080
        %v4082 = vrot.slane %v2488, %v4081
        %v4083 = vsel %vm3586, %v4082, %v4078
        %v4084 = vlaneseq
        %v4085 = vshrl.u32 %v4084, 7
        %v4086 = vsub.s32 %v3588, %v4085
        %v4087 = vrot.slane %v2489, %v4086
        %v4088 = vsel %vm3593, %v4087, %v4083
        %v4089 = vlaneseq
        %v4090 = vshrl.u32 %v4089, 7
        %v4091 = vsub.s32 %v3595, %v4090
        %v4092 = vrot.slane %v2490, %v4091
        %v4093 = vsel %vm3600, %v4092, %v4088
        %v4094 = vlaneseq
        %v4095 = vshrl.u32 %v4094, 7
        %v4096 = vsub.s32 %v3602, %v4095
        %v4097 = vrot.slane %v2491, %v4096
        %v4098 = vsel %vm3607, %v4097, %v4093
        %v4099 = vlaneseq
        %v4100 = vshrl.u32 %v4099, 7
        %v4101 = vsub.s32 %v3609, %v4100
        %v4102 = vrot.slane %v2492, %v4101
        %v4103 = vsel %vm3614, %v4102, %v4098
        %v4104 = vlaneseq
        %v4105 = vshrl.u32 %v4104, 7
        %v4106 = vsub.s32 %v3616, %v4105
        %v4107 = vrot.slane %v2493, %v4106
        %v4108 = vsel %vm3621, %v4107, %v4103
        %v4109 = vlaneseq
        %v4110 = vshrl.u32 %v4109, 7
        %v4111 = vsub.s32 %v3623, %v4110
        %v4112 = vrot.slane %v2494, %v4111
        %v4113 = vsel %vm3628, %v4112, %v4108
        %v4114 = vlaneseq
        %v4115 = vshrl.u32 %v4114, 7
        %v4116 = vsub.s32 %v3630, %v4115
        %v4117 = vrot.slane %v2495, %v4116
        %v4118 = vsel %vm3635, %v4117, %v4113
        %v4119 = vlaneseq
        %v4120 = vshrl.u32 %v4119, 7
        %v4121 = vsub.s32 %v3637, %v4120
        %v4122 = vrot.slane %v2496, %v4121
        %v4123 = vsel %vm3642, %v4122, %v4118
        %v4124 = vlaneseq
        %v4125 = vshrl.u32 %v4124, 7
        %v4126 = vsub.s32 %v3644, %v4125
        %v4127 = vrot.slane %v2497, %v4126
        %v4128 = vsel %vm3649, %v4127, %v4123
        %v4129 = vlaneseq
        %v4130 = vshrl.u32 %v4129, 7
        %v4131 = vsub.s32 %v3651, %v4130
        %v4132 = vrot.slane %v2498, %v4131
        %v4133 = vsel %vm3656, %v4132, %v4128
        %v4134 = vlaneseq
        %v4135 = vshrl.u32 %v4134, 7
        %v4136 = vsub.s32 %v3658, %v4135
        %v4137 = vrot.slane %v2499, %v4136
        %v4138 = vsel %vm3663, %v4137, %v4133
        %v4139 = vlaneseq
        %v4140 = vshrl.u32 %v4139, 7
        %v4141 = vsub.s32 %v3555, %v4140
        %v4142 = vrot.slane %v2500, %v4141
        %v4143 = vlaneseq
        %v4144 = vshrl.u32 %v4143, 7
        %v4145 = vsub.s32 %v3560, %v4144
        %v4146 = vrot.slane %v2501, %v4145
        %v4147 = vsel %vm3565, %v4146, %v4142
        %v4148 = vlaneseq
        %v4149 = vshrl.u32 %v4148, 7
        %v4150 = vsub.s32 %v3567, %v4149
        %v4151 = vrot.slane %v2502, %v4150
        %v4152 = vsel %vm3572, %v4151, %v4147
        %v4153 = vlaneseq
        %v4154 = vshrl.u32 %v4153, 7
        %v4155 = vsub.s32 %v3574, %v4154
        %v4156 = vrot.slane %v2503, %v4155
        %v4157 = vsel %vm3579, %v4156, %v4152
        %v4158 = vlaneseq
        %v4159 = vshrl.u32 %v4158, 7
        %v4160 = vsub.s32 %v3581, %v4159
        %v4161 = vrot.slane %v2504, %v4160
        %v4162 = vsel %vm3586, %v4161, %v4157
        %v4163 = vlaneseq
        %v4164 = vshrl.u32 %v4163, 7
        %v4165 = vsub.s32 %v3588, %v4164
        %v4166 = vrot.slane %v2505, %v4165
        %v4167 = vsel %vm3593, %v4166, %v4162
        %v4168 = vlaneseq
        %v4169 = vshrl.u32 %v4168, 7
        %v4170 = vsub.s32 %v3595, %v4169
        %v4171 = vrot.slane %v2506, %v4170
        %v4172 = vsel %vm3600, %v4171, %v4167
        %v4173 = vlaneseq
        %v4174 = vshrl.u32 %v4173, 7
        %v4175 = vsub.s32 %v3602, %v4174
        %v4176 = vrot.slane %v2507, %v4175
        %v4177 = vsel %vm3607, %v4176, %v4172
        %v4178 = vlaneseq
        %v4179 = vshrl.u32 %v4178, 7
        %v4180 = vsub.s32 %v3609, %v4179
        %v4181 = vrot.slane %v2508, %v4180
        %v4182 = vsel %vm3614, %v4181, %v4177
        %v4183 = vlaneseq
        %v4184 = vshrl.u32 %v4183, 7
        %v4185 = vsub.s32 %v3616, %v4184
        %v4186 = vrot.slane %v2509, %v4185
        %v4187 = vsel %vm3621, %v4186, %v4182
        %v4188 = vlaneseq
        %v4189 = vshrl.u32 %v4188, 7
        %v4190 = vsub.s32 %v3623, %v4189
        %v4191 = vrot.slane %v2510, %v4190
        %v4192 = vsel %vm3628, %v4191, %v4187
        %v4193 = vlaneseq
        %v4194 = vshrl.u32 %v4193, 7
        %v4195 = vsub.s32 %v3630, %v4194
        %v4196 = vrot.slane %v2511, %v4195
        %v4197 = vsel %vm3635, %v4196, %v4192
        %v4198 = vlaneseq
        %v4199 = vshrl.u32 %v4198, 7
        %v4200 = vsub.s32 %v3637, %v4199
        %v4201 = vrot.slane %v2512, %v4200
        %v4202 = vsel %vm3642, %v4201, %v4197
        %v4203 = vlaneseq
        %v4204 = vshrl.u32 %v4203, 7
        %v4205 = vsub.s32 %v3644, %v4204
        %v4206 = vrot.slane %v2513, %v4205
        %v4207 = vsel %vm3649, %v4206, %v4202
        %v4208 = vlaneseq
        %v4209 = vshrl.u32 %v4208, 7
        %v4210 = vsub.s32 %v3651, %v4209
        %v4211 = vrot.slane %v2514, %v4210
        %v4212 = vsel %vm3656, %v4211, %v4207
        %v4213 = vlaneseq
        %v4214 = vshrl.u32 %v4213, 7
        %v4215 = vsub.s32 %v3658, %v4214
        %v4216 = vrot.slane %v2515, %v4215
        %v4217 = vsel %vm3663, %v4216, %v4212
        %v4218 = vlaneseq
        %v4219 = vshrl.u32 %v4218, 7
        %v4220 = vsub.s32 %v3555, %v4219
        %v4221 = vrot.slane %v2516, %v4220
        %v4222 = vlaneseq
        %v4223 = vshrl.u32 %v4222, 7
        %v4224 = vsub.s32 %v3560, %v4223
        %v4225 = vrot.slane %v2517, %v4224
        %v4226 = vsel %vm3565, %v4225, %v4221
        %v4227 = vlaneseq
        %v4228 = vshrl.u32 %v4227, 7
        %v4229 = vsub.s32 %v3567, %v4228
        %v4230 = vrot.slane %v2518, %v4229
        %v4231 = vsel %vm3572, %v4230, %v4226
        %v4232 = vlaneseq
        %v4233 = vshrl.u32 %v4232, 7
        %v4234 = vsub.s32 %v3574, %v4233
        %v4235 = vrot.slane %v2519, %v4234
        %v4236 = vsel %vm3579, %v4235, %v4231
        %v4237 = vlaneseq
        %v4238 = vshrl.u32 %v4237, 7
        %v4239 = vsub.s32 %v3581, %v4238
        %v4240 = vrot.slane %v2520, %v4239
        %v4241 = vsel %vm3586, %v4240, %v4236
        %v4242 = vlaneseq
        %v4243 = vshrl.u32 %v4242, 7
        %v4244 = vsub.s32 %v3588, %v4243
        %v4245 = vrot.slane %v2521, %v4244
        %v4246 = vsel %vm3593, %v4245, %v4241
        %v4247 = vlaneseq
        %v4248 = vshrl.u32 %v4247, 7
        %v4249 = vsub.s32 %v3595, %v4248
        %v4250 = vrot.slane %v2522, %v4249
        %v4251 = vsel %vm3600, %v4250, %v4246
        %v4252 = vlaneseq
        %v4253 = vshrl.u32 %v4252, 7
        %v4254 = vsub.s32 %v3602, %v4253
        %v4255 = vrot.slane %v2523, %v4254
        %v4256 = vsel %vm3607, %v4255, %v4251
        %v4257 = vlaneseq
        %v4258 = vshrl.u32 %v4257, 7
        %v4259 = vsub.s32 %v3609, %v4258
        %v4260 = vrot.slane %v2524, %v4259
        %v4261 = vsel %vm3614, %v4260, %v4256
        %v4262 = vlaneseq
        %v4263 = vshrl.u32 %v4262, 7
        %v4264 = vsub.s32 %v3616, %v4263
        %v4265 = vrot.slane %v2525, %v4264
        %v4266 = vsel %vm3621, %v4265, %v4261
        %v4267 = vlaneseq
        %v4268 = vshrl.u32 %v4267, 7
        %v4269 = vsub.s32 %v3623, %v4268
        %v4270 = vrot.slane %v2526, %v4269
        %v4271 = vsel %vm3628, %v4270, %v4266
        %v4272 = vlaneseq
        %v4273 = vshrl.u32 %v4272, 7
        %v4274 = vsub.s32 %v3630, %v4273
        %v4275 = vrot.slane %v2527, %v4274
        %v4276 = vsel %vm3635, %v4275, %v4271
        %v4277 = vlaneseq
        %v4278 = vshrl.u32 %v4277, 7
        %v4279 = vsub.s32 %v3637, %v4278
        %v4280 = vrot.slane %v2528, %v4279
        %v4281 = vsel %vm3642, %v4280, %v4276
        %v4282 = vlaneseq
        %v4283 = vshrl.u32 %v4282, 7
        %v4284 = vsub.s32 %v3644, %v4283
        %v4285 = vrot.slane %v2529, %v4284
        %v4286 = vsel %vm3649, %v4285, %v4281
        %v4287 = vlaneseq
        %v4288 = vshrl.u32 %v4287, 7
        %v4289 = vsub.s32 %v3651, %v4288
        %v4290 = vrot.slane %v2530, %v4289
        %v4291 = vsel %vm3656, %v4290, %v4286
        %v4292 = vlaneseq
        %v4293 = vshrl.u32 %v4292, 7
        %v4294 = vsub.s32 %v3658, %v4293
        %v4295 = vrot.slane %v2531, %v4294
        %v4296 = vsel %vm3663, %v4295, %v4291
        %v4297 = vlaneseq
        %v4298 = vshrl.u32 %v4297, 7
        %v4299 = vsub.s32 %v3555, %v4298
        %v4300 = vrot.slane %v2532, %v4299
        %v4301 = vlaneseq
        %v4302 = vshrl.u32 %v4301, 7
        %v4303 = vsub.s32 %v3560, %v4302
        %v4304 = vrot.slane %v2533, %v4303
        %v4305 = vsel %vm3565, %v4304, %v4300
        %v4306 = vlaneseq
        %v4307 = vshrl.u32 %v4306, 7
        %v4308 = vsub.s32 %v3567, %v4307
        %v4309 = vrot.slane %v2534, %v4308
        %v4310 = vsel %vm3572, %v4309, %v4305
        %v4311 = vlaneseq
        %v4312 = vshrl.u32 %v4311, 7
        %v4313 = vsub.s32 %v3574, %v4312
        %v4314 = vrot.slane %v2535, %v4313
        %v4315 = vsel %vm3579, %v4314, %v4310
        %v4316 = vlaneseq
        %v4317 = vshrl.u32 %v4316, 7
        %v4318 = vsub.s32 %v3581, %v4317
        %v4319 = vrot.slane %v2536, %v4318
        %v4320 = vsel %vm3586, %v4319, %v4315
        %v4321 = vlaneseq
        %v4322 = vshrl.u32 %v4321, 7
        %v4323 = vsub.s32 %v3588, %v4322
        %v4324 = vrot.slane %v2537, %v4323
        %v4325 = vsel %vm3593, %v4324, %v4320
        %v4326 = vlaneseq
        %v4327 = vshrl.u32 %v4326, 7
        %v4328 = vsub.s32 %v3595, %v4327
        %v4329 = vrot.slane %v2538, %v4328
        %v4330 = vsel %vm3600, %v4329, %v4325
        %v4331 = vlaneseq
        %v4332 = vshrl.u32 %v4331, 7
        %v4333 = vsub.s32 %v3602, %v4332
        %v4334 = vrot.slane %v2539, %v4333
        %v4335 = vsel %vm3607, %v4334, %v4330
        %v4336 = vlaneseq
        %v4337 = vshrl.u32 %v4336, 7
        %v4338 = vsub.s32 %v3609, %v4337
        %v4339 = vrot.slane %v2540, %v4338
        %v4340 = vsel %vm3614, %v4339, %v4335
        %v4341 = vlaneseq
        %v4342 = vshrl.u32 %v4341, 7
        %v4343 = vsub.s32 %v3616, %v4342
        %v4344 = vrot.slane %v2541, %v4343
        %v4345 = vsel %vm3621, %v4344, %v4340
        %v4346 = vlaneseq
        %v4347 = vshrl.u32 %v4346, 7
        %v4348 = vsub.s32 %v3623, %v4347
        %v4349 = vrot.slane %v2542, %v4348
        %v4350 = vsel %vm3628, %v4349, %v4345
        %v4351 = vlaneseq
        %v4352 = vshrl.u32 %v4351, 7
        %v4353 = vsub.s32 %v3630, %v4352
        %v4354 = vrot.slane %v2543, %v4353
        %v4355 = vsel %vm3635, %v4354, %v4350
        %v4356 = vlaneseq
        %v4357 = vshrl.u32 %v4356, 7
        %v4358 = vsub.s32 %v3637, %v4357
        %v4359 = vrot.slane %v2544, %v4358
        %v4360 = vsel %vm3642, %v4359, %v4355
        %v4361 = vlaneseq
        %v4362 = vshrl.u32 %v4361, 7
        %v4363 = vsub.s32 %v3644, %v4362
        %v4364 = vrot.slane %v2545, %v4363
        %v4365 = vsel %vm3649, %v4364, %v4360
        %v4366 = vlaneseq
        %v4367 = vshrl.u32 %v4366, 7
        %v4368 = vsub.s32 %v3651, %v4367
        %v4369 = vrot.slane %v2546, %v4368
        %v4370 = vsel %vm3656, %v4369, %v4365
        %v4371 = vlaneseq
        %v4372 = vshrl.u32 %v4371, 7
        %v4373 = vsub.s32 %v3658, %v4372
        %v4374 = vrot.slane %v2547, %v4373
        %v4375 = vsel %vm3663, %v4374, %v4370
        %v4376 = vlaneseq
        %v4377 = vshrl.u32 %v4376, 7
        %v4378 = vsub.s32 %v3555, %v4377
        %v4379 = vrot.slane %v2548, %v4378
        %v4380 = vlaneseq
        %v4381 = vshrl.u32 %v4380, 7
        %v4382 = vsub.s32 %v3560, %v4381
        %v4383 = vrot.slane %v2549, %v4382
        %v4384 = vsel %vm3565, %v4383, %v4379
        %v4385 = vlaneseq
        %v4386 = vshrl.u32 %v4385, 7
        %v4387 = vsub.s32 %v3567, %v4386
        %v4388 = vrot.slane %v2550, %v4387
        %v4389 = vsel %vm3572, %v4388, %v4384
        %v4390 = vlaneseq
        %v4391 = vshrl.u32 %v4390, 7
        %v4392 = vsub.s32 %v3574, %v4391
        %v4393 = vrot.slane %v2551, %v4392
        %v4394 = vsel %vm3579, %v4393, %v4389
        %v4395 = vlaneseq
        %v4396 = vshrl.u32 %v4395, 7
        %v4397 = vsub.s32 %v3581, %v4396
        %v4398 = vrot.slane %v2552, %v4397
        %v4399 = vsel %vm3586, %v4398, %v4394
        %v4400 = vlaneseq
        %v4401 = vshrl.u32 %v4400, 7
        %v4402 = vsub.s32 %v3588, %v4401
        %v4403 = vrot.slane %v2553, %v4402
        %v4404 = vsel %vm3593, %v4403, %v4399
        %v4405 = vlaneseq
        %v4406 = vshrl.u32 %v4405, 7
        %v4407 = vsub.s32 %v3595, %v4406
        %v4408 = vrot.slane %v2554, %v4407
        %v4409 = vsel %vm3600, %v4408, %v4404
        %v4410 = vlaneseq
        %v4411 = vshrl.u32 %v4410, 7
        %v4412 = vsub.s32 %v3602, %v4411
        %v4413 = vrot.slane %v2555, %v4412
        %v4414 = vsel %vm3607, %v4413, %v4409
        %v4415 = vlaneseq
        %v4416 = vshrl.u32 %v4415, 7
        %v4417 = vsub.s32 %v3609, %v4416
        %v4418 = vrot.slane %v2556, %v4417
        %v4419 = vsel %vm3614, %v4418, %v4414
        %v4420 = vlaneseq
        %v4421 = vshrl.u32 %v4420, 7
        %v4422 = vsub.s32 %v3616, %v4421
        %v4423 = vrot.slane %v2557, %v4422
        %v4424 = vsel %vm3621, %v4423, %v4419
        %v4425 = vlaneseq
        %v4426 = vshrl.u32 %v4425, 7
        %v4427 = vsub.s32 %v3623, %v4426
        %v4428 = vrot.slane %v2558, %v4427
        %v4429 = vsel %vm3628, %v4428, %v4424
        %v4430 = vlaneseq
        %v4431 = vshrl.u32 %v4430, 7
        %v4432 = vsub.s32 %v3630, %v4431
        %v4433 = vrot.slane %v2559, %v4432
        %v4434 = vsel %vm3635, %v4433, %v4429
        %v4435 = vlaneseq
        %v4436 = vshrl.u32 %v4435, 7
        %v4437 = vsub.s32 %v3637, %v4436
        %v4438 = vrot.slane %v2560, %v4437
        %v4439 = vsel %vm3642, %v4438, %v4434
        %v4440 = vlaneseq
        %v4441 = vshrl.u32 %v4440, 7
        %v4442 = vsub.s32 %v3644, %v4441
        %v4443 = vrot.slane %v2561, %v4442
        %v4444 = vsel %vm3649, %v4443, %v4439
        %v4445 = vlaneseq
        %v4446 = vshrl.u32 %v4445, 7
        %v4447 = vsub.s32 %v3651, %v4446
        %v4448 = vrot.slane %v2562, %v4447
        %v4449 = vsel %vm3656, %v4448, %v4444
        %v4450 = vlaneseq
        %v4451 = vshrl.u32 %v4450, 7
        %v4452 = vsub.s32 %v3658, %v4451
        %v4453 = vrot.slane %v2563, %v4452
        %v4454 = vsel %vm3663, %v4453, %v4449
        %v4455 = vlaneseq
        %v4456 = vshrl.u32 %v4455, 7
        %v4457 = vsub.s32 %v3555, %v4456
        %v4458 = vrot.slane %v2564, %v4457
        %v4459 = vlaneseq
        %v4460 = vshrl.u32 %v4459, 7
        %v4461 = vsub.s32 %v3560, %v4460
        %v4462 = vrot.slane %v2565, %v4461
        %v4463 = vsel %vm3565, %v4462, %v4458
        %v4464 = vlaneseq
        %v4465 = vshrl.u32 %v4464, 7
        %v4466 = vsub.s32 %v3567, %v4465
        %v4467 = vrot.slane %v2566, %v4466
        %v4468 = vsel %vm3572, %v4467, %v4463
        %v4469 = vlaneseq
        %v4470 = vshrl.u32 %v4469, 7
        %v4471 = vsub.s32 %v3574, %v4470
        %v4472 = vrot.slane %v2567, %v4471
        %v4473 = vsel %vm3579, %v4472, %v4468
        %v4474 = vlaneseq
        %v4475 = vshrl.u32 %v4474, 7
        %v4476 = vsub.s32 %v3581, %v4475
        %v4477 = vrot.slane %v2568, %v4476
        %v4478 = vsel %vm3586, %v4477, %v4473
        %v4479 = vlaneseq
        %v4480 = vshrl.u32 %v4479, 7
        %v4481 = vsub.s32 %v3588, %v4480
        %v4482 = vrot.slane %v2569, %v4481
        %v4483 = vsel %vm3593, %v4482, %v4478
        %v4484 = vlaneseq
        %v4485 = vshrl.u32 %v4484, 7
        %v4486 = vsub.s32 %v3595, %v4485
        %v4487 = vrot.slane %v2570, %v4486
        %v4488 = vsel %vm3600, %v4487, %v4483
        %v4489 = vlaneseq
        %v4490 = vshrl.u32 %v4489, 7
        %v4491 = vsub.s32 %v3602, %v4490
        %v4492 = vrot.slane %v2571, %v4491
        %v4493 = vsel %vm3607, %v4492, %v4488
        %v4494 = vlaneseq
        %v4495 = vshrl.u32 %v4494, 7
        %v4496 = vsub.s32 %v3609, %v4495
        %v4497 = vrot.slane %v2572, %v4496
        %v4498 = vsel %vm3614, %v4497, %v4493
        %v4499 = vlaneseq
        %v4500 = vshrl.u32 %v4499, 7
        %v4501 = vsub.s32 %v3616, %v4500
        %v4502 = vrot.slane %v2573, %v4501
        %v4503 = vsel %vm3621, %v4502, %v4498
        %v4504 = vlaneseq
        %v4505 = vshrl.u32 %v4504, 7
        %v4506 = vsub.s32 %v3623, %v4505
        %v4507 = vrot.slane %v2574, %v4506
        %v4508 = vsel %vm3628, %v4507, %v4503
        %v4509 = vlaneseq
        %v4510 = vshrl.u32 %v4509, 7
        %v4511 = vsub.s32 %v3630, %v4510
        %v4512 = vrot.slane %v2575, %v4511
        %v4513 = vsel %vm3635, %v4512, %v4508
        %v4514 = vlaneseq
        %v4515 = vshrl.u32 %v4514, 7
        %v4516 = vsub.s32 %v3637, %v4515
        %v4517 = vrot.slane %v2576, %v4516
        %v4518 = vsel %vm3642, %v4517, %v4513
        %v4519 = vlaneseq
        %v4520 = vshrl.u32 %v4519, 7
        %v4521 = vsub.s32 %v3644, %v4520
        %v4522 = vrot.slane %v2577, %v4521
        %v4523 = vsel %vm3649, %v4522, %v4518
        %v4524 = vlaneseq
        %v4525 = vshrl.u32 %v4524, 7
        %v4526 = vsub.s32 %v3651, %v4525
        %v4527 = vrot.slane %v2578, %v4526
        %v4528 = vsel %vm3656, %v4527, %v4523
        %v4529 = vlaneseq
        %v4530 = vshrl.u32 %v4529, 7
        %v4531 = vsub.s32 %v3658, %v4530
        %v4532 = vrot.slane %v2579, %v4531
        %v4533 = vsel %vm3663, %v4532, %v4528
        %v4534 = vlaneseq
        %v4535 = vshrl.u32 %v4534, 7
        %v4536 = vsub.s32 %v3555, %v4535
        %v4537 = vrot.slane %v2580, %v4536
        %v4538 = vlaneseq
        %v4539 = vshrl.u32 %v4538, 7
        %v4540 = vsub.s32 %v3560, %v4539
        %v4541 = vrot.slane %v2581, %v4540
        %v4542 = vsel %vm3565, %v4541, %v4537
        %v4543 = vlaneseq
        %v4544 = vshrl.u32 %v4543, 7
        %v4545 = vsub.s32 %v3567, %v4544
        %v4546 = vrot.slane %v2582, %v4545
        %v4547 = vsel %vm3572, %v4546, %v4542
        %v4548 = vlaneseq
        %v4549 = vshrl.u32 %v4548, 7
        %v4550 = vsub.s32 %v3574, %v4549
        %v4551 = vrot.slane %v2583, %v4550
        %v4552 = vsel %vm3579, %v4551, %v4547
        %v4553 = vlaneseq
        %v4554 = vshrl.u32 %v4553, 7
        %v4555 = vsub.s32 %v3581, %v4554
        %v4556 = vrot.slane %v2584, %v4555
        %v4557 = vsel %vm3586, %v4556, %v4552
        %v4558 = vlaneseq
        %v4559 = vshrl.u32 %v4558, 7
        %v4560 = vsub.s32 %v3588, %v4559
        %v4561 = vrot.slane %v2585, %v4560
        %v4562 = vsel %vm3593, %v4561, %v4557
        %v4563 = vlaneseq
        %v4564 = vshrl.u32 %v4563, 7
        %v4565 = vsub.s32 %v3595, %v4564
        %v4566 = vrot.slane %v2586, %v4565
        %v4567 = vsel %vm3600, %v4566, %v4562
        %v4568 = vlaneseq
        %v4569 = vshrl.u32 %v4568, 7
        %v4570 = vsub.s32 %v3602, %v4569
        %v4571 = vrot.slane %v2587, %v4570
        %v4572 = vsel %vm3607, %v4571, %v4567
        %v4573 = vlaneseq
        %v4574 = vshrl.u32 %v4573, 7
        %v4575 = vsub.s32 %v3609, %v4574
        %v4576 = vrot.slane %v2588, %v4575
        %v4577 = vsel %vm3614, %v4576, %v4572
        %v4578 = vlaneseq
        %v4579 = vshrl.u32 %v4578, 7
        %v4580 = vsub.s32 %v3616, %v4579
        %v4581 = vrot.slane %v2589, %v4580
        %v4582 = vsel %vm3621, %v4581, %v4577
        %v4583 = vlaneseq
        %v4584 = vshrl.u32 %v4583, 7
        %v4585 = vsub.s32 %v3623, %v4584
        %v4586 = vrot.slane %v2590, %v4585
        %v4587 = vsel %vm3628, %v4586, %v4582
        %v4588 = vlaneseq
        %v4589 = vshrl.u32 %v4588, 7
        %v4590 = vsub.s32 %v3630, %v4589
        %v4591 = vrot.slane %v2591, %v4590
        %v4592 = vsel %vm3635, %v4591, %v4587
        %v4593 = vlaneseq
        %v4594 = vshrl.u32 %v4593, 7
        %v4595 = vsub.s32 %v3637, %v4594
        %v4596 = vrot.slane %v2592, %v4595
        %v4597 = vsel %vm3642, %v4596, %v4592
        %v4598 = vlaneseq
        %v4599 = vshrl.u32 %v4598, 7
        %v4600 = vsub.s32 %v3644, %v4599
        %v4601 = vrot.slane %v2593, %v4600
        %v4602 = vsel %vm3649, %v4601, %v4597
        %v4603 = vlaneseq
        %v4604 = vshrl.u32 %v4603, 7
        %v4605 = vsub.s32 %v3651, %v4604
        %v4606 = vrot.slane %v2594, %v4605
        %v4607 = vsel %vm3656, %v4606, %v4602
        %v4608 = vlaneseq
        %v4609 = vshrl.u32 %v4608, 7
        %v4610 = vsub.s32 %v3658, %v4609
        %v4611 = vrot.slane %v2595, %v4610
        %v4612 = vsel %vm3663, %v4611, %v4607
        %v4613 = vlaneseq
        %v4614 = vshrl.u32 %v4613, 7
        %v4615 = vsub.s32 %v3555, %v4614
        %v4616 = vrot.slane %v2596, %v4615
        %v4617 = vlaneseq
        %v4618 = vshrl.u32 %v4617, 7
        %v4619 = vsub.s32 %v3560, %v4618
        %v4620 = vrot.slane %v2597, %v4619
        %v4621 = vsel %vm3565, %v4620, %v4616
        %v4622 = vlaneseq
        %v4623 = vshrl.u32 %v4622, 7
        %v4624 = vsub.s32 %v3567, %v4623
        %v4625 = vrot.slane %v2598, %v4624
        %v4626 = vsel %vm3572, %v4625, %v4621
        %v4627 = vlaneseq
        %v4628 = vshrl.u32 %v4627, 7
        %v4629 = vsub.s32 %v3574, %v4628
        %v4630 = vrot.slane %v2599, %v4629
        %v4631 = vsel %vm3579, %v4630, %v4626
        %v4632 = vlaneseq
        %v4633 = vshrl.u32 %v4632, 7
        %v4634 = vsub.s32 %v3581, %v4633
        %v4635 = vrot.slane %v2600, %v4634
        %v4636 = vsel %vm3586, %v4635, %v4631
        %v4637 = vlaneseq
        %v4638 = vshrl.u32 %v4637, 7
        %v4639 = vsub.s32 %v3588, %v4638
        %v4640 = vrot.slane %v2601, %v4639
        %v4641 = vsel %vm3593, %v4640, %v4636
        %v4642 = vlaneseq
        %v4643 = vshrl.u32 %v4642, 7
        %v4644 = vsub.s32 %v3595, %v4643
        %v4645 = vrot.slane %v2602, %v4644
        %v4646 = vsel %vm3600, %v4645, %v4641
        %v4647 = vlaneseq
        %v4648 = vshrl.u32 %v4647, 7
        %v4649 = vsub.s32 %v3602, %v4648
        %v4650 = vrot.slane %v2603, %v4649
        %v4651 = vsel %vm3607, %v4650, %v4646
        %v4652 = vlaneseq
        %v4653 = vshrl.u32 %v4652, 7
        %v4654 = vsub.s32 %v3609, %v4653
        %v4655 = vrot.slane %v2604, %v4654
        %v4656 = vsel %vm3614, %v4655, %v4651
        %v4657 = vlaneseq
        %v4658 = vshrl.u32 %v4657, 7
        %v4659 = vsub.s32 %v3616, %v4658
        %v4660 = vrot.slane %v2605, %v4659
        %v4661 = vsel %vm3621, %v4660, %v4656
        %v4662 = vlaneseq
        %v4663 = vshrl.u32 %v4662, 7
        %v4664 = vsub.s32 %v3623, %v4663
        %v4665 = vrot.slane %v2606, %v4664
        %v4666 = vsel %vm3628, %v4665, %v4661
        %v4667 = vlaneseq
        %v4668 = vshrl.u32 %v4667, 7
        %v4669 = vsub.s32 %v3630, %v4668
        %v4670 = vrot.slane %v2607, %v4669
        %v4671 = vsel %vm3635, %v4670, %v4666
        %v4672 = vlaneseq
        %v4673 = vshrl.u32 %v4672, 7
        %v4674 = vsub.s32 %v3637, %v4673
        %v4675 = vrot.slane %v2608, %v4674
        %v4676 = vsel %vm3642, %v4675, %v4671
        %v4677 = vlaneseq
        %v4678 = vshrl.u32 %v4677, 7
        %v4679 = vsub.s32 %v3644, %v4678
        %v4680 = vrot.slane %v2609, %v4679
        %v4681 = vsel %vm3649, %v4680, %v4676
        %v4682 = vlaneseq
        %v4683 = vshrl.u32 %v4682, 7
        %v4684 = vsub.s32 %v3651, %v4683
        %v4685 = vrot.slane %v2610, %v4684
        %v4686 = vsel %vm3656, %v4685, %v4681
        %v4687 = vlaneseq
        %v4688 = vshrl.u32 %v4687, 7
        %v4689 = vsub.s32 %v3658, %v4688
        %v4690 = vrot.slane %v2611, %v4689
        %v4691 = vsel %vm3663, %v4690, %v4686
        %v4692 = vlaneseq
        %v4693 = vshrl.u32 %v4692, 7
        %v4694 = vsub.s32 %v3555, %v4693
        %v4695 = vrot.slane %v2612, %v4694
        %v4696 = vlaneseq
        %v4697 = vshrl.u32 %v4696, 7
        %v4698 = vsub.s32 %v3560, %v4697
        %v4699 = vrot.slane %v2613, %v4698
        %v4700 = vsel %vm3565, %v4699, %v4695
        %v4701 = vlaneseq
        %v4702 = vshrl.u32 %v4701, 7
        %v4703 = vsub.s32 %v3567, %v4702
        %v4704 = vrot.slane %v2614, %v4703
        %v4705 = vsel %vm3572, %v4704, %v4700
        %v4706 = vlaneseq
        %v4707 = vshrl.u32 %v4706, 7
        %v4708 = vsub.s32 %v3574, %v4707
        %v4709 = vrot.slane %v2615, %v4708
        %v4710 = vsel %vm3579, %v4709, %v4705
        %v4711 = vlaneseq
        %v4712 = vshrl.u32 %v4711, 7
        %v4713 = vsub.s32 %v3581, %v4712
        %v4714 = vrot.slane %v2616, %v4713
        %v4715 = vsel %vm3586, %v4714, %v4710
        %v4716 = vlaneseq
        %v4717 = vshrl.u32 %v4716, 7
        %v4718 = vsub.s32 %v3588, %v4717
        %v4719 = vrot.slane %v2617, %v4718
        %v4720 = vsel %vm3593, %v4719, %v4715
        %v4721 = vlaneseq
        %v4722 = vshrl.u32 %v4721, 7
        %v4723 = vsub.s32 %v3595, %v4722
        %v4724 = vrot.slane %v2618, %v4723
        %v4725 = vsel %vm3600, %v4724, %v4720
        %v4726 = vlaneseq
        %v4727 = vshrl.u32 %v4726, 7
        %v4728 = vsub.s32 %v3602, %v4727
        %v4729 = vrot.slane %v2619, %v4728
        %v4730 = vsel %vm3607, %v4729, %v4725
        %v4731 = vlaneseq
        %v4732 = vshrl.u32 %v4731, 7
        %v4733 = vsub.s32 %v3609, %v4732
        %v4734 = vrot.slane %v2620, %v4733
        %v4735 = vsel %vm3614, %v4734, %v4730
        %v4736 = vlaneseq
        %v4737 = vshrl.u32 %v4736, 7
        %v4738 = vsub.s32 %v3616, %v4737
        %v4739 = vrot.slane %v2621, %v4738
        %v4740 = vsel %vm3621, %v4739, %v4735
        %v4741 = vlaneseq
        %v4742 = vshrl.u32 %v4741, 7
        %v4743 = vsub.s32 %v3623, %v4742
        %v4744 = vrot.slane %v2622, %v4743
        %v4745 = vsel %vm3628, %v4744, %v4740
        %v4746 = vlaneseq
        %v4747 = vshrl.u32 %v4746, 7
        %v4748 = vsub.s32 %v3630, %v4747
        %v4749 = vrot.slane %v2623, %v4748
        %v4750 = vsel %vm3635, %v4749, %v4745
        %v4751 = vlaneseq
        %v4752 = vshrl.u32 %v4751, 7
        %v4753 = vsub.s32 %v3637, %v4752
        %v4754 = vrot.slane %v2624, %v4753
        %v4755 = vsel %vm3642, %v4754, %v4750
        %v4756 = vlaneseq
        %v4757 = vshrl.u32 %v4756, 7
        %v4758 = vsub.s32 %v3644, %v4757
        %v4759 = vrot.slane %v2625, %v4758
        %v4760 = vsel %vm3649, %v4759, %v4755
        %v4761 = vlaneseq
        %v4762 = vshrl.u32 %v4761, 7
        %v4763 = vsub.s32 %v3651, %v4762
        %v4764 = vrot.slane %v2626, %v4763
        %v4765 = vsel %vm3656, %v4764, %v4760
        %v4766 = vlaneseq
        %v4767 = vshrl.u32 %v4766, 7
        %v4768 = vsub.s32 %v3658, %v4767
        %v4769 = vrot.slane %v2627, %v4768
        %v4770 = vsel %vm3663, %v4769, %v4765
        %v4771 = vlaneseq
        %v4772 = vshrl.u32 %v4771, 7
        %v4773 = vsub.s32 %v3555, %v4772
        %v4774 = vrot.slane %v2628, %v4773
        %v4775 = vlaneseq
        %v4776 = vshrl.u32 %v4775, 7
        %v4777 = vsub.s32 %v3560, %v4776
        %v4778 = vrot.slane %v2629, %v4777
        %v4779 = vsel %vm3565, %v4778, %v4774
        %v4780 = vlaneseq
        %v4781 = vshrl.u32 %v4780, 7
        %v4782 = vsub.s32 %v3567, %v4781
        %v4783 = vrot.slane %v2630, %v4782
        %v4784 = vsel %vm3572, %v4783, %v4779
        %v4785 = vlaneseq
        %v4786 = vshrl.u32 %v4785, 7
        %v4787 = vsub.s32 %v3574, %v4786
        %v4788 = vrot.slane %v2631, %v4787
        %v4789 = vsel %vm3579, %v4788, %v4784
        %v4790 = vlaneseq
        %v4791 = vshrl.u32 %v4790, 7
        %v4792 = vsub.s32 %v3581, %v4791
        %v4793 = vrot.slane %v2632, %v4792
        %v4794 = vsel %vm3586, %v4793, %v4789
        %v4795 = vlaneseq
        %v4796 = vshrl.u32 %v4795, 7
        %v4797 = vsub.s32 %v3588, %v4796
        %v4798 = vrot.slane %v2633, %v4797
        %v4799 = vsel %vm3593, %v4798, %v4794
        %v4800 = vlaneseq
        %v4801 = vshrl.u32 %v4800, 7
        %v4802 = vsub.s32 %v3595, %v4801
        %v4803 = vrot.slane %v2634, %v4802
        %v4804 = vsel %vm3600, %v4803, %v4799
        %v4805 = vlaneseq
        %v4806 = vshrl.u32 %v4805, 7
        %v4807 = vsub.s32 %v3602, %v4806
        %v4808 = vrot.slane %v2635, %v4807
        %v4809 = vsel %vm3607, %v4808, %v4804
        %v4810 = vlaneseq
        %v4811 = vshrl.u32 %v4810, 7
        %v4812 = vsub.s32 %v3609, %v4811
        %v4813 = vrot.slane %v2636, %v4812
        %v4814 = vsel %vm3614, %v4813, %v4809
        %v4815 = vlaneseq
        %v4816 = vshrl.u32 %v4815, 7
        %v4817 = vsub.s32 %v3616, %v4816
        %v4818 = vrot.slane %v2637, %v4817
        %v4819 = vsel %vm3621, %v4818, %v4814
        %v4820 = vlaneseq
        %v4821 = vshrl.u32 %v4820, 7
        %v4822 = vsub.s32 %v3623, %v4821
        %v4823 = vrot.slane %v2638, %v4822
        %v4824 = vsel %vm3628, %v4823, %v4819
        %v4825 = vlaneseq
        %v4826 = vshrl.u32 %v4825, 7
        %v4827 = vsub.s32 %v3630, %v4826
        %v4828 = vrot.slane %v2639, %v4827
        %v4829 = vsel %vm3635, %v4828, %v4824
        %v4830 = vlaneseq
        %v4831 = vshrl.u32 %v4830, 7
        %v4832 = vsub.s32 %v3637, %v4831
        %v4833 = vrot.slane %v2640, %v4832
        %v4834 = vsel %vm3642, %v4833, %v4829
        %v4835 = vlaneseq
        %v4836 = vshrl.u32 %v4835, 7
        %v4837 = vsub.s32 %v3644, %v4836
        %v4838 = vrot.slane %v2641, %v4837
        %v4839 = vsel %vm3649, %v4838, %v4834
        %v4840 = vlaneseq
        %v4841 = vshrl.u32 %v4840, 7
        %v4842 = vsub.s32 %v3651, %v4841
        %v4843 = vrot.slane %v2642, %v4842
        %v4844 = vsel %vm3656, %v4843, %v4839
        %v4845 = vlaneseq
        %v4846 = vshrl.u32 %v4845, 7
        %v4847 = vsub.s32 %v3658, %v4846
        %v4848 = vrot.slane %v2643, %v4847
        %v4849 = vsel %vm3663, %v4848, %v4844
        %v4850 = vlaneseq
        %v4851 = vshrl.u32 %v4850, 7
        %v4852 = vsub.s32 %v3555, %v4851
        %v4853 = vrot.slane %v2644, %v4852
        %v4854 = vlaneseq
        %v4855 = vshrl.u32 %v4854, 7
        %v4856 = vsub.s32 %v3560, %v4855
        %v4857 = vrot.slane %v2645, %v4856
        %v4858 = vsel %vm3565, %v4857, %v4853
        %v4859 = vlaneseq
        %v4860 = vshrl.u32 %v4859, 7
        %v4861 = vsub.s32 %v3567, %v4860
        %v4862 = vrot.slane %v2646, %v4861
        %v4863 = vsel %vm3572, %v4862, %v4858
        %v4864 = vlaneseq
        %v4865 = vshrl.u32 %v4864, 7
        %v4866 = vsub.s32 %v3574, %v4865
        %v4867 = vrot.slane %v2647, %v4866
        %v4868 = vsel %vm3579, %v4867, %v4863
        %v4869 = vlaneseq
        %v4870 = vshrl.u32 %v4869, 7
        %v4871 = vsub.s32 %v3581, %v4870
        %v4872 = vrot.slane %v2648, %v4871
        %v4873 = vsel %vm3586, %v4872, %v4868
        %v4874 = vlaneseq
        %v4875 = vshrl.u32 %v4874, 7
        %v4876 = vsub.s32 %v3588, %v4875
        %v4877 = vrot.slane %v2649, %v4876
        %v4878 = vsel %vm3593, %v4877, %v4873
        %v4879 = vlaneseq
        %v4880 = vshrl.u32 %v4879, 7
        %v4881 = vsub.s32 %v3595, %v4880
        %v4882 = vrot.slane %v2650, %v4881
        %v4883 = vsel %vm3600, %v4882, %v4878
        %v4884 = vlaneseq
        %v4885 = vshrl.u32 %v4884, 7
        %v4886 = vsub.s32 %v3602, %v4885
        %v4887 = vrot.slane %v2651, %v4886
        %v4888 = vsel %vm3607, %v4887, %v4883
        %v4889 = vlaneseq
        %v4890 = vshrl.u32 %v4889, 7
        %v4891 = vsub.s32 %v3609, %v4890
        %v4892 = vrot.slane %v2652, %v4891
        %v4893 = vsel %vm3614, %v4892, %v4888
        %v4894 = vlaneseq
        %v4895 = vshrl.u32 %v4894, 7
        %v4896 = vsub.s32 %v3616, %v4895
        %v4897 = vrot.slane %v2653, %v4896
        %v4898 = vsel %vm3621, %v4897, %v4893
        %v4899 = vlaneseq
        %v4900 = vshrl.u32 %v4899, 7
        %v4901 = vsub.s32 %v3623, %v4900
        %v4902 = vrot.slane %v2654, %v4901
        %v4903 = vsel %vm3628, %v4902, %v4898
        %v4904 = vlaneseq
        %v4905 = vshrl.u32 %v4904, 7
        %v4906 = vsub.s32 %v3630, %v4905
        %v4907 = vrot.slane %v2655, %v4906
        %v4908 = vsel %vm3635, %v4907, %v4903
        %v4909 = vlaneseq
        %v4910 = vshrl.u32 %v4909, 7
        %v4911 = vsub.s32 %v3637, %v4910
        %v4912 = vrot.slane %v2656, %v4911
        %v4913 = vsel %vm3642, %v4912, %v4908
        %v4914 = vlaneseq
        %v4915 = vshrl.u32 %v4914, 7
        %v4916 = vsub.s32 %v3644, %v4915
        %v4917 = vrot.slane %v2657, %v4916
        %v4918 = vsel %vm3649, %v4917, %v4913
        %v4919 = vlaneseq
        %v4920 = vshrl.u32 %v4919, 7
        %v4921 = vsub.s32 %v3651, %v4920
        %v4922 = vrot.slane %v2658, %v4921
        %v4923 = vsel %vm3656, %v4922, %v4918
        %v4924 = vlaneseq
        %v4925 = vshrl.u32 %v4924, 7
        %v4926 = vsub.s32 %v3658, %v4925
        %v4927 = vrot.slane %v2659, %v4926
        %v4928 = vsel %vm3663, %v4927, %v4923
        %v4929 = vlaneseq
        %v4930 = vshrl.u32 %v4929, 7
        %v4931 = vsub.s32 %v3555, %v4930
        %v4932 = vrot.slane %v2660, %v4931
        %v4933 = vlaneseq
        %v4934 = vshrl.u32 %v4933, 7
        %v4935 = vsub.s32 %v3560, %v4934
        %v4936 = vrot.slane %v2661, %v4935
        %v4937 = vsel %vm3565, %v4936, %v4932
        %v4938 = vlaneseq
        %v4939 = vshrl.u32 %v4938, 7
        %v4940 = vsub.s32 %v3567, %v4939
        %v4941 = vrot.slane %v2662, %v4940
        %v4942 = vsel %vm3572, %v4941, %v4937
        %v4943 = vlaneseq
        %v4944 = vshrl.u32 %v4943, 7
        %v4945 = vsub.s32 %v3574, %v4944
        %v4946 = vrot.slane %v2663, %v4945
        %v4947 = vsel %vm3579, %v4946, %v4942
        %v4948 = vlaneseq
        %v4949 = vshrl.u32 %v4948, 7
        %v4950 = vsub.s32 %v3581, %v4949
        %v4951 = vrot.slane %v2664, %v4950
        %v4952 = vsel %vm3586, %v4951, %v4947
        %v4953 = vlaneseq
        %v4954 = vshrl.u32 %v4953, 7
        %v4955 = vsub.s32 %v3588, %v4954
        %v4956 = vrot.slane %v2665, %v4955
        %v4957 = vsel %vm3593, %v4956, %v4952
        %v4958 = vlaneseq
        %v4959 = vshrl.u32 %v4958, 7
        %v4960 = vsub.s32 %v3595, %v4959
        %v4961 = vrot.slane %v2666, %v4960
        %v4962 = vsel %vm3600, %v4961, %v4957
        %v4963 = vlaneseq
        %v4964 = vshrl.u32 %v4963, 7
        %v4965 = vsub.s32 %v3602, %v4964
        %v4966 = vrot.slane %v2667, %v4965
        %v4967 = vsel %vm3607, %v4966, %v4962
        %v4968 = vlaneseq
        %v4969 = vshrl.u32 %v4968, 7
        %v4970 = vsub.s32 %v3609, %v4969
        %v4971 = vrot.slane %v2668, %v4970
        %v4972 = vsel %vm3614, %v4971, %v4967
        %v4973 = vlaneseq
        %v4974 = vshrl.u32 %v4973, 7
        %v4975 = vsub.s32 %v3616, %v4974
        %v4976 = vrot.slane %v2669, %v4975
        %v4977 = vsel %vm3621, %v4976, %v4972
        %v4978 = vlaneseq
        %v4979 = vshrl.u32 %v4978, 7
        %v4980 = vsub.s32 %v3623, %v4979
        %v4981 = vrot.slane %v2670, %v4980
        %v4982 = vsel %vm3628, %v4981, %v4977
        %v4983 = vlaneseq
        %v4984 = vshrl.u32 %v4983, 7
        %v4985 = vsub.s32 %v3630, %v4984
        %v4986 = vrot.slane %v2671, %v4985
        %v4987 = vsel %vm3635, %v4986, %v4982
        %v4988 = vlaneseq
        %v4989 = vshrl.u32 %v4988, 7
        %v4990 = vsub.s32 %v3637, %v4989
        %v4991 = vrot.slane %v2672, %v4990
        %v4992 = vsel %vm3642, %v4991, %v4987
        %v4993 = vlaneseq
        %v4994 = vshrl.u32 %v4993, 7
        %v4995 = vsub.s32 %v3644, %v4994
        %v4996 = vrot.slane %v2673, %v4995
        %v4997 = vsel %vm3649, %v4996, %v4992
        %v4998 = vlaneseq
        %v4999 = vshrl.u32 %v4998, 7
        %v5000 = vsub.s32 %v3651, %v4999
        %v5001 = vrot.slane %v2674, %v5000
        %v5002 = vsel %vm3656, %v5001, %v4997
        %v5003 = vlaneseq
        %v5004 = vshrl.u32 %v5003, 7
        %v5005 = vsub.s32 %v3658, %v5004
        %v5006 = vrot.slane %v2675, %v5005
        %v5007 = vsel %vm3663, %v5006, %v5002
        %v5008 = vlaneseq
        %v5009 = vshrl.u32 %v5008, 7
        %v5010 = vsub.s32 %v3555, %v5009
        %v5011 = vrot.slane %v2676, %v5010
        %v5012 = vlaneseq
        %v5013 = vshrl.u32 %v5012, 7
        %v5014 = vsub.s32 %v3560, %v5013
        %v5015 = vrot.slane %v2677, %v5014
        %v5016 = vsel %vm3565, %v5015, %v5011
        %v5017 = vlaneseq
        %v5018 = vshrl.u32 %v5017, 7
        %v5019 = vsub.s32 %v3567, %v5018
        %v5020 = vrot.slane %v2678, %v5019
        %v5021 = vsel %vm3572, %v5020, %v5016
        %v5022 = vlaneseq
        %v5023 = vshrl.u32 %v5022, 7
        %v5024 = vsub.s32 %v3574, %v5023
        %v5025 = vrot.slane %v2679, %v5024
        %v5026 = vsel %vm3579, %v5025, %v5021
        %v5027 = vlaneseq
        %v5028 = vshrl.u32 %v5027, 7
        %v5029 = vsub.s32 %v3581, %v5028
        %v5030 = vrot.slane %v2680, %v5029
        %v5031 = vsel %vm3586, %v5030, %v5026
        %v5032 = vlaneseq
        %v5033 = vshrl.u32 %v5032, 7
        %v5034 = vsub.s32 %v3588, %v5033
        %v5035 = vrot.slane %v2681, %v5034
        %v5036 = vsel %vm3593, %v5035, %v5031
        %v5037 = vlaneseq
        %v5038 = vshrl.u32 %v5037, 7
        %v5039 = vsub.s32 %v3595, %v5038
        %v5040 = vrot.slane %v2682, %v5039
        %v5041 = vsel %vm3600, %v5040, %v5036
        %v5042 = vlaneseq
        %v5043 = vshrl.u32 %v5042, 7
        %v5044 = vsub.s32 %v3602, %v5043
        %v5045 = vrot.slane %v2683, %v5044
        %v5046 = vsel %vm3607, %v5045, %v5041
        %v5047 = vlaneseq
        %v5048 = vshrl.u32 %v5047, 7
        %v5049 = vsub.s32 %v3609, %v5048
        %v5050 = vrot.slane %v2684, %v5049
        %v5051 = vsel %vm3614, %v5050, %v5046
        %v5052 = vlaneseq
        %v5053 = vshrl.u32 %v5052, 7
        %v5054 = vsub.s32 %v3616, %v5053
        %v5055 = vrot.slane %v2685, %v5054
        %v5056 = vsel %vm3621, %v5055, %v5051
        %v5057 = vlaneseq
        %v5058 = vshrl.u32 %v5057, 7
        %v5059 = vsub.s32 %v3623, %v5058
        %v5060 = vrot.slane %v2686, %v5059
        %v5061 = vsel %vm3628, %v5060, %v5056
        %v5062 = vlaneseq
        %v5063 = vshrl.u32 %v5062, 7
        %v5064 = vsub.s32 %v3630, %v5063
        %v5065 = vrot.slane %v2687, %v5064
        %v5066 = vsel %vm3635, %v5065, %v5061
        %v5067 = vlaneseq
        %v5068 = vshrl.u32 %v5067, 7
        %v5069 = vsub.s32 %v3637, %v5068
        %v5070 = vrot.slane %v2688, %v5069
        %v5071 = vsel %vm3642, %v5070, %v5066
        %v5072 = vlaneseq
        %v5073 = vshrl.u32 %v5072, 7
        %v5074 = vsub.s32 %v3644, %v5073
        %v5075 = vrot.slane %v2689, %v5074
        %v5076 = vsel %vm3649, %v5075, %v5071
        %v5077 = vlaneseq
        %v5078 = vshrl.u32 %v5077, 7
        %v5079 = vsub.s32 %v3651, %v5078
        %v5080 = vrot.slane %v2690, %v5079
        %v5081 = vsel %vm3656, %v5080, %v5076
        %v5082 = vlaneseq
        %v5083 = vshrl.u32 %v5082, 7
        %v5084 = vsub.s32 %v3658, %v5083
        %v5085 = vrot.slane %v2691, %v5084
        %v5086 = vsel %vm3663, %v5085, %v5081
        %v5087 = vlaneseq
        %v5088 = vshrl.u32 %v5087, 7
        %v5089 = vsub.s32 %v3555, %v5088
        %v5090 = vrot.slane %v2692, %v5089
        %v5091 = vlaneseq
        %v5092 = vshrl.u32 %v5091, 7
        %v5093 = vsub.s32 %v3560, %v5092
        %v5094 = vrot.slane %v2693, %v5093
        %v5095 = vsel %vm3565, %v5094, %v5090
        %v5096 = vlaneseq
        %v5097 = vshrl.u32 %v5096, 7
        %v5098 = vsub.s32 %v3567, %v5097
        %v5099 = vrot.slane %v2694, %v5098
        %v5100 = vsel %vm3572, %v5099, %v5095
        %v5101 = vlaneseq
        %v5102 = vshrl.u32 %v5101, 7
        %v5103 = vsub.s32 %v3574, %v5102
        %v5104 = vrot.slane %v2695, %v5103
        %v5105 = vsel %vm3579, %v5104, %v5100
        %v5106 = vlaneseq
        %v5107 = vshrl.u32 %v5106, 7
        %v5108 = vsub.s32 %v3581, %v5107
        %v5109 = vrot.slane %v2696, %v5108
        %v5110 = vsel %vm3586, %v5109, %v5105
        %v5111 = vlaneseq
        %v5112 = vshrl.u32 %v5111, 7
        %v5113 = vsub.s32 %v3588, %v5112
        %v5114 = vrot.slane %v2697, %v5113
        %v5115 = vsel %vm3593, %v5114, %v5110
        %v5116 = vlaneseq
        %v5117 = vshrl.u32 %v5116, 7
        %v5118 = vsub.s32 %v3595, %v5117
        %v5119 = vrot.slane %v2698, %v5118
        %v5120 = vsel %vm3600, %v5119, %v5115
        %v5121 = vlaneseq
        %v5122 = vshrl.u32 %v5121, 7
        %v5123 = vsub.s32 %v3602, %v5122
        %v5124 = vrot.slane %v2699, %v5123
        %v5125 = vsel %vm3607, %v5124, %v5120
        %v5126 = vlaneseq
        %v5127 = vshrl.u32 %v5126, 7
        %v5128 = vsub.s32 %v3609, %v5127
        %v5129 = vrot.slane %v2700, %v5128
        %v5130 = vsel %vm3614, %v5129, %v5125
        %v5131 = vlaneseq
        %v5132 = vshrl.u32 %v5131, 7
        %v5133 = vsub.s32 %v3616, %v5132
        %v5134 = vrot.slane %v2701, %v5133
        %v5135 = vsel %vm3621, %v5134, %v5130
        %v5136 = vlaneseq
        %v5137 = vshrl.u32 %v5136, 7
        %v5138 = vsub.s32 %v3623, %v5137
        %v5139 = vrot.slane %v2702, %v5138
        %v5140 = vsel %vm3628, %v5139, %v5135
        %v5141 = vlaneseq
        %v5142 = vshrl.u32 %v5141, 7
        %v5143 = vsub.s32 %v3630, %v5142
        %v5144 = vrot.slane %v2703, %v5143
        %v5145 = vsel %vm3635, %v5144, %v5140
        %v5146 = vlaneseq
        %v5147 = vshrl.u32 %v5146, 7
        %v5148 = vsub.s32 %v3637, %v5147
        %v5149 = vrot.slane %v2704, %v5148
        %v5150 = vsel %vm3642, %v5149, %v5145
        %v5151 = vlaneseq
        %v5152 = vshrl.u32 %v5151, 7
        %v5153 = vsub.s32 %v3644, %v5152
        %v5154 = vrot.slane %v2705, %v5153
        %v5155 = vsel %vm3649, %v5154, %v5150
        %v5156 = vlaneseq
        %v5157 = vshrl.u32 %v5156, 7
        %v5158 = vsub.s32 %v3651, %v5157
        %v5159 = vrot.slane %v2706, %v5158
        %v5160 = vsel %vm3656, %v5159, %v5155
        %v5161 = vlaneseq
        %v5162 = vshrl.u32 %v5161, 7
        %v5163 = vsub.s32 %v3658, %v5162
        %v5164 = vrot.slane %v2707, %v5163
        %v5165 = vsel %vm3663, %v5164, %v5160
        %v5166 = vlaneseq
        %v5167 = vshrl.u32 %v5166, 7
        %v5168 = vsub.s32 %v3555, %v5167
        %v5169 = vrot.slane %v2708, %v5168
        %v5170 = vlaneseq
        %v5171 = vshrl.u32 %v5170, 7
        %v5172 = vsub.s32 %v3560, %v5171
        %v5173 = vrot.slane %v2709, %v5172
        %v5174 = vsel %vm3565, %v5173, %v5169
        %v5175 = vlaneseq
        %v5176 = vshrl.u32 %v5175, 7
        %v5177 = vsub.s32 %v3567, %v5176
        %v5178 = vrot.slane %v2710, %v5177
        %v5179 = vsel %vm3572, %v5178, %v5174
        %v5180 = vlaneseq
        %v5181 = vshrl.u32 %v5180, 7
        %v5182 = vsub.s32 %v3574, %v5181
        %v5183 = vrot.slane %v2711, %v5182
        %v5184 = vsel %vm3579, %v5183, %v5179
        %v5185 = vlaneseq
        %v5186 = vshrl.u32 %v5185, 7
        %v5187 = vsub.s32 %v3581, %v5186
        %v5188 = vrot.slane %v2712, %v5187
        %v5189 = vsel %vm3586, %v5188, %v5184
        %v5190 = vlaneseq
        %v5191 = vshrl.u32 %v5190, 7
        %v5192 = vsub.s32 %v3588, %v5191
        %v5193 = vrot.slane %v2713, %v5192
        %v5194 = vsel %vm3593, %v5193, %v5189
        %v5195 = vlaneseq
        %v5196 = vshrl.u32 %v5195, 7
        %v5197 = vsub.s32 %v3595, %v5196
        %v5198 = vrot.slane %v2714, %v5197
        %v5199 = vsel %vm3600, %v5198, %v5194
        %v5200 = vlaneseq
        %v5201 = vshrl.u32 %v5200, 7
        %v5202 = vsub.s32 %v3602, %v5201
        %v5203 = vrot.slane %v2715, %v5202
        %v5204 = vsel %vm3607, %v5203, %v5199
        %v5205 = vlaneseq
        %v5206 = vshrl.u32 %v5205, 7
        %v5207 = vsub.s32 %v3609, %v5206
        %v5208 = vrot.slane %v2716, %v5207
        %v5209 = vsel %vm3614, %v5208, %v5204
        %v5210 = vlaneseq
        %v5211 = vshrl.u32 %v5210, 7
        %v5212 = vsub.s32 %v3616, %v5211
        %v5213 = vrot.slane %v2717, %v5212
        %v5214 = vsel %vm3621, %v5213, %v5209
        %v5215 = vlaneseq
        %v5216 = vshrl.u32 %v5215, 7
        %v5217 = vsub.s32 %v3623, %v5216
        %v5218 = vrot.slane %v2718, %v5217
        %v5219 = vsel %vm3628, %v5218, %v5214
        %v5220 = vlaneseq
        %v5221 = vshrl.u32 %v5220, 7
        %v5222 = vsub.s32 %v3630, %v5221
        %v5223 = vrot.slane %v2719, %v5222
        %v5224 = vsel %vm3635, %v5223, %v5219
        %v5225 = vlaneseq
        %v5226 = vshrl.u32 %v5225, 7
        %v5227 = vsub.s32 %v3637, %v5226
        %v5228 = vrot.slane %v2720, %v5227
        %v5229 = vsel %vm3642, %v5228, %v5224
        %v5230 = vlaneseq
        %v5231 = vshrl.u32 %v5230, 7
        %v5232 = vsub.s32 %v3644, %v5231
        %v5233 = vrot.slane %v2721, %v5232
        %v5234 = vsel %vm3649, %v5233, %v5229
        %v5235 = vlaneseq
        %v5236 = vshrl.u32 %v5235, 7
        %v5237 = vsub.s32 %v3651, %v5236
        %v5238 = vrot.slane %v2722, %v5237
        %v5239 = vsel %vm3656, %v5238, %v5234
        %v5240 = vlaneseq
        %v5241 = vshrl.u32 %v5240, 7
        %v5242 = vsub.s32 %v3658, %v5241
        %v5243 = vrot.slane %v2723, %v5242
        %v5244 = vsel %vm3663, %v5243, %v5239
        %v5245 = vlaneseq
        %v5246 = vshrl.u32 %v5245, 7
        %v5247 = vsub.s32 %v3555, %v5246
        %v5248 = vrot.slane %v2724, %v5247
        %v5249 = vlaneseq
        %v5250 = vshrl.u32 %v5249, 7
        %v5251 = vsub.s32 %v3560, %v5250
        %v5252 = vrot.slane %v2725, %v5251
        %v5253 = vsel %vm3565, %v5252, %v5248
        %v5254 = vlaneseq
        %v5255 = vshrl.u32 %v5254, 7
        %v5256 = vsub.s32 %v3567, %v5255
        %v5257 = vrot.slane %v2726, %v5256
        %v5258 = vsel %vm3572, %v5257, %v5253
        %v5259 = vlaneseq
        %v5260 = vshrl.u32 %v5259, 7
        %v5261 = vsub.s32 %v3574, %v5260
        %v5262 = vrot.slane %v2727, %v5261
        %v5263 = vsel %vm3579, %v5262, %v5258
        %v5264 = vlaneseq
        %v5265 = vshrl.u32 %v5264, 7
        %v5266 = vsub.s32 %v3581, %v5265
        %v5267 = vrot.slane %v2728, %v5266
        %v5268 = vsel %vm3586, %v5267, %v5263
        %v5269 = vlaneseq
        %v5270 = vshrl.u32 %v5269, 7
        %v5271 = vsub.s32 %v3588, %v5270
        %v5272 = vrot.slane %v2729, %v5271
        %v5273 = vsel %vm3593, %v5272, %v5268
        %v5274 = vlaneseq
        %v5275 = vshrl.u32 %v5274, 7
        %v5276 = vsub.s32 %v3595, %v5275
        %v5277 = vrot.slane %v2730, %v5276
        %v5278 = vsel %vm3600, %v5277, %v5273
        %v5279 = vlaneseq
        %v5280 = vshrl.u32 %v5279, 7
        %v5281 = vsub.s32 %v3602, %v5280
        %v5282 = vrot.slane %v2731, %v5281
        %v5283 = vsel %vm3607, %v5282, %v5278
        %v5284 = vlaneseq
        %v5285 = vshrl.u32 %v5284, 7
        %v5286 = vsub.s32 %v3609, %v5285
        %v5287 = vrot.slane %v2732, %v5286
        %v5288 = vsel %vm3614, %v5287, %v5283
        %v5289 = vlaneseq
        %v5290 = vshrl.u32 %v5289, 7
        %v5291 = vsub.s32 %v3616, %v5290
        %v5292 = vrot.slane %v2733, %v5291
        %v5293 = vsel %vm3621, %v5292, %v5288
        %v5294 = vlaneseq
        %v5295 = vshrl.u32 %v5294, 7
        %v5296 = vsub.s32 %v3623, %v5295
        %v5297 = vrot.slane %v2734, %v5296
        %v5298 = vsel %vm3628, %v5297, %v5293
        %v5299 = vlaneseq
        %v5300 = vshrl.u32 %v5299, 7
        %v5301 = vsub.s32 %v3630, %v5300
        %v5302 = vrot.slane %v2735, %v5301
        %v5303 = vsel %vm3635, %v5302, %v5298
        %v5304 = vlaneseq
        %v5305 = vshrl.u32 %v5304, 7
        %v5306 = vsub.s32 %v3637, %v5305
        %v5307 = vrot.slane %v2736, %v5306
        %v5308 = vsel %vm3642, %v5307, %v5303
        %v5309 = vlaneseq
        %v5310 = vshrl.u32 %v5309, 7
        %v5311 = vsub.s32 %v3644, %v5310
        %v5312 = vrot.slane %v2737, %v5311
        %v5313 = vsel %vm3649, %v5312, %v5308
        %v5314 = vlaneseq
        %v5315 = vshrl.u32 %v5314, 7
        %v5316 = vsub.s32 %v3651, %v5315
        %v5317 = vrot.slane %v2738, %v5316
        %v5318 = vsel %vm3656, %v5317, %v5313
        %v5319 = vlaneseq
        %v5320 = vshrl.u32 %v5319, 7
        %v5321 = vsub.s32 %v3658, %v5320
        %v5322 = vrot.slane %v2739, %v5321
        %v5323 = vsel %vm3663, %v5322, %v5318
        %v5324 = vlaneseq
        %v5325 = vshrl.u32 %v5324, 7
        %v5326 = vsub.s32 %v3555, %v5325
        %v5327 = vrot.slane %v2740, %v5326
        %v5328 = vlaneseq
        %v5329 = vshrl.u32 %v5328, 7
        %v5330 = vsub.s32 %v3560, %v5329
        %v5331 = vrot.slane %v2741, %v5330
        %v5332 = vsel %vm3565, %v5331, %v5327
        %v5333 = vlaneseq
        %v5334 = vshrl.u32 %v5333, 7
        %v5335 = vsub.s32 %v3567, %v5334
        %v5336 = vrot.slane %v2742, %v5335
        %v5337 = vsel %vm3572, %v5336, %v5332
        %v5338 = vlaneseq
        %v5339 = vshrl.u32 %v5338, 7
        %v5340 = vsub.s32 %v3574, %v5339
        %v5341 = vrot.slane %v2743, %v5340
        %v5342 = vsel %vm3579, %v5341, %v5337
        %v5343 = vlaneseq
        %v5344 = vshrl.u32 %v5343, 7
        %v5345 = vsub.s32 %v3581, %v5344
        %v5346 = vrot.slane %v2744, %v5345
        %v5347 = vsel %vm3586, %v5346, %v5342
        %v5348 = vlaneseq
        %v5349 = vshrl.u32 %v5348, 7
        %v5350 = vsub.s32 %v3588, %v5349
        %v5351 = vrot.slane %v2745, %v5350
        %v5352 = vsel %vm3593, %v5351, %v5347
        %v5353 = vlaneseq
        %v5354 = vshrl.u32 %v5353, 7
        %v5355 = vsub.s32 %v3595, %v5354
        %v5356 = vrot.slane %v2746, %v5355
        %v5357 = vsel %vm3600, %v5356, %v5352
        %v5358 = vlaneseq
        %v5359 = vshrl.u32 %v5358, 7
        %v5360 = vsub.s32 %v3602, %v5359
        %v5361 = vrot.slane %v2747, %v5360
        %v5362 = vsel %vm3607, %v5361, %v5357
        %v5363 = vlaneseq
        %v5364 = vshrl.u32 %v5363, 7
        %v5365 = vsub.s32 %v3609, %v5364
        %v5366 = vrot.slane %v2748, %v5365
        %v5367 = vsel %vm3614, %v5366, %v5362
        %v5368 = vlaneseq
        %v5369 = vshrl.u32 %v5368, 7
        %v5370 = vsub.s32 %v3616, %v5369
        %v5371 = vrot.slane %v2749, %v5370
        %v5372 = vsel %vm3621, %v5371, %v5367
        %v5373 = vlaneseq
        %v5374 = vshrl.u32 %v5373, 7
        %v5375 = vsub.s32 %v3623, %v5374
        %v5376 = vrot.slane %v2750, %v5375
        %v5377 = vsel %vm3628, %v5376, %v5372
        %v5378 = vlaneseq
        %v5379 = vshrl.u32 %v5378, 7
        %v5380 = vsub.s32 %v3630, %v5379
        %v5381 = vrot.slane %v2751, %v5380
        %v5382 = vsel %vm3635, %v5381, %v5377
        %v5383 = vlaneseq
        %v5384 = vshrl.u32 %v5383, 7
        %v5385 = vsub.s32 %v3637, %v5384
        %v5386 = vrot.slane %v2752, %v5385
        %v5387 = vsel %vm3642, %v5386, %v5382
        %v5388 = vlaneseq
        %v5389 = vshrl.u32 %v5388, 7
        %v5390 = vsub.s32 %v3644, %v5389
        %v5391 = vrot.slane %v2753, %v5390
        %v5392 = vsel %vm3649, %v5391, %v5387
        %v5393 = vlaneseq
        %v5394 = vshrl.u32 %v5393, 7
        %v5395 = vsub.s32 %v3651, %v5394
        %v5396 = vrot.slane %v2754, %v5395
        %v5397 = vsel %vm3656, %v5396, %v5392
        %v5398 = vlaneseq
        %v5399 = vshrl.u32 %v5398, 7
        %v5400 = vsub.s32 %v3658, %v5399
        %v5401 = vrot.slane %v2755, %v5400
        %v5402 = vsel %vm3663, %v5401, %v5397
        %v5403 = vlaneseq
        %v5404 = vshrl.u32 %v5403, 7
        %v5405 = vsub.s32 %v3555, %v5404
        %v5406 = vrot.slane %v2756, %v5405
        %v5407 = vlaneseq
        %v5408 = vshrl.u32 %v5407, 7
        %v5409 = vsub.s32 %v3560, %v5408
        %v5410 = vrot.slane %v2757, %v5409
        %v5411 = vsel %vm3565, %v5410, %v5406
        %v5412 = vlaneseq
        %v5413 = vshrl.u32 %v5412, 7
        %v5414 = vsub.s32 %v3567, %v5413
        %v5415 = vrot.slane %v2758, %v5414
        %v5416 = vsel %vm3572, %v5415, %v5411
        %v5417 = vlaneseq
        %v5418 = vshrl.u32 %v5417, 7
        %v5419 = vsub.s32 %v3574, %v5418
        %v5420 = vrot.slane %v2759, %v5419
        %v5421 = vsel %vm3579, %v5420, %v5416
        %v5422 = vlaneseq
        %v5423 = vshrl.u32 %v5422, 7
        %v5424 = vsub.s32 %v3581, %v5423
        %v5425 = vrot.slane %v2760, %v5424
        %v5426 = vsel %vm3586, %v5425, %v5421
        %v5427 = vlaneseq
        %v5428 = vshrl.u32 %v5427, 7
        %v5429 = vsub.s32 %v3588, %v5428
        %v5430 = vrot.slane %v2761, %v5429
        %v5431 = vsel %vm3593, %v5430, %v5426
        %v5432 = vlaneseq
        %v5433 = vshrl.u32 %v5432, 7
        %v5434 = vsub.s32 %v3595, %v5433
        %v5435 = vrot.slane %v2762, %v5434
        %v5436 = vsel %vm3600, %v5435, %v5431
        %v5437 = vlaneseq
        %v5438 = vshrl.u32 %v5437, 7
        %v5439 = vsub.s32 %v3602, %v5438
        %v5440 = vrot.slane %v2763, %v5439
        %v5441 = vsel %vm3607, %v5440, %v5436
        %v5442 = vlaneseq
        %v5443 = vshrl.u32 %v5442, 7
        %v5444 = vsub.s32 %v3609, %v5443
        %v5445 = vrot.slane %v2764, %v5444
        %v5446 = vsel %vm3614, %v5445, %v5441
        %v5447 = vlaneseq
        %v5448 = vshrl.u32 %v5447, 7
        %v5449 = vsub.s32 %v3616, %v5448
        %v5450 = vrot.slane %v2765, %v5449
        %v5451 = vsel %vm3621, %v5450, %v5446
        %v5452 = vlaneseq
        %v5453 = vshrl.u32 %v5452, 7
        %v5454 = vsub.s32 %v3623, %v5453
        %v5455 = vrot.slane %v2766, %v5454
        %v5456 = vsel %vm3628, %v5455, %v5451
        %v5457 = vlaneseq
        %v5458 = vshrl.u32 %v5457, 7
        %v5459 = vsub.s32 %v3630, %v5458
        %v5460 = vrot.slane %v2767, %v5459
        %v5461 = vsel %vm3635, %v5460, %v5456
        %v5462 = vlaneseq
        %v5463 = vshrl.u32 %v5462, 7
        %v5464 = vsub.s32 %v3637, %v5463
        %v5465 = vrot.slane %v2768, %v5464
        %v5466 = vsel %vm3642, %v5465, %v5461
        %v5467 = vlaneseq
        %v5468 = vshrl.u32 %v5467, 7
        %v5469 = vsub.s32 %v3644, %v5468
        %v5470 = vrot.slane %v2769, %v5469
        %v5471 = vsel %vm3649, %v5470, %v5466
        %v5472 = vlaneseq
        %v5473 = vshrl.u32 %v5472, 7
        %v5474 = vsub.s32 %v3651, %v5473
        %v5475 = vrot.slane %v2770, %v5474
        %v5476 = vsel %vm3656, %v5475, %v5471
        %v5477 = vlaneseq
        %v5478 = vshrl.u32 %v5477, 7
        %v5479 = vsub.s32 %v3658, %v5478
        %v5480 = vrot.slane %v2771, %v5479
        %v5481 = vsel %vm3663, %v5480, %v5476
        %v5482 = vlaneseq
        %v5483 = vshrl.u32 %v5482, 7
        %v5484 = vsub.s32 %v3555, %v5483
        %v5485 = vrot.slane %v2772, %v5484
        %v5486 = vlaneseq
        %v5487 = vshrl.u32 %v5486, 7
        %v5488 = vsub.s32 %v3560, %v5487
        %v5489 = vrot.slane %v2773, %v5488
        %v5490 = vsel %vm3565, %v5489, %v5485
        %v5491 = vlaneseq
        %v5492 = vshrl.u32 %v5491, 7
        %v5493 = vsub.s32 %v3567, %v5492
        %v5494 = vrot.slane %v2774, %v5493
        %v5495 = vsel %vm3572, %v5494, %v5490
        %v5496 = vlaneseq
        %v5497 = vshrl.u32 %v5496, 7
        %v5498 = vsub.s32 %v3574, %v5497
        %v5499 = vrot.slane %v2775, %v5498
        %v5500 = vsel %vm3579, %v5499, %v5495
        %v5501 = vlaneseq
        %v5502 = vshrl.u32 %v5501, 7
        %v5503 = vsub.s32 %v3581, %v5502
        %v5504 = vrot.slane %v2776, %v5503
        %v5505 = vsel %vm3586, %v5504, %v5500
        %v5506 = vlaneseq
        %v5507 = vshrl.u32 %v5506, 7
        %v5508 = vsub.s32 %v3588, %v5507
        %v5509 = vrot.slane %v2777, %v5508
        %v5510 = vsel %vm3593, %v5509, %v5505
        %v5511 = vlaneseq
        %v5512 = vshrl.u32 %v5511, 7
        %v5513 = vsub.s32 %v3595, %v5512
        %v5514 = vrot.slane %v2778, %v5513
        %v5515 = vsel %vm3600, %v5514, %v5510
        %v5516 = vlaneseq
        %v5517 = vshrl.u32 %v5516, 7
        %v5518 = vsub.s32 %v3602, %v5517
        %v5519 = vrot.slane %v2779, %v5518
        %v5520 = vsel %vm3607, %v5519, %v5515
        %v5521 = vlaneseq
        %v5522 = vshrl.u32 %v5521, 7
        %v5523 = vsub.s32 %v3609, %v5522
        %v5524 = vrot.slane %v2780, %v5523
        %v5525 = vsel %vm3614, %v5524, %v5520
        %v5526 = vlaneseq
        %v5527 = vshrl.u32 %v5526, 7
        %v5528 = vsub.s32 %v3616, %v5527
        %v5529 = vrot.slane %v2781, %v5528
        %v5530 = vsel %vm3621, %v5529, %v5525
        %v5531 = vlaneseq
        %v5532 = vshrl.u32 %v5531, 7
        %v5533 = vsub.s32 %v3623, %v5532
        %v5534 = vrot.slane %v2782, %v5533
        %v5535 = vsel %vm3628, %v5534, %v5530
        %v5536 = vlaneseq
        %v5537 = vshrl.u32 %v5536, 7
        %v5538 = vsub.s32 %v3630, %v5537
        %v5539 = vrot.slane %v2783, %v5538
        %v5540 = vsel %vm3635, %v5539, %v5535
        %v5541 = vlaneseq
        %v5542 = vshrl.u32 %v5541, 7
        %v5543 = vsub.s32 %v3637, %v5542
        %v5544 = vrot.slane %v2784, %v5543
        %v5545 = vsel %vm3642, %v5544, %v5540
        %v5546 = vlaneseq
        %v5547 = vshrl.u32 %v5546, 7
        %v5548 = vsub.s32 %v3644, %v5547
        %v5549 = vrot.slane %v2785, %v5548
        %v5550 = vsel %vm3649, %v5549, %v5545
        %v5551 = vlaneseq
        %v5552 = vshrl.u32 %v5551, 7
        %v5553 = vsub.s32 %v3651, %v5552
        %v5554 = vrot.slane %v2786, %v5553
        %v5555 = vsel %vm3656, %v5554, %v5550
        %v5556 = vlaneseq
        %v5557 = vshrl.u32 %v5556, 7
        %v5558 = vsub.s32 %v3658, %v5557
        %v5559 = vrot.slane %v2787, %v5558
        %v5560 = vsel %vm3663, %v5559, %v5555
        %v5561 = vlaneseq
        %v5562 = vshrl.u32 %v5561, 7
        %v5563 = vsub.s32 %v3555, %v5562
        %v5564 = vrot.slane %v2788, %v5563
        %v5565 = vlaneseq
        %v5566 = vshrl.u32 %v5565, 7
        %v5567 = vsub.s32 %v3560, %v5566
        %v5568 = vrot.slane %v2789, %v5567
        %v5569 = vsel %vm3565, %v5568, %v5564
        %v5570 = vlaneseq
        %v5571 = vshrl.u32 %v5570, 7
        %v5572 = vsub.s32 %v3567, %v5571
        %v5573 = vrot.slane %v2790, %v5572
        %v5574 = vsel %vm3572, %v5573, %v5569
        %v5575 = vlaneseq
        %v5576 = vshrl.u32 %v5575, 7
        %v5577 = vsub.s32 %v3574, %v5576
        %v5578 = vrot.slane %v2791, %v5577
        %v5579 = vsel %vm3579, %v5578, %v5574
        %v5580 = vlaneseq
        %v5581 = vshrl.u32 %v5580, 7
        %v5582 = vsub.s32 %v3581, %v5581
        %v5583 = vrot.slane %v2792, %v5582
        %v5584 = vsel %vm3586, %v5583, %v5579
        %v5585 = vlaneseq
        %v5586 = vshrl.u32 %v5585, 7
        %v5587 = vsub.s32 %v3588, %v5586
        %v5588 = vrot.slane %v2793, %v5587
        %v5589 = vsel %vm3593, %v5588, %v5584
        %v5590 = vlaneseq
        %v5591 = vshrl.u32 %v5590, 7
        %v5592 = vsub.s32 %v3595, %v5591
        %v5593 = vrot.slane %v2794, %v5592
        %v5594 = vsel %vm3600, %v5593, %v5589
        %v5595 = vlaneseq
        %v5596 = vshrl.u32 %v5595, 7
        %v5597 = vsub.s32 %v3602, %v5596
        %v5598 = vrot.slane %v2795, %v5597
        %v5599 = vsel %vm3607, %v5598, %v5594
        %v5600 = vlaneseq
        %v5601 = vshrl.u32 %v5600, 7
        %v5602 = vsub.s32 %v3609, %v5601
        %v5603 = vrot.slane %v2796, %v5602
        %v5604 = vsel %vm3614, %v5603, %v5599
        %v5605 = vlaneseq
        %v5606 = vshrl.u32 %v5605, 7
        %v5607 = vsub.s32 %v3616, %v5606
        %v5608 = vrot.slane %v2797, %v5607
        %v5609 = vsel %vm3621, %v5608, %v5604
        %v5610 = vlaneseq
        %v5611 = vshrl.u32 %v5610, 7
        %v5612 = vsub.s32 %v3623, %v5611
        %v5613 = vrot.slane %v2798, %v5612
        %v5614 = vsel %vm3628, %v5613, %v5609
        %v5615 = vlaneseq
        %v5616 = vshrl.u32 %v5615, 7
        %v5617 = vsub.s32 %v3630, %v5616
        %v5618 = vrot.slane %v2799, %v5617
        %v5619 = vsel %vm3635, %v5618, %v5614
        %v5620 = vlaneseq
        %v5621 = vshrl.u32 %v5620, 7
        %v5622 = vsub.s32 %v3637, %v5621
        %v5623 = vrot.slane %v2800, %v5622
        %v5624 = vsel %vm3642, %v5623, %v5619
        %v5625 = vlaneseq
        %v5626 = vshrl.u32 %v5625, 7
        %v5627 = vsub.s32 %v3644, %v5626
        %v5628 = vrot.slane %v2801, %v5627
        %v5629 = vsel %vm3649, %v5628, %v5624
        %v5630 = vlaneseq
        %v5631 = vshrl.u32 %v5630, 7
        %v5632 = vsub.s32 %v3651, %v5631
        %v5633 = vrot.slane %v2802, %v5632
        %v5634 = vsel %vm3656, %v5633, %v5629
        %v5635 = vlaneseq
        %v5636 = vshrl.u32 %v5635, 7
        %v5637 = vsub.s32 %v3658, %v5636
        %v5638 = vrot.slane %v2803, %v5637
        %v5639 = vsel %vm3663, %v5638, %v5634
        %v5640 = vlaneseq
        %v5641 = vshrl.u32 %v5640, 7
        %v5642 = vsub.s32 %v3555, %v5641
        %v5643 = vrot.slane %v2804, %v5642
        %v5644 = vlaneseq
        %v5645 = vshrl.u32 %v5644, 7
        %v5646 = vsub.s32 %v3560, %v5645
        %v5647 = vrot.slane %v2805, %v5646
        %v5648 = vsel %vm3565, %v5647, %v5643
        %v5649 = vlaneseq
        %v5650 = vshrl.u32 %v5649, 7
        %v5651 = vsub.s32 %v3567, %v5650
        %v5652 = vrot.slane %v2806, %v5651
        %v5653 = vsel %vm3572, %v5652, %v5648
        %v5654 = vlaneseq
        %v5655 = vshrl.u32 %v5654, 7
        %v5656 = vsub.s32 %v3574, %v5655
        %v5657 = vrot.slane %v2807, %v5656
        %v5658 = vsel %vm3579, %v5657, %v5653
        %v5659 = vlaneseq
        %v5660 = vshrl.u32 %v5659, 7
        %v5661 = vsub.s32 %v3581, %v5660
        %v5662 = vrot.slane %v2808, %v5661
        %v5663 = vsel %vm3586, %v5662, %v5658
        %v5664 = vlaneseq
        %v5665 = vshrl.u32 %v5664, 7
        %v5666 = vsub.s32 %v3588, %v5665
        %v5667 = vrot.slane %v2809, %v5666
        %v5668 = vsel %vm3593, %v5667, %v5663
        %v5669 = vlaneseq
        %v5670 = vshrl.u32 %v5669, 7
        %v5671 = vsub.s32 %v3595, %v5670
        %v5672 = vrot.slane %v2810, %v5671
        %v5673 = vsel %vm3600, %v5672, %v5668
        %v5674 = vlaneseq
        %v5675 = vshrl.u32 %v5674, 7
        %v5676 = vsub.s32 %v3602, %v5675
        %v5677 = vrot.slane %v2811, %v5676
        %v5678 = vsel %vm3607, %v5677, %v5673
        %v5679 = vlaneseq
        %v5680 = vshrl.u32 %v5679, 7
        %v5681 = vsub.s32 %v3609, %v5680
        %v5682 = vrot.slane %v2812, %v5681
        %v5683 = vsel %vm3614, %v5682, %v5678
        %v5684 = vlaneseq
        %v5685 = vshrl.u32 %v5684, 7
        %v5686 = vsub.s32 %v3616, %v5685
        %v5687 = vrot.slane %v2813, %v5686
        %v5688 = vsel %vm3621, %v5687, %v5683
        %v5689 = vlaneseq
        %v5690 = vshrl.u32 %v5689, 7
        %v5691 = vsub.s32 %v3623, %v5690
        %v5692 = vrot.slane %v2814, %v5691
        %v5693 = vsel %vm3628, %v5692, %v5688
        %v5694 = vlaneseq
        %v5695 = vshrl.u32 %v5694, 7
        %v5696 = vsub.s32 %v3630, %v5695
        %v5697 = vrot.slane %v2815, %v5696
        %v5698 = vsel %vm3635, %v5697, %v5693
        %v5699 = vlaneseq
        %v5700 = vshrl.u32 %v5699, 7
        %v5701 = vsub.s32 %v3637, %v5700
        %v5702 = vrot.slane %v2816, %v5701
        %v5703 = vsel %vm3642, %v5702, %v5698
        %v5704 = vlaneseq
        %v5705 = vshrl.u32 %v5704, 7
        %v5706 = vsub.s32 %v3644, %v5705
        %v5707 = vrot.slane %v2817, %v5706
        %v5708 = vsel %vm3649, %v5707, %v5703
        %v5709 = vlaneseq
        %v5710 = vshrl.u32 %v5709, 7
        %v5711 = vsub.s32 %v3651, %v5710
        %v5712 = vrot.slane %v2818, %v5711
        %v5713 = vsel %vm3656, %v5712, %v5708
        %v5714 = vlaneseq
        %v5715 = vshrl.u32 %v5714, 7
        %v5716 = vsub.s32 %v3658, %v5715
        %v5717 = vrot.slane %v2819, %v5716
        %v5718 = vsel %vm3663, %v5717, %v5713
        %v5719 = vlaneseq
        %v5720 = vshrl.u32 %v5719, 7
        %v5721 = vsub.s32 %v3555, %v5720
        %v5722 = vrot.slane %v2820, %v5721
        %v5723 = vlaneseq
        %v5724 = vshrl.u32 %v5723, 7
        %v5725 = vsub.s32 %v3560, %v5724
        %v5726 = vrot.slane %v2821, %v5725
        %v5727 = vsel %vm3565, %v5726, %v5722
        %v5728 = vlaneseq
        %v5729 = vshrl.u32 %v5728, 7
        %v5730 = vsub.s32 %v3567, %v5729
        %v5731 = vrot.slane %v2822, %v5730
        %v5732 = vsel %vm3572, %v5731, %v5727
        %v5733 = vlaneseq
        %v5734 = vshrl.u32 %v5733, 7
        %v5735 = vsub.s32 %v3574, %v5734
        %v5736 = vrot.slane %v2823, %v5735
        %v5737 = vsel %vm3579, %v5736, %v5732
        %v5738 = vlaneseq
        %v5739 = vshrl.u32 %v5738, 7
        %v5740 = vsub.s32 %v3581, %v5739
        %v5741 = vrot.slane %v2824, %v5740
        %v5742 = vsel %vm3586, %v5741, %v5737
        %v5743 = vlaneseq
        %v5744 = vshrl.u32 %v5743, 7
        %v5745 = vsub.s32 %v3588, %v5744
        %v5746 = vrot.slane %v2825, %v5745
        %v5747 = vsel %vm3593, %v5746, %v5742
        %v5748 = vlaneseq
        %v5749 = vshrl.u32 %v5748, 7
        %v5750 = vsub.s32 %v3595, %v5749
        %v5751 = vrot.slane %v2826, %v5750
        %v5752 = vsel %vm3600, %v5751, %v5747
        %v5753 = vlaneseq
        %v5754 = vshrl.u32 %v5753, 7
        %v5755 = vsub.s32 %v3602, %v5754
        %v5756 = vrot.slane %v2827, %v5755
        %v5757 = vsel %vm3607, %v5756, %v5752
        %v5758 = vlaneseq
        %v5759 = vshrl.u32 %v5758, 7
        %v5760 = vsub.s32 %v3609, %v5759
        %v5761 = vrot.slane %v2828, %v5760
        %v5762 = vsel %vm3614, %v5761, %v5757
        %v5763 = vlaneseq
        %v5764 = vshrl.u32 %v5763, 7
        %v5765 = vsub.s32 %v3616, %v5764
        %v5766 = vrot.slane %v2829, %v5765
        %v5767 = vsel %vm3621, %v5766, %v5762
        %v5768 = vlaneseq
        %v5769 = vshrl.u32 %v5768, 7
        %v5770 = vsub.s32 %v3623, %v5769
        %v5771 = vrot.slane %v2830, %v5770
        %v5772 = vsel %vm3628, %v5771, %v5767
        %v5773 = vlaneseq
        %v5774 = vshrl.u32 %v5773, 7
        %v5775 = vsub.s32 %v3630, %v5774
        %v5776 = vrot.slane %v2831, %v5775
        %v5777 = vsel %vm3635, %v5776, %v5772
        %v5778 = vlaneseq
        %v5779 = vshrl.u32 %v5778, 7
        %v5780 = vsub.s32 %v3637, %v5779
        %v5781 = vrot.slane %v2832, %v5780
        %v5782 = vsel %vm3642, %v5781, %v5777
        %v5783 = vlaneseq
        %v5784 = vshrl.u32 %v5783, 7
        %v5785 = vsub.s32 %v3644, %v5784
        %v5786 = vrot.slane %v2833, %v5785
        %v5787 = vsel %vm3649, %v5786, %v5782
        %v5788 = vlaneseq
        %v5789 = vshrl.u32 %v5788, 7
        %v5790 = vsub.s32 %v3651, %v5789
        %v5791 = vrot.slane %v2834, %v5790
        %v5792 = vsel %vm3656, %v5791, %v5787
        %v5793 = vlaneseq
        %v5794 = vshrl.u32 %v5793, 7
        %v5795 = vsub.s32 %v3658, %v5794
        %v5796 = vrot.slane %v2835, %v5795
        %v5797 = vsel %vm3663, %v5796, %v5792
        %v5798 = vlaneseq
        %v5799 = vshrl.u32 %v5798, 7
        %v5800 = vsub.s32 %v3555, %v5799
        %v5801 = vrot.slane %v2836, %v5800
        %v5802 = vlaneseq
        %v5803 = vshrl.u32 %v5802, 7
        %v5804 = vsub.s32 %v3560, %v5803
        %v5805 = vrot.slane %v2837, %v5804
        %v5806 = vsel %vm3565, %v5805, %v5801
        %v5807 = vlaneseq
        %v5808 = vshrl.u32 %v5807, 7
        %v5809 = vsub.s32 %v3567, %v5808
        %v5810 = vrot.slane %v2838, %v5809
        %v5811 = vsel %vm3572, %v5810, %v5806
        %v5812 = vlaneseq
        %v5813 = vshrl.u32 %v5812, 7
        %v5814 = vsub.s32 %v3574, %v5813
        %v5815 = vrot.slane %v2839, %v5814
        %v5816 = vsel %vm3579, %v5815, %v5811
        %v5817 = vlaneseq
        %v5818 = vshrl.u32 %v5817, 7
        %v5819 = vsub.s32 %v3581, %v5818
        %v5820 = vrot.slane %v2840, %v5819
        %v5821 = vsel %vm3586, %v5820, %v5816
        %v5822 = vlaneseq
        %v5823 = vshrl.u32 %v5822, 7
        %v5824 = vsub.s32 %v3588, %v5823
        %v5825 = vrot.slane %v2841, %v5824
        %v5826 = vsel %vm3593, %v5825, %v5821
        %v5827 = vlaneseq
        %v5828 = vshrl.u32 %v5827, 7
        %v5829 = vsub.s32 %v3595, %v5828
        %v5830 = vrot.slane %v2842, %v5829
        %v5831 = vsel %vm3600, %v5830, %v5826
        %v5832 = vlaneseq
        %v5833 = vshrl.u32 %v5832, 7
        %v5834 = vsub.s32 %v3602, %v5833
        %v5835 = vrot.slane %v2843, %v5834
        %v5836 = vsel %vm3607, %v5835, %v5831
        %v5837 = vlaneseq
        %v5838 = vshrl.u32 %v5837, 7
        %v5839 = vsub.s32 %v3609, %v5838
        %v5840 = vrot.slane %v2844, %v5839
        %v5841 = vsel %vm3614, %v5840, %v5836
        %v5842 = vlaneseq
        %v5843 = vshrl.u32 %v5842, 7
        %v5844 = vsub.s32 %v3616, %v5843
        %v5845 = vrot.slane %v2845, %v5844
        %v5846 = vsel %vm3621, %v5845, %v5841
        %v5847 = vlaneseq
        %v5848 = vshrl.u32 %v5847, 7
        %v5849 = vsub.s32 %v3623, %v5848
        %v5850 = vrot.slane %v2846, %v5849
        %v5851 = vsel %vm3628, %v5850, %v5846
        %v5852 = vlaneseq
        %v5853 = vshrl.u32 %v5852, 7
        %v5854 = vsub.s32 %v3630, %v5853
        %v5855 = vrot.slane %v2847, %v5854
        %v5856 = vsel %vm3635, %v5855, %v5851
        %v5857 = vlaneseq
        %v5858 = vshrl.u32 %v5857, 7
        %v5859 = vsub.s32 %v3637, %v5858
        %v5860 = vrot.slane %v2848, %v5859
        %v5861 = vsel %vm3642, %v5860, %v5856
        %v5862 = vlaneseq
        %v5863 = vshrl.u32 %v5862, 7
        %v5864 = vsub.s32 %v3644, %v5863
        %v5865 = vrot.slane %v2849, %v5864
        %v5866 = vsel %vm3649, %v5865, %v5861
        %v5867 = vlaneseq
        %v5868 = vshrl.u32 %v5867, 7
        %v5869 = vsub.s32 %v3651, %v5868
        %v5870 = vrot.slane %v2850, %v5869
        %v5871 = vsel %vm3656, %v5870, %v5866
        %v5872 = vlaneseq
        %v5873 = vshrl.u32 %v5872, 7
        %v5874 = vsub.s32 %v3658, %v5873
        %v5875 = vrot.slane %v2851, %v5874
        %v5876 = vsel %vm3663, %v5875, %v5871
        %v5877 = vlaneseq
        %v5878 = vshrl.u32 %v5877, 7
        %v5879 = vsub.s32 %v3555, %v5878
        %v5880 = vrot.slane %v2852, %v5879
        %v5881 = vlaneseq
        %v5882 = vshrl.u32 %v5881, 7
        %v5883 = vsub.s32 %v3560, %v5882
        %v5884 = vrot.slane %v2853, %v5883
        %v5885 = vsel %vm3565, %v5884, %v5880
        %v5886 = vlaneseq
        %v5887 = vshrl.u32 %v5886, 7
        %v5888 = vsub.s32 %v3567, %v5887
        %v5889 = vrot.slane %v2854, %v5888
        %v5890 = vsel %vm3572, %v5889, %v5885
        %v5891 = vlaneseq
        %v5892 = vshrl.u32 %v5891, 7
        %v5893 = vsub.s32 %v3574, %v5892
        %v5894 = vrot.slane %v2855, %v5893
        %v5895 = vsel %vm3579, %v5894, %v5890
        %v5896 = vlaneseq
        %v5897 = vshrl.u32 %v5896, 7
        %v5898 = vsub.s32 %v3581, %v5897
        %v5899 = vrot.slane %v2856, %v5898
        %v5900 = vsel %vm3586, %v5899, %v5895
        %v5901 = vlaneseq
        %v5902 = vshrl.u32 %v5901, 7
        %v5903 = vsub.s32 %v3588, %v5902
        %v5904 = vrot.slane %v2857, %v5903
        %v5905 = vsel %vm3593, %v5904, %v5900
        %v5906 = vlaneseq
        %v5907 = vshrl.u32 %v5906, 7
        %v5908 = vsub.s32 %v3595, %v5907
        %v5909 = vrot.slane %v2858, %v5908
        %v5910 = vsel %vm3600, %v5909, %v5905
        %v5911 = vlaneseq
        %v5912 = vshrl.u32 %v5911, 7
        %v5913 = vsub.s32 %v3602, %v5912
        %v5914 = vrot.slane %v2859, %v5913
        %v5915 = vsel %vm3607, %v5914, %v5910
        %v5916 = vlaneseq
        %v5917 = vshrl.u32 %v5916, 7
        %v5918 = vsub.s32 %v3609, %v5917
        %v5919 = vrot.slane %v2860, %v5918
        %v5920 = vsel %vm3614, %v5919, %v5915
        %v5921 = vlaneseq
        %v5922 = vshrl.u32 %v5921, 7
        %v5923 = vsub.s32 %v3616, %v5922
        %v5924 = vrot.slane %v2861, %v5923
        %v5925 = vsel %vm3621, %v5924, %v5920
        %v5926 = vlaneseq
        %v5927 = vshrl.u32 %v5926, 7
        %v5928 = vsub.s32 %v3623, %v5927
        %v5929 = vrot.slane %v2862, %v5928
        %v5930 = vsel %vm3628, %v5929, %v5925
        %v5931 = vlaneseq
        %v5932 = vshrl.u32 %v5931, 7
        %v5933 = vsub.s32 %v3630, %v5932
        %v5934 = vrot.slane %v2863, %v5933
        %v5935 = vsel %vm3635, %v5934, %v5930
        %v5936 = vlaneseq
        %v5937 = vshrl.u32 %v5936, 7
        %v5938 = vsub.s32 %v3637, %v5937
        %v5939 = vrot.slane %v2864, %v5938
        %v5940 = vsel %vm3642, %v5939, %v5935
        %v5941 = vlaneseq
        %v5942 = vshrl.u32 %v5941, 7
        %v5943 = vsub.s32 %v3644, %v5942
        %v5944 = vrot.slane %v2865, %v5943
        %v5945 = vsel %vm3649, %v5944, %v5940
        %v5946 = vlaneseq
        %v5947 = vshrl.u32 %v5946, 7
        %v5948 = vsub.s32 %v3651, %v5947
        %v5949 = vrot.slane %v2866, %v5948
        %v5950 = vsel %vm3656, %v5949, %v5945
        %v5951 = vlaneseq
        %v5952 = vshrl.u32 %v5951, 7
        %v5953 = vsub.s32 %v3658, %v5952
        %v5954 = vrot.slane %v2867, %v5953
        %v5955 = vsel %vm3663, %v5954, %v5950
        %v5956 = vlaneseq
        %v5957 = vshrl.u32 %v5956, 7
        %v5958 = vsub.s32 %v3555, %v5957
        %v5959 = vrot.slane %v2868, %v5958
        %v5960 = vlaneseq
        %v5961 = vshrl.u32 %v5960, 7
        %v5962 = vsub.s32 %v3560, %v5961
        %v5963 = vrot.slane %v2869, %v5962
        %v5964 = vsel %vm3565, %v5963, %v5959
        %v5965 = vlaneseq
        %v5966 = vshrl.u32 %v5965, 7
        %v5967 = vsub.s32 %v3567, %v5966
        %v5968 = vrot.slane %v2870, %v5967
        %v5969 = vsel %vm3572, %v5968, %v5964
        %v5970 = vlaneseq
        %v5971 = vshrl.u32 %v5970, 7
        %v5972 = vsub.s32 %v3574, %v5971
        %v5973 = vrot.slane %v2871, %v5972
        %v5974 = vsel %vm3579, %v5973, %v5969
        %v5975 = vlaneseq
        %v5976 = vshrl.u32 %v5975, 7
        %v5977 = vsub.s32 %v3581, %v5976
        %v5978 = vrot.slane %v2872, %v5977
        %v5979 = vsel %vm3586, %v5978, %v5974
        %v5980 = vlaneseq
        %v5981 = vshrl.u32 %v5980, 7
        %v5982 = vsub.s32 %v3588, %v5981
        %v5983 = vrot.slane %v2873, %v5982
        %v5984 = vsel %vm3593, %v5983, %v5979
        %v5985 = vlaneseq
        %v5986 = vshrl.u32 %v5985, 7
        %v5987 = vsub.s32 %v3595, %v5986
        %v5988 = vrot.slane %v2874, %v5987
        %v5989 = vsel %vm3600, %v5988, %v5984
        %v5990 = vlaneseq
        %v5991 = vshrl.u32 %v5990, 7
        %v5992 = vsub.s32 %v3602, %v5991
        %v5993 = vrot.slane %v2875, %v5992
        %v5994 = vsel %vm3607, %v5993, %v5989
        %v5995 = vlaneseq
        %v5996 = vshrl.u32 %v5995, 7
        %v5997 = vsub.s32 %v3609, %v5996
        %v5998 = vrot.slane %v2876, %v5997
        %v5999 = vsel %vm3614, %v5998, %v5994
        %v6000 = vlaneseq
        %v6001 = vshrl.u32 %v6000, 7
        %v6002 = vsub.s32 %v3616, %v6001
        %v6003 = vrot.slane %v2877, %v6002
        %v6004 = vsel %vm3621, %v6003, %v5999
        %v6005 = vlaneseq
        %v6006 = vshrl.u32 %v6005, 7
        %v6007 = vsub.s32 %v3623, %v6006
        %v6008 = vrot.slane %v2878, %v6007
        %v6009 = vsel %vm3628, %v6008, %v6004
        %v6010 = vlaneseq
        %v6011 = vshrl.u32 %v6010, 7
        %v6012 = vsub.s32 %v3630, %v6011
        %v6013 = vrot.slane %v2879, %v6012
        %v6014 = vsel %vm3635, %v6013, %v6009
        %v6015 = vlaneseq
        %v6016 = vshrl.u32 %v6015, 7
        %v6017 = vsub.s32 %v3637, %v6016
        %v6018 = vrot.slane %v2880, %v6017
        %v6019 = vsel %vm3642, %v6018, %v6014
        %v6020 = vlaneseq
        %v6021 = vshrl.u32 %v6020, 7
        %v6022 = vsub.s32 %v3644, %v6021
        %v6023 = vrot.slane %v2881, %v6022
        %v6024 = vsel %vm3649, %v6023, %v6019
        %v6025 = vlaneseq
        %v6026 = vshrl.u32 %v6025, 7
        %v6027 = vsub.s32 %v3651, %v6026
        %v6028 = vrot.slane %v2882, %v6027
        %v6029 = vsel %vm3656, %v6028, %v6024
        %v6030 = vlaneseq
        %v6031 = vshrl.u32 %v6030, 7
        %v6032 = vsub.s32 %v3658, %v6031
        %v6033 = vrot.slane %v2883, %v6032
        %v6034 = vsel %vm3663, %v6033, %v6029
        %v6035 = vlaneseq
        %v6036 = vshrl.u32 %v6035, 7
        %v6037 = vsub.s32 %v3555, %v6036
        %v6038 = vrot.slane %v2884, %v6037
        %v6039 = vlaneseq
        %v6040 = vshrl.u32 %v6039, 7
        %v6041 = vsub.s32 %v3560, %v6040
        %v6042 = vrot.slane %v2885, %v6041
        %v6043 = vsel %vm3565, %v6042, %v6038
        %v6044 = vlaneseq
        %v6045 = vshrl.u32 %v6044, 7
        %v6046 = vsub.s32 %v3567, %v6045
        %v6047 = vrot.slane %v2886, %v6046
        %v6048 = vsel %vm3572, %v6047, %v6043
        %v6049 = vlaneseq
        %v6050 = vshrl.u32 %v6049, 7
        %v6051 = vsub.s32 %v3574, %v6050
        %v6052 = vrot.slane %v2887, %v6051
        %v6053 = vsel %vm3579, %v6052, %v6048
        %v6054 = vlaneseq
        %v6055 = vshrl.u32 %v6054, 7
        %v6056 = vsub.s32 %v3581, %v6055
        %v6057 = vrot.slane %v2888, %v6056
        %v6058 = vsel %vm3586, %v6057, %v6053
        %v6059 = vlaneseq
        %v6060 = vshrl.u32 %v6059, 7
        %v6061 = vsub.s32 %v3588, %v6060
        %v6062 = vrot.slane %v2889, %v6061
        %v6063 = vsel %vm3593, %v6062, %v6058
        %v6064 = vlaneseq
        %v6065 = vshrl.u32 %v6064, 7
        %v6066 = vsub.s32 %v3595, %v6065
        %v6067 = vrot.slane %v2890, %v6066
        %v6068 = vsel %vm3600, %v6067, %v6063
        %v6069 = vlaneseq
        %v6070 = vshrl.u32 %v6069, 7
        %v6071 = vsub.s32 %v3602, %v6070
        %v6072 = vrot.slane %v2891, %v6071
        %v6073 = vsel %vm3607, %v6072, %v6068
        %v6074 = vlaneseq
        %v6075 = vshrl.u32 %v6074, 7
        %v6076 = vsub.s32 %v3609, %v6075
        %v6077 = vrot.slane %v2892, %v6076
        %v6078 = vsel %vm3614, %v6077, %v6073
        %v6079 = vlaneseq
        %v6080 = vshrl.u32 %v6079, 7
        %v6081 = vsub.s32 %v3616, %v6080
        %v6082 = vrot.slane %v2893, %v6081
        %v6083 = vsel %vm3621, %v6082, %v6078
        %v6084 = vlaneseq
        %v6085 = vshrl.u32 %v6084, 7
        %v6086 = vsub.s32 %v3623, %v6085
        %v6087 = vrot.slane %v2894, %v6086
        %v6088 = vsel %vm3628, %v6087, %v6083
        %v6089 = vlaneseq
        %v6090 = vshrl.u32 %v6089, 7
        %v6091 = vsub.s32 %v3630, %v6090
        %v6092 = vrot.slane %v2895, %v6091
        %v6093 = vsel %vm3635, %v6092, %v6088
        %v6094 = vlaneseq
        %v6095 = vshrl.u32 %v6094, 7
        %v6096 = vsub.s32 %v3637, %v6095
        %v6097 = vrot.slane %v2896, %v6096
        %v6098 = vsel %vm3642, %v6097, %v6093
        %v6099 = vlaneseq
        %v6100 = vshrl.u32 %v6099, 7
        %v6101 = vsub.s32 %v3644, %v6100
        %v6102 = vrot.slane %v2897, %v6101
        %v6103 = vsel %vm3649, %v6102, %v6098
        %v6104 = vlaneseq
        %v6105 = vshrl.u32 %v6104, 7
        %v6106 = vsub.s32 %v3651, %v6105
        %v6107 = vrot.slane %v2898, %v6106
        %v6108 = vsel %vm3656, %v6107, %v6103
        %v6109 = vlaneseq
        %v6110 = vshrl.u32 %v6109, 7
        %v6111 = vsub.s32 %v3658, %v6110
        %v6112 = vrot.slane %v2899, %v6111
        %v6113 = vsel %vm3663, %v6112, %v6108
        %vm6114 = vcmask 1041409
        %v6115 = vsel %vm6114, %v3980, %v3664
        %vm6116 = vcmask 1042434
        %v6117 = vsel %vm6116, %v4296, %v6115
        %vm6118 = vcmask 1043459
        %v6119 = vsel %vm6118, %v4612, %v6117
        %vm6120 = vcmask 1044484
        %v6121 = vsel %vm6120, %v4928, %v6119
        %vm6122 = vcmask 1045509
        %v6123 = vsel %vm6122, %v5244, %v6121
        %vm6124 = vcmask 1046534
        %v6125 = vsel %vm6124, %v5560, %v6123
        %vm6126 = vcmask 1047559
        %v6127 = vsel %vm6126, %v5876, %v6125
        %v6128 = vsel %vm6114, %v4059, %v3743
        %v6129 = vsel %vm6116, %v4375, %v6128
        %v6130 = vsel %vm6118, %v4691, %v6129
        %v6131 = vsel %vm6120, %v5007, %v6130
        %v6132 = vsel %vm6122, %v5323, %v6131
        %v6133 = vsel %vm6124, %v5639, %v6132
        %v6134 = vsel %vm6126, %v5955, %v6133
        %v6135 = vsel %vm6114, %v4138, %v3822
        %v6136 = vsel %vm6116, %v4454, %v6135
        %v6137 = vsel %vm6118, %v4770, %v6136
        %v6138 = vsel %vm6120, %v5086, %v6137
        %v6139 = vsel %vm6122, %v5402, %v6138
        %v6140 = vsel %vm6124, %v5718, %v6139
        %v6141 = vsel %vm6126, %v6034, %v6140
        %v6142 = vsel %vm6114, %v4217, %v3901
        %v6143 = vsel %vm6116, %v4533, %v6142
        %v6144 = vsel %vm6118, %v4849, %v6143
        %v6145 = vsel %vm6120, %v5165, %v6144
        %v6146 = vsel %vm6122, %v5481, %v6145
        %v6147 = vsel %vm6124, %v5797, %v6146
        %v6148 = vsel %vm6126, %v6113, %v6147
        %6153 = vmatprep.subr.mxu0 %v2903
        %6154 = vmatpush1.msra.mxu0 %v2902
        %6155 = vmatprep.subr.mxu0 %v2905
        %6156 = vmatpush1.msra.mxu0 %v2904
        %6157 = vmatprep.subr.mxu0 %v2907
        %6158 = vmatpush1.msra.mxu0 %v2906
        %6159 = vmatprep.subr.mxu0 %v2909
        %6160 = vmatpush1.msra.mxu0 %v2908
        %6161 = vmatprep.subr.mxu0 %v2911
        %6162 = vmatpush1.msra.mxu0 %v2910
        %6163 = vmatprep.subr.mxu0 %v2913
        %6164 = vmatpush1.msra.mxu0 %v2912
        %6165 = vmatprep.subr.mxu0 %v2915
        %6166 = vmatpush1.msra.mxu0 %v2914
        %6167 = vmatprep.subr.mxu0 %v2917
        %6168 = vmatpush1.msra.mxu0 %v2916
        %6169 = vmatprep.subr.mxu0 %v2919
        %6170 = vmatpush1.msra.mxu0 %v2918
        %6171 = vmatprep.subr.mxu0 %v2921
        %6172 = vmatpush1.msra.mxu0 %v2920
        %6173 = vmatprep.subr.mxu0 %v2923
        %6174 = vmatpush1.msra.mxu0 %v2922
        %6175 = vmatprep.subr.mxu0 %v2925
        %6176 = vmatpush1.msra.mxu0 %v2924
        %6177 = vmatprep.subr.mxu0 %v2927
        %6178 = vmatpush1.msra.mxu0 %v2926
        %6179 = vmatprep.subr.mxu0 %v2929
        %6180 = vmatpush1.msra.mxu0 %v2928
        %6181 = vmatprep.subr.mxu0 %v2931
        %6182 = vmatpush1.msra.mxu0 %v2930
        %6183 = vmatprep.subr.mxu0 %v2933
        %6184 = vmatpush1.msra.mxu0 %v2932
        %6185 = vmatprep.subr.mxu0 %v2935
        %6186 = vmatpush1.msra.mxu0 %v2934
        %6187 = vmatprep.subr.mxu0 %v2937
        %6188 = vmatpush1.msra.mxu0 %v2936
        %6189 = vmatprep.subr.mxu0 %v2939
        %6190 = vmatpush1.msra.mxu0 %v2938
        %6191 = vmatprep.subr.mxu0 %v2941
        %6192 = vmatpush1.msra.mxu0 %v2940
        %6193 = vmatprep.subr.mxu0 %v2943
        %6194 = vmatpush1.msra.mxu0 %v2942
        %6195 = vmatprep.subr.mxu0 %v2945
        %6196 = vmatpush1.msra.mxu0 %v2944
        %6197 = vmatprep.subr.mxu0 %v2947
        %6198 = vmatpush1.msra.mxu0 %v2946
        %6199 = vmatprep.subr.mxu0 %v2949
        %6200 = vmatpush1.msra.mxu0 %v2948
        %6201 = vmatprep.subr.mxu0 %v2951
        %6202 = vmatpush1.msra.mxu0 %v2950
        %6203 = vmatprep.subr.mxu0 %v2953
        %6204 = vmatpush1.msra.mxu0 %v2952
        %6205 = vmatprep.subr.mxu0 %v2955
        %6206 = vmatpush1.msra.mxu0 %v2954
        %6207 = vmatprep.subr.mxu0 %v2957
        %6208 = vmatpush1.msra.mxu0 %v2956
        %6209 = vmatprep.subr.mxu0 %v2959
        %6210 = vmatpush1.msra.mxu0 %v2958
        %6211 = vmatprep.subr.mxu0 %v2961
        %6212 = vmatpush1.msra.mxu0 %v2960
        %6213 = vmatprep.subr.mxu0 %v2963
        %6214 = vmatpush1.msra.mxu0 %v2962
        %6215 = vmatprep.subr.mxu0 %v2965
        %6216 = vmatpush1.msra.mxu0 %v2964
        %6217 = vmatprep.mubr.f32.mxu0 %v6134
        %6218 = vmatmul.mubr.f32.gmra.mrb[0].mxu0 %v6127
        %v6219 = vpop.f32.mrb[0].mxu0
        %v6220 = vadd.f32 %v3035, %v6219
        %v6221 = vpop.f32.mrb[0].mxu0
        %v6222 = vadd.f32 %v3039, %v6221
        %6223 = vdwg.mxu0
        %6224 = vmatprep.subr.mxu0 %v2967
        %6225 = vmatpush1.msra.mxu0 %v2966
        %6226 = vmatprep.subr.mxu0 %v2969
        %6227 = vmatpush1.msra.mxu0 %v2968
        %6228 = vmatprep.subr.mxu0 %v2971
        %6229 = vmatpush1.msra.mxu0 %v2970
        %6230 = vmatprep.subr.mxu0 %v2973
        %6231 = vmatpush1.msra.mxu0 %v2972
        %6232 = vmatprep.subr.mxu0 %v2975
        %6233 = vmatpush1.msra.mxu0 %v2974
        %6234 = vmatprep.subr.mxu0 %v2977
        %6235 = vmatpush1.msra.mxu0 %v2976
        %6236 = vmatprep.subr.mxu0 %v2979
        %6237 = vmatpush1.msra.mxu0 %v2978
        %6238 = vmatprep.subr.mxu0 %v2981
        %6239 = vmatpush1.msra.mxu0 %v2980
        %6240 = vmatprep.subr.mxu0 %v2983
        %6241 = vmatpush1.msra.mxu0 %v2982
        %6242 = vmatprep.subr.mxu0 %v2985
        %6243 = vmatpush1.msra.mxu0 %v2984
        %6244 = vmatprep.subr.mxu0 %v2987
        %6245 = vmatpush1.msra.mxu0 %v2986
        %6246 = vmatprep.subr.mxu0 %v2989
        %6247 = vmatpush1.msra.mxu0 %v2988
        %6248 = vmatprep.subr.mxu0 %v2991
        %6249 = vmatpush1.msra.mxu0 %v2990
        %6250 = vmatprep.subr.mxu0 %v2993
        %6251 = vmatpush1.msra.mxu0 %v2992
        %6252 = vmatprep.subr.mxu0 %v2995
        %6253 = vmatpush1.msra.mxu0 %v2994
        %6254 = vmatprep.subr.mxu0 %v2997
        %6255 = vmatpush1.msra.mxu0 %v2996
        %6256 = vmatprep.subr.mxu0 %v2999
        %6257 = vmatpush1.msra.mxu0 %v2998
        %6258 = vmatprep.subr.mxu0 %v3001
        %6259 = vmatpush1.msra.mxu0 %v3000
        %6260 = vmatprep.subr.mxu0 %v3003
        %6261 = vmatpush1.msra.mxu0 %v3002
        %6262 = vmatprep.subr.mxu0 %v3005
        %6263 = vmatpush1.msra.mxu0 %v3004
        %6264 = vmatprep.subr.mxu0 %v3007
        %6265 = vmatpush1.msra.mxu0 %v3006
        %6266 = vmatprep.subr.mxu0 %v3009
        %6267 = vmatpush1.msra.mxu0 %v3008
        %6268 = vmatprep.subr.mxu0 %v3011
        %6269 = vmatpush1.msra.mxu0 %v3010
        %6270 = vmatprep.subr.mxu0 %v3013
        %6271 = vmatpush1.msra.mxu0 %v3012
        %6272 = vmatprep.subr.mxu0 %v3015
        %6273 = vmatpush1.msra.mxu0 %v3014
        %6274 = vmatprep.subr.mxu0 %v3017
        %6275 = vmatpush1.msra.mxu0 %v3016
        %6276 = vmatprep.subr.mxu0 %v3019
        %6277 = vmatpush1.msra.mxu0 %v3018
        %6278 = vmatprep.subr.mxu0 %v3021
        %6279 = vmatpush1.msra.mxu0 %v3020
        %6280 = vmatprep.subr.mxu0 %v3023
        %6281 = vmatpush1.msra.mxu0 %v3022
        %6282 = vmatprep.subr.mxu0 %v3025
        %6283 = vmatpush1.msra.mxu0 %v3024
        %6284 = vmatprep.subr.mxu0 %v3027
        %6285 = vmatpush1.msra.mxu0 %v3026
        %6286 = vmatprep.subr.mxu0 %v3029
        %6287 = vmatpush1.msra.mxu0 %v3028
        %6288 = vmatprep.mubr.f32.mxu0 %v6148
        %6289 = vmatmul.mubr.f32.gmra.mrb[0].mxu0 %v6141
        %v6290 = vpop.f32.mrb[0].mxu0
        %v6291 = vadd.f32 %v6220, %v6290
        %v6292 = vpop.f32.mrb[0].mxu0
        %v6293 = vadd.f32 %v6222, %v6292
        %6294 = vdwg.mxu0
        %v6295 = vmax.f32 %v6291, 0.0
        %v6296 = vmax.f32 %v6293, 0.0
        %v6297 = vmin.f32 %v6291, 0.0
        %v6298 = vmin.f32 %v6293, 0.0
        %v6299 = vstv %s2900
        %v6300 = vmul.f32 %v6299, %v6297
        %v6301 = vmul.f32 %v6299, %v6298
        %v6302 = vadd.f32 %v6295, %v6300
        %v6303 = vadd.f32 %v6296, %v6301
        %v6304 = vld [vmem:[%s4] sm:$0xff]
        %v6305 = vld [vmem:[%s4 + $0x8] sm:$0xff]
        %v6306 = vld [vmem:[%s4 + $0x10] sm:$0xff]
        %v6307 = vld [vmem:[%s4 + $0x18] sm:$0xff]
        %v6308 = vld [vmem:[%s4 + $0x20] sm:$0xff]
        %v6309 = vld [vmem:[%s4 + $0x28] sm:$0xff]
        %v6310 = vld [vmem:[%s4 + $0x30] sm:$0xff]
        %v6311 = vld [vmem:[%s4 + $0x38] sm:$0xff]
        %v6312 = vld [vmem:[%s4 + $0x40] sm:$0xff]
        %v6313 = vld [vmem:[%s4 + $0x48] sm:$0xff]
        %v6314 = vld [vmem:[%s4 + $0x50] sm:$0xff]
        %v6315 = vld [vmem:[%s4 + $0x58] sm:$0xff]
        %v6316 = vld [vmem:[%s4 + $0x60] sm:$0xff]
        %v6317 = vld [vmem:[%s4 + $0x68] sm:$0xff]
        %v6318 = vld [vmem:[%s4 + $0x70] sm:$0xff]
        %v6319 = vld [vmem:[%s4 + $0x78] sm:$0xff]
        %v6320 = vld [vmem:[%s4 + $0x80] sm:$0xff]
        %v6321 = vld [vmem:[%s4 + $0x88] sm:$0xff]
        %v6322 = vld [vmem:[%s4 + $0x90] sm:$0xff]
        %v6323 = vld [vmem:[%s4 + $0x98] sm:$0xff]
        %v6324 = vld [vmem:[%s4 + $0xa0] sm:$0xff]
        %v6325 = vld [vmem:[%s4 + $0xa8] sm:$0xff]
        %v6326 = vld [vmem:[%s4 + $0xb0] sm:$0xff]
        %v6327 = vld [vmem:[%s4 + $0xb8] sm:$0xff]
        %v6328 = vld [vmem:[%s4 + $0xc0] sm:$0xff]
        %v6329 = vld [vmem:[%s4 + $0xc8] sm:$0xff]
        %v6330 = vld [vmem:[%s4 + $0xd0] sm:$0xff]
        %v6331 = vld [vmem:[%s4 + $0xd8] sm:$0xff]
        %v6332 = vld [vmem:[%s4 + $0xe0] sm:$0xff]
        %v6333 = vld [vmem:[%s4 + $0xe8] sm:$0xff]
        %v6334 = vld [vmem:[%s4 + $0xf0] sm:$0xff]
        %v6335 = vld [vmem:[%s4 + $0xf8] sm:$0xff]
        %v6336 = vld [vmem:[%s4 + $0x100] sm:$0xff]
        %v6337 = vld [vmem:[%s4 + $0x108] sm:$0xff]
        %v6338 = vld [vmem:[%s4 + $0x110] sm:$0xff]
        %v6339 = vld [vmem:[%s4 + $0x118] sm:$0xff]
        %v6340 = vld [vmem:[%s4 + $0x120] sm:$0xff]
        %v6341 = vld [vmem:[%s4 + $0x128] sm:$0xff]
        %v6342 = vld [vmem:[%s4 + $0x130] sm:$0xff]
        %v6343 = vld [vmem:[%s4 + $0x138] sm:$0xff]
        %v6344 = vld [vmem:[%s4 + $0x140] sm:$0xff]
        %v6345 = vld [vmem:[%s4 + $0x148] sm:$0xff]
        %v6346 = vld [vmem:[%s4 + $0x150] sm:$0xff]
        %v6347 = vld [vmem:[%s4 + $0x158] sm:$0xff]
        %v6348 = vld [vmem:[%s4 + $0x160] sm:$0xff]
        %v6349 = vld [vmem:[%s4 + $0x168] sm:$0xff]
        %v6350 = vld [vmem:[%s4 + $0x170] sm:$0xff]
        %v6351 = vld [vmem:[%s4 + $0x178] sm:$0xff]
        %v6352 = vld [vmem:[%s4 + $0x180] sm:$0xff]
        %v6353 = vld [vmem:[%s4 + $0x188] sm:$0xff]
        %v6354 = vld [vmem:[%s4 + $0x190] sm:$0xff]
        %v6355 = vld [vmem:[%s4 + $0x198] sm:$0xff]
        %v6356 = vld [vmem:[%s4 + $0x1a0] sm:$0xff]
        %v6357 = vld [vmem:[%s4 + $0x1a8] sm:$0xff]
        %v6358 = vld [vmem:[%s4 + $0x1b0] sm:$0xff]
        %v6359 = vld [vmem:[%s4 + $0x1b8] sm:$0xff]
        %v6360 = vld [vmem:[%s4 + $0x1c0] sm:$0xff]
        %v6361 = vld [vmem:[%s4 + $0x1c8] sm:$0xff]
        %v6362 = vld [vmem:[%s4 + $0x1d0] sm:$0xff]
        %v6363 = vld [vmem:[%s4 + $0x1d8] sm:$0xff]
        %v6364 = vld [vmem:[%s4 + $0x1e0] sm:$0xff]
        %v6365 = vld [vmem:[%s4 + $0x1e8] sm:$0xff]
        %v6366 = vld [vmem:[%s4 + $0x1f0] sm:$0xff]
        %v6367 = vld [vmem:[%s4 + $0x1f8] sm:$0xff]
        %v6368 = vld [vmem:[%s5] sm:$0x3]
        %v6370 = vlaneseq
        %v6371 = vshrl.u32 %v6370, 7
        %v6372 = vsub.s32 0, %v6371
        %v6373 = vrot.slane %v6368, %v6372
        %v6374 = vlaneseq
        %v6375 = vshrl.u32 %v6374, 7
        %v6376 = vsub.s32 1, %v6375
        %v6377 = vrot.slane %v6368, %v6376
        %6380 = vmatprep.subr.mxu0 %v6305
        %6381 = vmatpush1.msra.mxu0 %v6304
        %6382 = vmatprep.subr.mxu0 %v6307
        %6383 = vmatpush1.msra.mxu0 %v6306
        %6384 = vmatprep.subr.mxu0 %v6309
        %6385 = vmatpush1.msra.mxu0 %v6308
        %6386 = vmatprep.subr.mxu0 %v6311
        %6387 = vmatpush1.msra.mxu0 %v6310
        %6388 = vmatprep.subr.mxu0 %v6313
        %6389 = vmatpush1.msra.mxu0 %v6312
        %6390 = vmatprep.subr.mxu0 %v6315
        %6391 = vmatpush1.msra.mxu0 %v6314
        %6392 = vmatprep.subr.mxu0 %v6317
        %6393 = vmatpush1.msra.mxu0 %v6316
        %6394 = vmatprep.subr.mxu0 %v6319
        %6395 = vmatpush1.msra.mxu0 %v6318
        %6396 = vmatprep.subr.mxu0 %v6321
        %6397 = vmatpush1.msra.mxu0 %v6320
        %6398 = vmatprep.subr.mxu0 %v6323
        %6399 = vmatpush1.msra.mxu0 %v6322
        %6400 = vmatprep.subr.mxu0 %v6325
        %6401 = vmatpush1.msra.mxu0 %v6324
        %6402 = vmatprep.subr.mxu0 %v6327
        %6403 = vmatpush1.msra.mxu0 %v6326
        %6404 = vmatprep.subr.mxu0 %v6329
        %6405 = vmatpush1.msra.mxu0 %v6328
        %6406 = vmatprep.subr.mxu0 %v6331
        %6407 = vmatpush1.msra.mxu0 %v6330
        %6408 = vmatprep.subr.mxu0 %v6333
        %6409 = vmatpush1.msra.mxu0 %v6332
        %6410 = vmatprep.subr.mxu0 %v6335
        %6411 = vmatpush1.msra.mxu0 %v6334
        %6412 = vmatprep.subr.mxu0 %v6337
        %6413 = vmatpush1.msra.mxu0 %v6336
        %6414 = vmatprep.subr.mxu0 %v6339
        %6415 = vmatpush1.msra.mxu0 %v6338
        %6416 = vmatprep.subr.mxu0 %v6341
        %6417 = vmatpush1.msra.mxu0 %v6340
        %6418 = vmatprep.subr.mxu0 %v6343
        %6419 = vmatpush1.msra.mxu0 %v6342
        %6420 = vmatprep.subr.mxu0 %v6345
        %6421 = vmatpush1.msra.mxu0 %v6344
        %6422 = vmatprep.subr.mxu0 %v6347
        %6423 = vmatpush1.msra.mxu0 %v6346
        %6424 = vmatprep.subr.mxu0 %v6349
        %6425 = vmatpush1.msra.mxu0 %v6348
        %6426 = vmatprep.subr.mxu0 %v6351
        %6427 = vmatpush1.msra.mxu0 %v6350
        %6428 = vmatprep.subr.mxu0 %v6353
        %6429 = vmatpush1.msra.mxu0 %v6352
        %6430 = vmatprep.subr.mxu0 %v6355
        %6431 = vmatpush1.msra.mxu0 %v6354
        %6432 = vmatprep.subr.mxu0 %v6357
        %6433 = vmatpush1.msra.mxu0 %v6356
        %6434 = vmatprep.subr.mxu0 %v6359
        %6435 = vmatpush1.msra.mxu0 %v6358
        %6436 = vmatprep.subr.mxu0 %v6361
        %6437 = vmatpush1.msra.mxu0 %v6360
        %6438 = vmatprep.subr.mxu0 %v6363
        %6439 = vmatpush1.msra.mxu0 %v6362
        %6440 = vmatprep.subr.mxu0 %v6365
        %6441 = vmatpush1.msra.mxu0 %v6364
        %6442 = vmatprep.subr.mxu0 %v6367
        %6443 = vmatpush1.msra.mxu0 %v6366
        %6444 = vmatprep.mubr.f32.mxu0 %v6303
        %6445 = vmatmul.mubr.f32.gmra.mrb[0].mxu0 %v6302
        %v6446 = vpop.f32.mrb[0].mxu0
        %v6447 = vadd.f32 %v6373, %v6446
        %v6448 = vpop.f32.mrb[0].mxu0
        %v6449 = vadd.f32 %v6377, %v6448
        %6450 = vdwg.mxu0
        %v6451 = vmax.f32 %v6447, 0.0
        %v6452 = vmax.f32 %v6449, 0.0
        %v6453 = vmin.f32 %v6447, 0.0
        %v6454 = vmin.f32 %v6449, 0.0
        %v6455 = vstv %s2901
        %v6456 = vmul.f32 %v6455, %v6453
        %v6457 = vmul.f32 %v6455, %v6454
        %v6458 = vadd.f32 %v6451, %v6456
        %v6459 = vadd.f32 %v6452, %v6457
        %v6460 = vld [vmem:[%s7] sm:$0xff]
        %v6461 = vld [vmem:[%s7 + $0x8] sm:$0xff]
        %v6462 = vld [vmem:[%s7 + $0x10] sm:$0xff]
        %v6463 = vld [vmem:[%s7 + $0x18] sm:$0xff]
        %v6464 = vld [vmem:[%s7 + $0x20] sm:$0xff]
        %v6465 = vld [vmem:[%s7 + $0x28] sm:$0xff]
        %v6466 = vld [vmem:[%s7 + $0x30] sm:$0xff]
        %v6467 = vld [vmem:[%s7 + $0x38] sm:$0xff]
        %v6468 = vld [vmem:[%s7 + $0x40] sm:$0xff]
        %v6469 = vld [vmem:[%s7 + $0x48] sm:$0xff]
        %v6470 = vld [vmem:[%s7 + $0x50] sm:$0xff]
        %v6471 = vld [vmem:[%s7 + $0x58] sm:$0xff]
        %v6472 = vld [vmem:[%s7 + $0x60] sm:$0xff]
        %v6473 = vld [vmem:[%s7 + $0x68] sm:$0xff]
        %v6474 = vld [vmem:[%s7 + $0x70] sm:$0xff]
        %v6475 = vld [vmem:[%s7 + $0x78] sm:$0xff]
        %v6476 = vld [vmem:[%s7 + $0x80] sm:$0xff]
        %v6477 = vld [vmem:[%s7 + $0x88] sm:$0xff]
        %v6478 = vld [vmem:[%s7 + $0x90] sm:$0xff]
        %v6479 = vld [vmem:[%s7 + $0x98] sm:$0xff]
        %v6480 = vld [vmem:[%s7 + $0xa0] sm:$0xff]
        %v6481 = vld [vmem:[%s7 + $0xa8] sm:$0xff]
        %v6482 = vld [vmem:[%s7 + $0xb0] sm:$0xff]
        %v6483 = vld [vmem:[%s7 + $0xb8] sm:$0xff]
        %v6484 = vld [vmem:[%s7 + $0xc0] sm:$0xff]
        %v6485 = vld [vmem:[%s7 + $0xc8] sm:$0xff]
        %v6486 = vld [vmem:[%s7 + $0xd0] sm:$0xff]
        %v6487 = vld [vmem:[%s7 + $0xd8] sm:$0xff]
        %v6488 = vld [vmem:[%s7 + $0xe0] sm:$0xff]
        %v6489 = vld [vmem:[%s7 + $0xe8] sm:$0xff]
        %v6490 = vld [vmem:[%s7 + $0xf0] sm:$0xff]
        %v6491 = vld [vmem:[%s7 + $0xf8] sm:$0xff]
        %v6492 = vld [vmem:[%s8] sm:$0x1]
        %v6494 = vlaneseq
        %v6495 = vshrl.u32 %v6494, 7
        %v6496 = vsub.s32 0, %v6495
        %v6497 = vrot.slane %v6492, %v6496
        %6499 = vmatprep.subr.mxu0 0.0
        %6500 = vmatpush1.msra.mxu0 %v6460
        %6501 = vmatprep.subr.mxu0 0.0
        %6502 = vmatpush1.msra.mxu0 %v6461
        %6503 = vmatprep.subr.mxu0 0.0
        %6504 = vmatpush1.msra.mxu0 %v6462
        %6505 = vmatprep.subr.mxu0 0.0
        %6506 = vmatpush1.msra.mxu0 %v6463
        %6507 = vmatprep.subr.mxu0 0.0
        %6508 = vmatpush1.msra.mxu0 %v6464
        %6509 = vmatprep.subr.mxu0 0.0
        %6510 = vmatpush1.msra.mxu0 %v6465
        %6511 = vmatprep.subr.mxu0 0.0
        %6512 = vmatpush1.msra.mxu0 %v6466
        %6513 = vmatprep.subr.mxu0 0.0
        %6514 = vmatpush1.msra.mxu0 %v6467
        %6515 = vmatprep.subr.mxu0 0.0
        %6516 = vmatpush1.msra.mxu0 %v6468
        %6517 = vmatprep.subr.mxu0 0.0
        %6518 = vmatpush1.msra.mxu0 %v6469
        %6519 = vmatprep.subr.mxu0 0.0
        %6520 = vmatpush1.msra.mxu0 %v6470
        %6521 = vmatprep.subr.mxu0 0.0
        %6522 = vmatpush1.msra.mxu0 %v6471
        %6523 = vmatprep.subr.mxu0 0.0
        %6524 = vmatpush1.msra.mxu0 %v6472
        %6525 = vmatprep.subr.mxu0 0.0
        %6526 = vmatpush1.msra.mxu0 %v6473
        %6527 = vmatprep.subr.mxu0 0.0
        %6528 = vmatpush1.msra.mxu0 %v6474
        %6529 = vmatprep.subr.mxu0 0.0
        %6530 = vmatpush1.msra.mxu0 %v6475
        %6531 = vmatprep.subr.mxu0 0.0
        %6532 = vmatpush1.msra.mxu0 %v6476
        %6533 = vmatprep.subr.mxu0 0.0
        %6534 = vmatpush1.msra.mxu0 %v6477
        %6535 = vmatprep.subr.mxu0 0.0
        %6536 = vmatpush1.msra.mxu0 %v6478
        %6537 = vmatprep.subr.mxu0 0.0
        %6538 = vmatpush1.msra.mxu0 %v6479
        %6539 = vmatprep.subr.mxu0 0.0
        %6540 = vmatpush1.msra.mxu0 %v6480
        %6541 = vmatprep.subr.mxu0 0.0
        %6542 = vmatpush1.msra.mxu0 %v6481
        %6543 = vmatprep.subr.mxu0 0.0
        %6544 = vmatpush1.msra.mxu0 %v6482
        %6545 = vmatprep.subr.mxu0 0.0
        %6546 = vmatpush1.msra.mxu0 %v6483
        %6547 = vmatprep.subr.mxu0 0.0
        %6548 = vmatpush1.msra.mxu0 %v6484
        %6549 = vmatprep.subr.mxu0 0.0
        %6550 = vmatpush1.msra.mxu0 %v6485
        %6551 = vmatprep.subr.mxu0 0.0
        %6552 = vmatpush1.msra.mxu0 %v6486
        %6553 = vmatprep.subr.mxu0 0.0
        %6554 = vmatpush1.msra.mxu0 %v6487
        %6555 = vmatprep.subr.mxu0 0.0
        %6556 = vmatpush1.msra.mxu0 %v6488
        %6557 = vmatprep.subr.mxu0 0.0
        %6558 = vmatpush1.msra.mxu0 %v6489
        %6559 = vmatprep.subr.mxu0 0.0
        %6560 = vmatpush1.msra.mxu0 %v6490
        %6561 = vmatprep.subr.mxu0 0.0
        %6562 = vmatpush1.msra.mxu0 %v6491
        %6563 = vmatprep.mubr.f32.mxu0 %v6459
        %6564 = vmatmul.mubr.f32.gmra.mrb[0].mxu0 %v6458
        %v6565 = vpop.f32.mrb[0].mxu0
        %v6566 = vadd.f32 %v6497, %v6565
        %v6567 = vpop.f32.mrb[0].mxu0
        %6568 = vdwg.mxu0
        %v6569 = vmul.f32 %v6566, %v6566
        %6570 = vadd.xlane.f32.xlu0 %v6569
        %v6571 = vpop.xlane.xlu0 %6570
        %v6572 = vrsqrt.pop %v6571
        %v6573 = vmul.f32 %v6566, %v6572
        %6574 = vst [vmem:[%s330] sm:$0xff] %v6573
        %s6575 = sand.u32 %s227, 1
        %s6576 = scalar_lea.sflag [#allocation5], %s6575
        %s6577 = sand.u32 %s227, 1
        %s6578 = smul.addr %s6577, 8
        %s6579 = scalar_lea.vmem [#allocation4], %s6578
        // Predicated region
        $region57: #{embedding_net_l2_forward.1} parent=55 // pred_check
          %p6580 = pneg %p237
        $region58: #{embedding_net_l2_forward.1} parent=55 // pred_check_branch
          %6582 = sbr.rel (%p6580) target = $region60
        $region59: #{embedding_net_l2_forward.1} parent=55 // pred_region
          %s6584 = ssub.s32 128, 128
          %6585 = vsyncadd %s6576, %s6584
          %s6586 = smul.addr %s25, 128
          %s6587 = scalar_lea.hbm %s9, %s6586
          %s6589 = sshll.u32 %s6579, 4
          %s6590 = int_to_ptr.vmem [resolvable:$true] %s6589
          %6592 = dma.vmem_to_hbm [thread:$0]  %s6590, 128, %s6587, %s6576
        $region60: #{embedding_net_l2_forward.1} parent=55 // pred_fallthru
          _
      $region56: #{embedding_net_l2_forward.1} parent=5 // pred_fallthru
        _
      %p6593 = scmp.le.s32.totalorder 2, %s20
      // Predicated region
      $region61: #{embedding_net_l2_forward.1} parent=5 // pred_check
        %p6594 = pneg %p6593
      $region62: #{embedding_net_l2_forward.1} parent=5 // pred_check_branch
        %6596 = sbr.rel (%p6594) target = $region64
      $region63: #{embedding_net_l2_forward.1} parent=5 // pred_region
        %s6597 = ssub.s32 %s20, 2
        // Predicated region
        $region65: #{embedding_net_l2_forward.1} parent=63 // pred_check
          %p6598 = pneg %p243
        $region66: #{embedding_net_l2_forward.1} parent=63 // pred_check_branch
          %6600 = sbr.rel (%p6598) target = $region68
        $region67: #{embedding_net_l2_forward.1} parent=63 // pred_region
          %s6601 = sand.u32 %s228, 1
          %s6602 = scalar_lea.sflag [#allocation5], %s6601
          %s6603 = sand.u32 %s228, 1
          %s6604 = smul.addr %s6603, 8
          %s6605 = scalar_lea.vmem [#allocation4], %s6604
          %6606 = dma.done %s6602, 128
        $region68: #{embedding_net_l2_forward.1} parent=63 // pred_fallthru
          _
      $region64: #{embedding_net_l2_forward.1} parent=5 // pred_fallthru
        _
    $region6: #{embedding_net_l2_forward.1} parent=1 // loop_footer
      %s24 = sadd.s32 1, %s20
    $region7: #{embedding_net_l2_forward.1} parent=1 // loop_footer_branch
      %19 = sbr.rel target = $region3
    $region8: #{embedding_net_l2_forward.1} parent=1 // loop_exit
      _
    %6607 = vsyncpa [#allocation5], 1
    %s6608 = scalar_lea.sflag [#allocation5], 1
    %6609 = vsyncpa %s6608, 1

</llo_original>
